<compile_context>
chip_gen: v5e
topology: v5e:2x2
jax: 0.10.0
libtpu: 0.0.40
codegen_flags: <defaults>
</compile_context>

<pallas_src>
import functools
import math

import jax
import jax.numpy as jnp
from jax.experimental import pallas as pl
from jax.experimental.pallas import tpu as pltpu


_NEG_INF = -1e9  # scores are accumulated in f32, so -1e9 masking is safe.


# ----------------------------- hardware budget --------------------------------

def _tpu_budget():
    """(vmem_limit_bytes, ffn_row_tile_target) derived from the actual chip generation."""
    default_cap = 64 * 1024 * 1024
    try:
        cap = int(getattr(pltpu.get_tpu_info(), "vmem_capacity_bytes", default_cap))
    except Exception:  # interpret mode / older jax
        cap = default_cap
    limit = (cap * 3) // 4                      # headroom for Mosaic scratch / dbl buffers
    row_target = 512 if cap >= 100 * 1024 * 1024 else 256
    return limit, row_target


def _compiler_params():
    limit, _ = _tpu_budget()
    return pltpu.CompilerParams(dimension_semantics=("parallel",),
                                vmem_limit_bytes=limit)


def _const_spec(shape):
    """BlockSpec for a grid-invariant block: single-buffered (no wasted VMEM)."""
    idx = lambda *_: (0,) * len(shape)
    try:
        return pl.BlockSpec(shape, idx, pipeline_mode=pl.Buffered(1))
    except Exception:  # older jax without pipeline_mode / Buffered
        return pl.BlockSpec(shape, idx)


def _batch_block(b, t, row_target=256):
    """Batch elements per grid step: fill MXU rows but keep >=2 grid steps (dual-TC)."""
    best = 1
    for g in range(1, b + 1):
        if b % g:
            continue
        if b >= 2 and b // g < 2:
            continue
        if g * t <= row_target:
            best = g
    return best


def _ffn_tiling(m, row_target):
    """Fixed 8-aligned row tile; rows padded so the grid divides evenly and has >=2 steps."""
    m_pad = ((m + 7) // 8) * 8
    tm = max(8, (min(row_target, m_pad) // 8) * 8)
    while tm > 8 and pl.cdiv(m_pad, tm) < 2:    # keep both v7x TensorCores busy
        tm = max(8, ((tm // 2) // 8) * 8)
    grid = pl.cdiv(m_pad, tm)
    return tm, grid, grid * tm


# --------------------------- in-kernel helpers ---------------------------------

def _layer_norm(x, gamma, beta, eps):
    # Annotated-transformer LayerNorm: a_2 * (x - mean) / (std + eps) + b_2, unbiased std.
    mean = jnp.mean(x, axis=-1, keepdims=True)
    d = x - mean
    var = jnp.sum(d * d, axis=-1, keepdims=True) * (1.0 / (x.shape[-1] - 1))
    return gamma * (d / (jnp.sqrt(var) + eps)) + beta   # exact reciprocal (training parity)


def _heads(x2d, num_heads):
    # (rows, D) -> (H, rows, dk): heads become the MXU batch dim; one relayout per tensor
    # instead of per-head 32-lane slices + concatenate.
    r, d = x2d.shape
    return jnp.swapaxes(x2d.reshape(r, num_heads, d // num_heads), 0, 1)


def _attend(q, k, v, bias):
    # q: (H, T, dk), k/v: (H, S, dk) f32; bias broadcastable to (H, T, S). -> (T, H*dk) f32.
    # TODO(synk): blocked online-softmax over S tiles for long sequences.
    h, t, dk = q.shape
    scale = 1.0 / math.sqrt(dk)
    s = jax.lax.dot_general(q.astype(jnp.bfloat16), k.astype(jnp.bfloat16),
                            (((2,), (2,)), ((0,), (0,))),
                            preferred_element_type=jnp.float32)            # (H, T, S)
    s = s * scale + bias
    s = s - jnp.max(s, axis=-1, keepdims=True)
    p = jnp.exp(s)
    p = p * pl.reciprocal(jnp.sum(p, axis=-1, keepdims=True), approx=True)  # EUP slot
    ctx = jax.lax.dot_general(p.astype(jnp.bfloat16), v.astype(jnp.bfloat16),
                              (((2,), (1,)), ((0,), (0,))),
                              preferred_element_type=jnp.float32)           # (H, T, dk)
    return jnp.swapaxes(ctx, 0, 1).reshape(t, h * dk)


# ------------------------------ Pallas kernels ---------------------------------

def _self_attn_kernel(x_ref, km_ref, wqkv_ref, bqkv_ref, wo_ref, bo_ref,
                      g_ref, be_ref, o_ref, *, num_heads, eps, causal):
    # A block of batch elements per grid step: LN -> fused QKV proj (all rows at once)
    # -> head-batched attention -> output proj -> residual add.
    bblk, t, d = x_ref.shape
    x = x_ref[...].reshape(bblk * t, d)
    xn = _layer_norm(x, g_ref[...], be_ref[...], eps)
    qkv = jnp.dot(xn.astype(jnp.bfloat16), wqkv_ref[...],
                  preferred_element_type=jnp.float32) + bqkv_ref[...]        # (bblk*t, 3d)

    key_bias = jnp.where(km_ref[...] == 0.0, _NEG_INF, 0.0)                  # (bblk, 1, t)
    if causal:
        row = jax.lax.broadcasted_iota(jnp.int32, (t, t), 0)
        col = jax.lax.broadcasted_iota(jnp.int32, (t, t), 1)
        causal_bias = jnp.where(row >= col, 0.0, _NEG_INF)                   # (t, t)

    ctxs = []
    for bi in range(bblk):
        rows = slice(bi * t, (bi + 1) * t)
        q = _heads(qkv[rows, 0 * d:1 * d], num_heads)
        k = _heads(qkv[rows, 1 * d:2 * d], num_heads)
        v = _heads(qkv[rows, 2 * d:3 * d], num_heads)
        bias = key_bias[bi]                                                  # (1, t) keys
        if causal:
            bias = bias + causal_bias
        ctxs.append(_attend(q, k, v, bias))
    ctx = ctxs[0] if bblk == 1 else jnp.concatenate(ctxs, axis=0)            # (bblk*t, d)

    y = jnp.dot(ctx.astype(jnp.bfloat16), wo_ref[...],
                preferred_element_type=jnp.float32) + bo_ref[...]
    o_ref[...] = (x + y).reshape(bblk, t, d).astype(o_ref.dtype)


def _src_attn_kernel(x_ref, mem_ref, km_ref, wq_ref, bq_ref, wkv_ref, bkv_ref,
                     wo_ref, bo_ref, g_ref, be_ref, o_ref, *, num_heads, eps):
    # Query path is LN(x); key/value path is the (un-normalized) encoder memory.
    bblk, t, d = x_ref.shape
    s_len = mem_ref.shape[1]
    x = x_ref[...].reshape(bblk * t, d)
    m = mem_ref[...].reshape(bblk * s_len, d)
    xn = _layer_norm(x, g_ref[...], be_ref[...], eps)
    q_all = jnp.dot(xn.astype(jnp.bfloat16), wq_ref[...],
                    preferred_element_type=jnp.float32) + bq_ref[...]        # (bblk*t, d)
    kv_all = jnp.dot(m.astype(jnp.bfloat16), wkv_ref[...],
                     preferred_element_type=jnp.float32) + bkv_ref[...]      # (bblk*s, 2d)

    key_bias = jnp.where(km_ref[...] == 0.0, _NEG_INF, 0.0)                  # (bblk, 1, s)
    ctxs = []
    for bi in range(bblk):
        rq = slice(bi * t, (bi + 1) * t)
        rk = slice(bi * s_len, (bi + 1) * s_len)
        q = _heads(q_all[rq], num_heads)
        k = _heads(kv_all[rk, :d], num_heads)
        v = _heads(kv_all[rk, d:], num_heads)
        ctxs.append(_attend(q, k, v, key_bias[bi]))
    ctx = ctxs[0] if bblk == 1 else jnp.concatenate(ctxs, axis=0)

    y = jnp.dot(ctx.astype(jnp.bfloat16), wo_ref[...],
                preferred_element_type=jnp.float32) + bo_ref[...]
    o_ref[...] = (x + y).reshape(bblk, t, d).astype(o_ref.dtype)


def _ffn_kernel(x_ref, w1_ref, b1_ref, w2_ref, b2_ref, g_ref, be_ref, o_ref, *, eps):
    # Row-tiled: LN -> Linear+ReLU -> Linear -> residual add, all on one VMEM tile.
    x = x_ref[...]                                                           # (tm, D) f32
    xn = _layer_norm(x, g_ref[...], be_ref[...], eps)
    h = jnp.dot(xn.astype(jnp.bfloat16), w1_ref[...],
                preferred_element_type=jnp.float32) + b1_ref[...]
    h = jnp.maximum(h, 0.0)
    y = jnp.dot(h.astype(jnp.bfloat16), w2_ref[...],
                preferred_element_type=jnp.float32) + b2_ref[...]
    o_ref[...] = (x + y).astype(o_ref.dtype)


# ------------------------------- wrappers ---------------------------------------

def fused_self_attn(x, key_mask, p, gamma, beta, num_heads, eps=1e-6, causal=True):
    b, t, d = x.shape
    bblk = _batch_block(b, t)
    return pl.pallas_call(
        functools.partial(_self_attn_kernel, num_heads=num_heads, eps=eps, causal=causal),
        out_shape=jax.ShapeDtypeStruct((b, t, d), x.dtype),
        grid=(b // bblk,),
        in_specs=[pl.BlockSpec((bblk, t, d), lambda i: (i, 0, 0)),
                  pl.BlockSpec((bblk, 1, t), lambda i: (i, 0, 0)),
                  _const_spec((d, 3 * d)),
                  _const_spec((1, 3 * d)),
                  _const_spec((d, d)),
                  _const_spec((1, d)),
                  _const_spec((1, d)),
                  _const_spec((1, d))],
        out_specs=pl.BlockSpec((bblk, t, d), lambda i: (i, 0, 0)),
        compiler_params=_compiler_params(),
    )(x, key_mask, p["wqkv"], p["bqkv"], p["wo"], p["bo"], gamma, beta)


def fused_src_attn(x, memory, key_mask, p, gamma, beta, num_heads, eps=1e-6):
    b, t, d = x.shape
    s = memory.shape[1]
    bblk = _batch_block(b, t)
    return pl.pallas_call(
        functools.partial(_src_attn_kernel, num_heads=num_heads, eps=eps),
        out_shape=jax.ShapeDtypeStruct((b, t, d), x.dtype),
        grid=(b // bblk,),
        in_specs=[pl.BlockSpec((bblk, t, d), lambda i: (i, 0, 0)),
                  pl.BlockSpec((bblk, s, d), lambda i: (i, 0, 0)),
                  pl.BlockSpec((bblk, 1, s), lambda i: (i, 0, 0)),
                  _const_spec((d, d)),
                  _const_spec((1, d)),
                  _const_spec((d, 2 * d)),
                  _const_spec((1, 2 * d)),
                  _const_spec((d, d)),
                  _const_spec((1, d)),
                  _const_spec((1, d)),
                  _const_spec((1, d))],
        out_specs=pl.BlockSpec((bblk, t, d), lambda i: (i, 0, 0)),
        compiler_params=_compiler_params(),
    )(x, memory, key_mask, p["wq"], p["bq"], p["wkv"], p["bkv"], p["wo"], p["bo"],
      gamma, beta)


def fused_ffn(x, p, gamma, beta, eps=1e-6):
    b, t, d = x.shape
    m = b * t
    dff = p["w1"].shape[1]
    _, row_target = _tpu_budget()
    tm, grid, m_pad = _ffn_tiling(m, row_target)
    x2 = x.reshape(m, d)
    if m_pad != m:
        x2 = jnp.pad(x2, ((0, m_pad - m), (0, 0)))
    out = pl.pallas_call(
        functools.partial(_ffn_kernel, eps=eps),
        out_shape=jax.ShapeDtypeStruct((m_pad, d), x.dtype),
        grid=(grid,),
        in_specs=[pl.BlockSpec((tm, d), lambda i: (i, 0)),
                  _const_spec((d, dff)),
                  _const_spec((1, dff)),
                  _const_spec((dff, d)),
                  _const_spec((1, d)),
                  _const_spec((1, d)),
                  _const_spec((1, d))],
        out_specs=pl.BlockSpec((tm, d), lambda i: (i, 0)),
        compiler_params=_compiler_params(),
    )(x2, p["w1"], p["b1"], p["w2"], p["b2"], gamma, beta)
    return out[:m].reshape(b, t, d)


def prepare_params(params):
    """One-time fusion/cast of the weights so the per-step forward does no weight
    concatenation or f32->bf16 conversion in HBM."""
    d = params["self_attn"]["wq"].shape[0]
    sa, xa, ff = params["self_attn"], params["src_attn"], params["ffn"]
    return dict(
        self=dict(
            wqkv=jnp.concatenate([sa["wq"], sa["wk"], sa["wv"]], 1).astype(jnp.bfloat16),
            bqkv=jnp.concatenate([sa["bq"], sa["bk"], sa["bv"]]).reshape(1, 3 * d),
            wo=sa["wo"].astype(jnp.bfloat16), bo=sa["bo"].reshape(1, d)),
        src=dict(
            wq=xa["wq"].astype(jnp.bfloat16), bq=xa["bq"].reshape(1, d),
            wkv=jnp.concatenate([xa["wk"], xa["wv"]], 1).astype(jnp.bfloat16),
            bkv=jnp.concatenate([xa["bk"], xa["bv"]]).reshape(1, 2 * d),
            wo=xa["wo"].astype(jnp.bfloat16), bo=xa["bo"].reshape(1, d)),
        ffn=dict(
            w1=ff["w1"].astype(jnp.bfloat16), b1=ff["b1"].reshape(1, -1),
            w2=ff["w2"].astype(jnp.bfloat16), b2=ff["b2"].reshape(1, d)),
        ln=[(g.reshape(1, d), b_.reshape(1, d)) for (g, b_) in params["ln"]],
    )


def decoder_layer(x, memory, src_key_mask, tgt_key_mask, prep, num_heads, causal=True):
    g0, b0 = prep["ln"][0]
    x = fused_self_attn(x, tgt_key_mask, prep["self"], g0, b0, num_heads, causal=causal)
    g1, b1 = prep["ln"][1]
    x = fused_src_attn(x, memory, src_key_mask, prep["src"], g1, b1, num_heads)
    g2, b2 = prep["ln"][2]
    return fused_ffn(x, prep["ffn"], g2, b2)


# --------------------------- pure-JAX reference ---------------------------------

def ref_decoder_layer(x, memory, source_mask, target_mask, params, num_heads):
    def ln(v, g, bb, eps=1e-6):
        mean = jnp.mean(v, -1, keepdims=True)
        dd = v - mean
        std = jnp.sqrt(jnp.sum(dd * dd, -1, keepdims=True) / (v.shape[-1] - 1))
        return g * dd / (std + eps) + bb

    def attn(xq, xkv, mask, p):
        bsz, t, d = xq.shape
        s = xkv.shape[1]
        dk = d // num_heads
        q = (xq @ p["wq"] + p["bq"]).reshape(bsz, t, num_heads, dk).transpose(0, 2, 1, 3)
        k = (xkv @ p["wk"] + p["bk"]).reshape(bsz, s, num_heads, dk).transpose(0, 2, 1, 3)
        v = (xkv @ p["wv"] + p["bv"]).reshape(bsz, s, num_heads, dk).transpose(0, 2, 1, 3)
        sc = jnp.einsum("bhtd,bhsd->bhts", q, k) / math.sqrt(dk)
        sc = jnp.where(mask[:, None, :, :] == 0, -1e9, sc)
        pr = jax.nn.softmax(sc, axis=-1)
        ctx = jnp.einsum("bhts,bhsd->bhtd", pr, v).transpose(0, 2, 1, 3).reshape(bsz, t, d)
        return ctx @ p["wo"] + p["bo"]

    g0, b0 = params["ln"][0]
    x = x + attn(ln(x, g0, b0), ln(x, g0, b0), target_mask, params["self_attn"])
    g1, b1 = params["ln"][1]
    x = x + attn(ln(x, g1, b1), memory, source_mask, params["src_attn"])
    g2, b2 = params["ln"][2]
    xn = ln(x, g2, b2)
    ff = jnp.maximum(xn @ params["ffn"]["w1"] + params["ffn"]["b1"], 0.0) \
        @ params["ffn"]["w2"] + params["ffn"]["b2"]
    return x + ff


# ------------------------------ parameters --------------------------------------

def init_params(key, d_model, d_ff):
    keys = jax.random.split(key, 32)
    it = iter(keys)

    def lin(din, dout):
        w = 0.05 * jax.random.normal(next(it), (din, dout), jnp.float32)
        bb = 0.05 * jax.random.normal(next(it), (dout,), jnp.float32)
        return w, bb

    def attn_params():
        wq, bq = lin(d_model, d_model)
        wk, bk = lin(d_model, d_model)
        wv, bv = lin(d_model, d_model)
        wo, bo = lin(d_model, d_model)
        return dict(wq=wq, bq=bq, wk=wk, bk=bk, wv=wv, bv=bv, wo=wo, bo=bo)

    ln_params = []
    for _ in range(3):
        g = 1.0 + 0.05 * jax.random.normal(next(it), (d_model,), jnp.float32)
        bb = 0.05 * jax.random.normal(next(it), (d_model,), jnp.float32)
        ln_params.append((g, bb))
    w1, b1 = lin(d_model, d_ff)
    w2, b2 = lin(d_ff, d_model)
    return dict(ln=ln_params, self_attn=attn_params(), src_attn=attn_params(),
                ffn=dict(w1=w1, b1=b1, w2=w2, b2=b2))


if __name__ == "__main__":
    # Lane-dense small shapes: D, DFF multiples of 128; row counts multiples of 8.
    B, T, S, D, H, DFF = 2, 16, 16, 128, 4, 512

    root = jax.random.PRNGKey(0)
    kx, km, kp = jax.random.split(root, 3)
    x = jax.random.normal(kx, (B, T, D), jnp.float32)
    memory = jax.random.normal(km, (B, S, D), jnp.float32)
    params = init_params(kp, D, DFF)
    prep = prepare_params(params)

    # Compact masks for the kernels: causal structure is generated in-kernel; only the
    # per-batch key-padding vectors are passed (shape (B, 1, keys)).
    tgt_key_mask = jnp.ones((B, 1, T), jnp.float32)            # no target padding here
    src_lens = jnp.array([S, S - 4])
    src_key_mask = (jnp.arange(S)[None, :] < src_lens[:, None]
                    ).astype(jnp.float32).reshape(B, 1, S)

    # Dense masks for the pure-JAX reference (same semantics as the PyTorch module).
    causal_m = jnp.tril(jnp.ones((T, T), jnp.float32))
    target_mask_full = jnp.broadcast_to(causal_m[None], (B, T, T)) * tgt_key_mask
    source_mask_full = jnp.broadcast_to(src_key_mask, (B, T, S))

    decoder = jax.jit(functools.partial(decoder_layer, num_heads=H))
    out = jax.block_until_ready(decoder(x, memory, src_key_mask, tgt_key_mask, prep))
    assert out.shape == (B, T, D)

    # f32 ("highest" precision) reference; kernel uses bf16 MXU inputs with f32 accumulation,
    # so allow a bf16-scale tolerance.
    with jax.default_matmul_precision("highest"):
        ref = jax.block_until_ready(
            ref_decoder_layer(x, memory, source_mask_full, target_mask_full, params, H))

    max_err = float(jnp.max(jnp.abs(out - ref)))
    if max_err > 4e-2:
        raise SystemExit(f"mismatch vs reference: max abs err = {max_err}")
    print("KERNEL_OK")
</pallas_src>

<mosaic_0001>
module attributes {stable_mosaic.version = 11 : i64} {
  func.func @_ffn_kernel(%arg0: i32, %arg1: memref<16x128xf32, #tpu.memory_space<vmem>>, %arg2: memref<128x512xbf16, #tpu.memory_space<vmem>>, %arg3: memref<1x512xf32, #tpu.memory_space<vmem>>, %arg4: memref<512x128xbf16, #tpu.memory_space<vmem>>, %arg5: memref<1x128xf32, #tpu.memory_space<vmem>>, %arg6: memref<1x128xf32, #tpu.memory_space<vmem>>, %arg7: memref<1x128xf32, #tpu.memory_space<vmem>>, %arg8: memref<16x128xf32, #tpu.memory_space<vmem>>) attributes {dimension_semantics = [#tpu.dimension_semantics<parallel>], iteration_bounds = array<i64: 2>, scalar_prefetch = 0 : i64, scratch_operands = 0 : i64, tpu.core_type = #tpu.core_type<tc>, window_params = [{transform_indices = @transform_0, window_bounds = array<i64: 16, 128>}, {pipeline_mode = #tpu.pipeline_mode<synchronous>, transform_indices = @transform_1, window_bounds = array<i64: 128, 512>}, {pipeline_mode = #tpu.pipeline_mode<synchronous>, transform_indices = @transform_2, window_bounds = array<i64: 1, 512>}, {pipeline_mode = #tpu.pipeline_mode<synchronous>, transform_indices = @transform_3, window_bounds = array<i64: 512, 128>}, {pipeline_mode = #tpu.pipeline_mode<synchronous>, transform_indices = @transform_4, window_bounds = array<i64: 1, 128>}, {pipeline_mode = #tpu.pipeline_mode<synchronous>, transform_indices = @transform_5, window_bounds = array<i64: 1, 128>}, {pipeline_mode = #tpu.pipeline_mode<synchronous>, transform_indices = @transform_6, window_bounds = array<i64: 1, 128>}, {transform_indices = @transform_7, window_bounds = array<i64: 16, 128>}]} {
    %c0 = arith.constant 0 : index
    %c0_0 = arith.constant 0 : index
    %0 = vector.load %arg1[%c0, %c0_0] : memref<16x128xf32, #tpu.memory_space<vmem>>, vector<16x128xf32>
    %c0_1 = arith.constant 0 : index
    %c0_2 = arith.constant 0 : index
    %1 = vector.load %arg6[%c0_1, %c0_2] : memref<1x128xf32, #tpu.memory_space<vmem>>, vector<1x128xf32>
    %c0_3 = arith.constant 0 : index
    %c0_4 = arith.constant 0 : index
    %2 = vector.load %arg7[%c0_3, %c0_4] : memref<1x128xf32, #tpu.memory_space<vmem>>, vector<1x128xf32>
    %cst = arith.constant dense<0.000000e+00> : vector<16xf32>
    %3 = vector.multi_reduction <add>, %0, %cst [1] : vector<16x128xf32> to vector<16xf32>
    %4 = vector.shape_cast %3 : vector<16xf32> to vector<16x1xf32>
    %cst_5 = arith.constant 1.280000e+02 : f32
    %5 = vector.broadcast %cst_5 : f32 to vector<16x1xf32>
    %6 = arith.divf %4, %5 : vector<16x1xf32>
    %7 = vector.broadcast %6 : vector<16x1xf32> to vector<16x128xf32>
    %8 = arith.subf %0, %7 : vector<16x128xf32>
    %9 = arith.mulf %8, %8 : vector<16x128xf32>
    %cst_6 = arith.constant dense<0.000000e+00> : vector<16xf32>
    %10 = vector.multi_reduction <add>, %9, %cst_6 [1] : vector<16x128xf32> to vector<16xf32>
    %11 = vector.shape_cast %10 : vector<16xf32> to vector<16x1xf32>
    %cst_7 = arith.constant 0.00787401571 : f32
    %12 = vector.broadcast %cst_7 : f32 to vector<16x1xf32>
    %13 = arith.mulf %11, %12 : vector<16x1xf32>
    %14 = math.sqrt %13 : vector<16x1xf32>
    %cst_8 = arith.constant 9.99999997E-7 : f32
    %15 = vector.broadcast %cst_8 : f32 to vector<16x1xf32>
    %16 = arith.addf %14, %15 : vector<16x1xf32>
    %17 = vector.broadcast %16 : vector<16x1xf32> to vector<16x128xf32>
    %18 = arith.divf %8, %17 : vector<16x128xf32>
    %19 = vector.broadcast %1 : vector<1x128xf32> to vector<16x128xf32>
    %20 = arith.mulf %19, %18 : vector<16x128xf32>
    %21 = vector.broadcast %2 : vector<1x128xf32> to vector<16x128xf32>
    %22 = arith.addf %20, %21 : vector<16x128xf32>
    %23 = arith.truncf %22 : vector<16x128xf32> to vector<16x128xbf16>
    %c0_9 = arith.constant 0 : index
    %c0_10 = arith.constant 0 : index
    %24 = vector.load %arg2[%c0_9, %c0_10] : memref<128x512xbf16, #tpu.memory_space<vmem>>, vector<128x512xbf16>
    %cst_11 = arith.constant dense<0.000000e+00> : vector<16x512xf32>
    %25 = tpu.matmul %23, %24, %cst_11 {dimension_numbers = #tpu.dot_dimension_numbers<[1], [0], [0], [1], [0, 0, 1, 1], [], []>} : vector<16x128xbf16>, vector<128x512xbf16>, vector<16x512xf32> -> vector<16x512xf32>
    %c0_12 = arith.constant 0 : index
    %c0_13 = arith.constant 0 : index
    %26 = vector.load %arg3[%c0_12, %c0_13] : memref<1x512xf32, #tpu.memory_space<vmem>>, vector<1x512xf32>
    %27 = vector.broadcast %26 : vector<1x512xf32> to vector<16x512xf32>
    %28 = arith.addf %25, %27 : vector<16x512xf32>
    %cst_14 = arith.constant 0.000000e+00 : f32
    %29 = vector.broadcast %cst_14 : f32 to vector<16x512xf32>
    %30 = arith.maximumf %28, %29 : vector<16x512xf32>
    %31 = arith.truncf %30 : vector<16x512xf32> to vector<16x512xbf16>
    %c0_15 = arith.constant 0 : index
    %c0_16 = arith.constant 0 : index
    %32 = vector.load %arg4[%c0_15, %c0_16] : memref<512x128xbf16, #tpu.memory_space<vmem>>, vector<512x128xbf16>
    %cst_17 = arith.constant dense<0.000000e+00> : vector<16x128xf32>
    %33 = tpu.matmul %31, %32, %cst_17 {dimension_numbers = #tpu.dot_dimension_numbers<[1], [0], [0], [1], [0, 0, 1, 1], [], []>} : vector<16x512xbf16>, vector<512x128xbf16>, vector<16x128xf32> -> vector<16x128xf32>
    %c0_18 = arith.constant 0 : index
    %c0_19 = arith.constant 0 : index
    %34 = vector.load %arg5[%c0_18, %c0_19] : memref<1x128xf32, #tpu.memory_space<vmem>>, vector<1x128xf32>
    %35 = vector.broadcast %34 : vector<1x128xf32> to vector<16x128xf32>
    %36 = arith.addf %33, %35 : vector<16x128xf32>
    %37 = arith.addf %0, %36 : vector<16x128xf32>
    %c0_20 = arith.constant 0 : index
    %c0_21 = arith.constant 0 : index
    %38 = vector.load %arg8[%c0_20, %c0_21] : memref<16x128xf32, #tpu.memory_space<vmem>>, vector<16x128xf32>
    tpu.vector_store %arg8[%c0_20, %c0_21], %37 {strides = array<i32>} : memref<16x128xf32, #tpu.memory_space<vmem>>, vector<16x128xf32>,
    return
  }
  func.func @transform_0(%arg0: i32) -> (i32, i32) {
    %c0_i32 = arith.constant 0 : i32
    %c0_i32_0 = arith.constant 0 : i32
    return %arg0, %c0_i32 : i32, i32
  }
  func.func @transform_1(%arg0: i32) -> (i32, i32) {
    %c0_i32 = arith.constant 0 : i32
    %c0_i32_0 = arith.constant 0 : i32
    %c0_i32_1 = arith.constant 0 : i32
    return %c0_i32, %c0_i32_0 : i32, i32
  }
  func.func @transform_2(%arg0: i32) -> (i32, i32) {
    %c0_i32 = arith.constant 0 : i32
    %c0_i32_0 = arith.constant 0 : i32
    %c0_i32_1 = arith.constant 0 : i32
    return %c0_i32, %c0_i32_0 : i32, i32
  }
  func.func @transform_3(%arg0: i32) -> (i32, i32) {
    %c0_i32 = arith.constant 0 : i32
    %c0_i32_0 = arith.constant 0 : i32
    %c0_i32_1 = arith.constant 0 : i32
    return %c0_i32, %c0_i32_0 : i32, i32
  }
  func.func @transform_4(%arg0: i32) -> (i32, i32) {
    %c0_i32 = arith.constant 0 : i32
    %c0_i32_0 = arith.constant 0 : i32
    %c0_i32_1 = arith.constant 0 : i32
    return %c0_i32, %c0_i32_0 : i32, i32
  }
  func.func @transform_5(%arg0: i32) -> (i32, i32) {
    %c0_i32 = arith.constant 0 : i32
    %c0_i32_0 = arith.constant 0 : i32
    %c0_i32_1 = arith.constant 0 : i32
    return %c0_i32, %c0_i32_0 : i32, i32
  }
  func.func @transform_6(%arg0: i32) -> (i32, i32) {
    %c0_i32 = arith.constant 0 : i32
    %c0_i32_0 = arith.constant 0 : i32
    %c0_i32_1 = arith.constant 0 : i32
    return %c0_i32, %c0_i32_0 : i32, i32
  }
  func.func @transform_7(%arg0: i32) -> (i32, i32) {
    %c0_i32 = arith.constant 0 : i32
    %c0_i32_0 = arith.constant 0 : i32
    return %arg0, %c0_i32 : i32, i32
  }
}

module attributes {stable_mosaic.version = 11 : i64} {
  func.func @_src_attn_kernel(%arg0: i32, %arg1: memref<1x16x128xf32, #tpu.memory_space<vmem>>, %arg2: memref<1x16x128xf32, #tpu.memory_space<vmem>>, %arg3: memref<1x1x16xf32, #tpu.memory_space<vmem>>, %arg4: memref<128x128xbf16, #tpu.memory_space<vmem>>, %arg5: memref<1x128xf32, #tpu.memory_space<vmem>>, %arg6: memref<128x256xbf16, #tpu.memory_space<vmem>>, %arg7: memref<1x256xf32, #tpu.memory_space<vmem>>, %arg8: memref<128x128xbf16, #tpu.memory_space<vmem>>, %arg9: memref<1x128xf32, #tpu.memory_space<vmem>>, %arg10: memref<1x128xf32, #tpu.memory_space<vmem>>, %arg11: memref<1x128xf32, #tpu.memory_space<vmem>>, %arg12: memref<1x16x128xf32, #tpu.memory_space<vmem>>) attributes {dimension_semantics = [#tpu.dimension_semantics<parallel>], iteration_bounds = array<i64: 2>, scalar_prefetch = 0 : i64, scratch_operands = 0 : i64, tpu.core_type = #tpu.core_type<tc>, window_params = [{transform_indices = @transform_0, window_bounds = array<i64: 1, 16, 128>}, {transform_indices = @transform_1, window_bounds = array<i64: 1, 16, 128>}, {transform_indices = @transform_2, window_bounds = array<i64: 1, 1, 16>}, {pipeline_mode = #tpu.pipeline_mode<synchronous>, transform_indices = @transform_3, window_bounds = array<i64: 128, 128>}, {pipeline_mode = #tpu.pipeline_mode<synchronous>, transform_indices = @transform_4, window_bounds = array<i64: 1, 128>}, {pipeline_mode = #tpu.pipeline_mode<synchronous>, transform_indices = @transform_5, window_bounds = array<i64: 128, 256>}, {pipeline_mode = #tpu.pipeline_mode<synchronous>, transform_indices = @transform_6, window_bounds = array<i64: 1, 256>}, {pipeline_mode = #tpu.pipeline_mode<synchronous>, transform_indices = @transform_7, window_bounds = array<i64: 128, 128>}, {pipeline_mode = #tpu.pipeline_mode<synchronous>, transform_indices = @transform_8, window_bounds = array<i64: 1, 128>}, {pipeline_mode = #tpu.pipeline_mode<synchronous>, transform_indices = @transform_9, window_bounds = array<i64: 1, 128>}, {pipeline_mode = #tpu.pipeline_mode<synchronous>, transform_indices = @transform_10, window_bounds = array<i64: 1, 128>}, {transform_indices = @transform_11, window_bounds = array<i64: 1, 16, 128>}]} {
    %c0 = arith.constant 0 : index
    %c0_0 = arith.constant 0 : index
    %c0_1 = arith.constant 0 : index
    %0 = vector.load %arg1[%c0, %c0_0, %c0_1] : memref<1x16x128xf32, #tpu.memory_space<vmem>>, vector<1x16x128xf32>
    %1 = vector.shape_cast %0 : vector<1x16x128xf32> to vector<16x128xf32>
    %c0_2 = arith.constant 0 : index
    %c0_3 = arith.constant 0 : index
    %c0_4 = arith.constant 0 : index
    %2 = vector.load %arg2[%c0_2, %c0_3, %c0_4] : memref<1x16x128xf32, #tpu.memory_space<vmem>>, vector<1x16x128xf32>
    %3 = vector.shape_cast %2 : vector<1x16x128xf32> to vector<16x128xf32>
    %c0_5 = arith.constant 0 : index
    %c0_6 = arith.constant 0 : index
    %4 = vector.load %arg10[%c0_5, %c0_6] : memref<1x128xf32, #tpu.memory_space<vmem>>, vector<1x128xf32>
    %c0_7 = arith.constant 0 : index
    %c0_8 = arith.constant 0 : index
    %5 = vector.load %arg11[%c0_7, %c0_8] : memref<1x128xf32, #tpu.memory_space<vmem>>, vector<1x128xf32>
    %cst = arith.constant dense<0.000000e+00> : vector<16xf32>
    %6 = vector.multi_reduction <add>, %1, %cst [1] : vector<16x128xf32> to vector<16xf32>
    %7 = vector.shape_cast %6 : vector<16xf32> to vector<16x1xf32>
    %cst_9 = arith.constant 1.280000e+02 : f32
    %8 = vector.broadcast %cst_9 : f32 to vector<16x1xf32>
    %9 = arith.divf %7, %8 : vector<16x1xf32>
    %10 = vector.broadcast %9 : vector<16x1xf32> to vector<16x128xf32>
    %11 = arith.subf %1, %10 : vector<16x128xf32>
    %12 = arith.mulf %11, %11 : vector<16x128xf32>
    %cst_10 = arith.constant dense<0.000000e+00> : vector<16xf32>
    %13 = vector.multi_reduction <add>, %12, %cst_10 [1] : vector<16x128xf32> to vector<16xf32>
    %14 = vector.shape_cast %13 : vector<16xf32> to vector<16x1xf32>
    %cst_11 = arith.constant 0.00787401571 : f32
    %15 = vector.broadcast %cst_11 : f32 to vector<16x1xf32>
    %16 = arith.mulf %14, %15 : vector<16x1xf32>
    %17 = math.sqrt %16 : vector<16x1xf32>
    %cst_12 = arith.constant 9.99999997E-7 : f32
    %18 = vector.broadcast %cst_12 : f32 to vector<16x1xf32>
    %19 = arith.addf %17, %18 : vector<16x1xf32>
    %20 = vector.broadcast %19 : vector<16x1xf32> to vector<16x128xf32>
    %21 = arith.divf %11, %20 : vector<16x128xf32>
    %22 = vector.broadcast %4 : vector<1x128xf32> to vector<16x128xf32>
    %23 = arith.mulf %22, %21 : vector<16x128xf32>
    %24 = vector.broadcast %5 : vector<1x128xf32> to vector<16x128xf32>
    %25 = arith.addf %23, %24 : vector<16x128xf32>
    %26 = arith.truncf %25 : vector<16x128xf32> to vector<16x128xbf16>
    %c0_13 = arith.constant 0 : index
    %c0_14 = arith.constant 0 : index
    %27 = vector.load %arg4[%c0_13, %c0_14] : memref<128x128xbf16, #tpu.memory_space<vmem>>, vector<128x128xbf16>
    %cst_15 = arith.constant dense<0.000000e+00> : vector<16x128xf32>
    %28 = tpu.matmul %26, %27, %cst_15 {dimension_numbers = #tpu.dot_dimension_numbers<[1], [0], [0], [1], [0, 0, 1, 1], [], []>} : vector<16x128xbf16>, vector<128x128xbf16>, vector<16x128xf32> -> vector<16x128xf32>
    %c0_16 = arith.constant 0 : index
    %c0_17 = arith.constant 0 : index
    %29 = vector.load %arg5[%c0_16, %c0_17] : memref<1x128xf32, #tpu.memory_space<vmem>>, vector<1x128xf32>
    %30 = vector.broadcast %29 : vector<1x128xf32> to vector<16x128xf32>
    %31 = arith.addf %28, %30 : vector<16x128xf32>
    %32 = arith.truncf %3 : vector<16x128xf32> to vector<16x128xbf16>
    %c0_18 = arith.constant 0 : index
    %c0_19 = arith.constant 0 : index
    %33 = vector.load %arg6[%c0_18, %c0_19] : memref<128x256xbf16, #tpu.memory_space<vmem>>, vector<128x256xbf16>
    %cst_20 = arith.constant dense<0.000000e+00> : vector<16x256xf32>
    %34 = tpu.matmul %32, %33, %cst_20 {dimension_numbers = #tpu.dot_dimension_numbers<[1], [0], [0], [1], [0, 0, 1, 1], [], []>} : vector<16x128xbf16>, vector<128x256xbf16>, vector<16x256xf32> -> vector<16x256xf32>
    %c0_21 = arith.constant 0 : index
    %c0_22 = arith.constant 0 : index
    %35 = vector.load %arg7[%c0_21, %c0_22] : memref<1x256xf32, #tpu.memory_space<vmem>>, vector<1x256xf32>
    %36 = vector.broadcast %35 : vector<1x256xf32> to vector<16x256xf32>
    %37 = arith.addf %34, %36 : vector<16x256xf32>
    %c0_23 = arith.constant 0 : index
    %c0_24 = arith.constant 0 : index
    %c0_25 = arith.constant 0 : index
    %38 = vector.load %arg3[%c0_23, %c0_24, %c0_25] : memref<1x1x16xf32, #tpu.memory_space<vmem>>, vector<1x1x16xf32>
    %cst_26 = arith.constant 0.000000e+00 : f32
    %39 = vector.broadcast %cst_26 : f32 to vector<1x1x16xf32>
    %40 = arith.cmpf oeq, %38, %39 : vector<1x1x16xf32>
    %cst_27 = arith.constant -1.000000e+09 : f32
    %cst_28 = arith.constant 0.000000e+00 : f32
    %41 = vector.broadcast %cst_27 : f32 to vector<1x1x16xf32>
    %42 = vector.broadcast %cst_28 : f32 to vector<1x1x16xf32>
    %43 = arith.select %40, %41, %42 : vector<1x1x16xi1>, vector<1x1x16xf32>
    %44 = vector.shape_cast %31 : vector<16x128xf32> to vector<16x4x32xf32>
    %45 = tpu.transpose %44, [1, 0, 2] : vector<16x4x32xf32> -> vector<4x16x32xf32>
    %46 = vector.extract_strided_slice %37 {offsets = [0, 0], sizes = [16, 128], strides = [1, 1]} : vector<16x256xf32> to vector<16x128xf32>
    %47 = vector.shape_cast %46 : vector<16x128xf32> to vector<16x4x32xf32>
    %48 = tpu.transpose %47, [1, 0, 2] : vector<16x4x32xf32> -> vector<4x16x32xf32>
    %49 = vector.extract_strided_slice %37 {offsets = [0, 128], sizes = [16, 128], strides = [1, 1]} : vector<16x256xf32> to vector<16x128xf32>
    %50 = vector.shape_cast %49 : vector<16x128xf32> to vector<16x4x32xf32>
    %51 = tpu.transpose %50, [1, 0, 2] : vector<16x4x32xf32> -> vector<4x16x32xf32>
    %52 = vector.shape_cast %43 : vector<1x1x16xf32> to vector<1x16xf32>
    %53 = arith.truncf %45 : vector<4x16x32xf32> to vector<4x16x32xbf16>
    %54 = arith.truncf %48 : vector<4x16x32xf32> to vector<4x16x32xbf16>
    %cst_29 = arith.constant dense<0.000000e+00> : vector<4x16x16xf32>
    %55 = tpu.matmul %53, %54, %cst_29 {dimension_numbers = #tpu.dot_dimension_numbers<[2], [2], [1], [1], [0, 0, 0, 1, 1, 1], [0], [0]>} : vector<4x16x32xbf16>, vector<4x16x32xbf16>, vector<4x16x16xf32> -> vector<4x16x16xf32>
    %cst_30 = arith.constant 0.176776692 : f32
    %56 = vector.broadcast %cst_30 : f32 to vector<4x16x16xf32>
    %57 = arith.mulf %55, %56 : vector<4x16x16xf32>
    %58 = vector.shape_cast %52 : vector<1x16xf32> to vector<1x1x16xf32>
    %59 = vector.broadcast %58 : vector<1x1x16xf32> to vector<4x16x16xf32>
    %60 = arith.addf %57, %59 : vector<4x16x16xf32>
    %cst_31 = arith.constant dense<0xFF800000> : vector<4x16xf32>
    %61 = vector.multi_reduction <maximumf>, %60, %cst_31 [2] : vector<4x16x16xf32> to vector<4x16xf32>
    %62 = vector.shape_cast %61 : vector<4x16xf32> to vector<4x16x1xf32>
    %63 = vector.broadcast %62 : vector<4x16x1xf32> to vector<4x16x16xf32>
    %64 = arith.subf %60, %63 : vector<4x16x16xf32>
    %65 = math.exp %64 : vector<4x16x16xf32>
    %cst_32 = arith.constant dense<0.000000e+00> : vector<4x16xf32>
    %66 = vector.multi_reduction <add>, %65, %cst_32 [2] : vector<4x16x16xf32> to vector<4x16xf32>
    %67 = vector.shape_cast %66 : vector<4x16xf32> to vector<4x16x1xf32>
    %68 = tpu.reciprocal %67 {approx = true} : vector<4x16x1xf32> -> vector<4x16x1xf32>
    %69 = vector.broadcast %68 : vector<4x16x1xf32> to vector<4x16x16xf32>
    %70 = arith.mulf %65, %69 : vector<4x16x16xf32>
    %71 = arith.truncf %70 : vector<4x16x16xf32> to vector<4x16x16xbf16>
    %72 = arith.truncf %51 : vector<4x16x32xf32> to vector<4x16x32xbf16>
    %cst_33 = arith.constant dense<0.000000e+00> : vector<4x16x32xf32>
    %73 = tpu.matmul %71, %72, %cst_33 {dimension_numbers = #tpu.dot_dimension_numbers<[2], [1], [1], [2], [0, 0, 0, 1, 1, 2], [0], [0]>} : vector<4x16x16xbf16>, vector<4x16x32xbf16>, vector<4x16x32xf32> -> vector<4x16x32xf32>
    %74 = tpu.transpose %73, [1, 0, 2] : vector<4x16x32xf32> -> vector<16x4x32xf32>
    %75 = vector.shape_cast %74 : vector<16x4x32xf32> to vector<16x128xf32>
    %76 = arith.truncf %75 : vector<16x128xf32> to vector<16x128xbf16>
    %c0_34 = arith.constant 0 : index
    %c0_35 = arith.constant 0 : index
    %77 = vector.load %arg8[%c0_34, %c0_35] : memref<128x128xbf16, #tpu.memory_space<vmem>>, vector<128x128xbf16>
    %cst_36 = arith.constant dense<0.000000e+00> : vector<16x128xf32>
    %78 = tpu.matmul %76, %77, %cst_36 {dimension_numbers = #tpu.dot_dimension_numbers<[1], [0], [0], [1], [0, 0, 1, 1], [], []>} : vector<16x128xbf16>, vector<128x128xbf16>, vector<16x128xf32> -> vector<16x128xf32>
    %c0_37 = arith.constant 0 : index
    %c0_38 = arith.constant 0 : index
    %79 = vector.load %arg9[%c0_37, %c0_38] : memref<1x128xf32, #tpu.memory_space<vmem>>, vector<1x128xf32>
    %80 = vector.broadcast %79 : vector<1x128xf32> to vector<16x128xf32>
    %81 = arith.addf %78, %80 : vector<16x128xf32>
    %82 = arith.addf %1, %81 : vector<16x128xf32>
    %83 = vector.shape_cast %82 : vector<16x128xf32> to vector<1x16x128xf32>
    %c0_39 = arith.constant 0 : index
    %c0_40 = arith.constant 0 : index
    %c0_41 = arith.constant 0 : index
    %84 = vector.load %arg12[%c0_39, %c0_40, %c0_41] : memref<1x16x128xf32, #tpu.memory_space<vmem>>, vector<1x16x128xf32>
    tpu.vector_store %arg12[%c0_39, %c0_40, %c0_41], %83 {strides = array<i32>} : memref<1x16x128xf32, #tpu.memory_space<vmem>>, vector<1x16x128xf32>,
    return
  }
  func.func @transform_0(%arg0: i32) -> (i32, i32, i32) {
    %c0_i32 = arith.constant 0 : i32
    %c0_i32_0 = arith.constant 0 : i32
    %c0_i32_1 = arith.constant 0 : i32
    return %arg0, %c0_i32, %c0_i32_0 : i32, i32, i32
  }
  func.func @transform_1(%arg0: i32) -> (i32, i32, i32) {
    %c0_i32 = arith.constant 0 : i32
    %c0_i32_0 = arith.constant 0 : i32
    %c0_i32_1 = arith.constant 0 : i32
    return %arg0, %c0_i32, %c0_i32_0 : i32, i32, i32
  }
  func.func @transform_2(%arg0: i32) -> (i32, i32, i32) {
    %c0_i32 = arith.constant 0 : i32
    %c0_i32_0 = arith.constant 0 : i32
    %c0_i32_1 = arith.constant 0 : i32
    return %arg0, %c0_i32, %c0_i32_0 : i32, i32, i32
  }
  func.func @transform_3(%arg0: i32) -> (i32, i32) {
    %c0_i32 = arith.constant 0 : i32
    %c0_i32_0 = arith.constant 0 : i32
    %c0_i32_1 = arith.constant 0 : i32
    return %c0_i32, %c0_i32_0 : i32, i32
  }
  func.func @transform_4(%arg0: i32) -> (i32, i32) {
    %c0_i32 = arith.constant 0 : i32
    %c0_i32_0 = arith.constant 0 : i32
    %c0_i32_1 = arith.constant 0 : i32
    return %c0_i32, %c0_i32_0 : i32, i32
  }
  func.func @transform_5(%arg0: i32) -> (i32, i32) {
    %c0_i32 = arith.constant 0 : i32
    %c0_i32_0 = arith.constant 0 : i32
    %c0_i32_1 = arith.constant 0 : i32
    return %c0_i32, %c0_i32_0 : i32, i32
  }
  func.func @transform_6(%arg0: i32) -> (i32, i32) {
    %c0_i32 = arith.constant 0 : i32
    %c0_i32_0 = arith.constant 0 : i32
    %c0_i32_1 = arith.constant 0 : i32
    return %c0_i32, %c0_i32_0 : i32, i32
  }
  func.func @transform_7(%arg0: i32) -> (i32, i32) {
    %c0_i32 = arith.constant 0 : i32
    %c0_i32_0 = arith.constant 0 : i32
    %c0_i32_1 = arith.constant 0 : i32
    return %c0_i32, %c0_i32_0 : i32, i32
  }
  func.func @transform_8(%arg0: i32) -> (i32, i32) {
    %c0_i32 = arith.constant 0 : i32
    %c0_i32_0 = arith.constant 0 : i32
    %c0_i32_1 = arith.constant 0 : i32
    return %c0_i32, %c0_i32_0 : i32, i32
  }
  func.func @transform_9(%arg0: i32) -> (i32, i32) {
    %c0_i32 = arith.constant 0 : i32
    %c0_i32_0 = arith.constant 0 : i32
    %c0_i32_1 = arith.constant 0 : i32
    return %c0_i32, %c0_i32_0 : i32, i32
  }
  func.func @transform_10(%arg0: i32) -> (i32, i32) {
    %c0_i32 = arith.constant 0 : i32
    %c0_i32_0 = arith.constant 0 : i32
    %c0_i32_1 = arith.constant 0 : i32
    return %c0_i32, %c0_i32_0 : i32, i32
  }
  func.func @transform_11(%arg0: i32) -> (i32, i32, i32) {
    %c0_i32 = arith.constant 0 : i32
    %c0_i32_0 = arith.constant 0 : i32
    %c0_i32_1 = arith.constant 0 : i32
    return %arg0, %c0_i32, %c0_i32_0 : i32, i32, i32
  }
}

module attributes {stable_mosaic.version = 11 : i64} {
  func.func @_self_attn_kernel(%arg0: i32, %arg1: memref<1x16x128xf32, #tpu.memory_space<vmem>>, %arg2: memref<1x1x16xf32, #tpu.memory_space<vmem>>, %arg3: memref<128x384xbf16, #tpu.memory_space<vmem>>, %arg4: memref<1x384xf32, #tpu.memory_space<vmem>>, %arg5: memref<128x128xbf16, #tpu.memory_space<vmem>>, %arg6: memref<1x128xf32, #tpu.memory_space<vmem>>, %arg7: memref<1x128xf32, #tpu.memory_space<vmem>>, %arg8: memref<1x128xf32, #tpu.memory_space<vmem>>, %arg9: memref<1x16x128xf32, #tpu.memory_space<vmem>>) attributes {dimension_semantics = [#tpu.dimension_semantics<parallel>], iteration_bounds = array<i64: 2>, scalar_prefetch = 0 : i64, scratch_operands = 0 : i64, tpu.core_type = #tpu.core_type<tc>, window_params = [{transform_indices = @transform_0, window_bounds = array<i64: 1, 16, 128>}, {transform_indices = @transform_1, window_bounds = array<i64: 1, 1, 16>}, {pipeline_mode = #tpu.pipeline_mode<synchronous>, transform_indices = @transform_2, window_bounds = array<i64: 128, 384>}, {pipeline_mode = #tpu.pipeline_mode<synchronous>, transform_indices = @transform_3, window_bounds = array<i64: 1, 384>}, {pipeline_mode = #tpu.pipeline_mode<synchronous>, transform_indices = @transform_4, window_bounds = array<i64: 128, 128>}, {pipeline_mode = #tpu.pipeline_mode<synchronous>, transform_indices = @transform_5, window_bounds = array<i64: 1, 128>}, {pipeline_mode = #tpu.pipeline_mode<synchronous>, transform_indices = @transform_6, window_bounds = array<i64: 1, 128>}, {pipeline_mode = #tpu.pipeline_mode<synchronous>, transform_indices = @transform_7, window_bounds = array<i64: 1, 128>}, {transform_indices = @transform_8, window_bounds = array<i64: 1, 16, 128>}]} {
    %c0 = arith.constant 0 : index
    %c0_0 = arith.constant 0 : index
    %c0_1 = arith.constant 0 : index
    %0 = vector.load %arg1[%c0, %c0_0, %c0_1] : memref<1x16x128xf32, #tpu.memory_space<vmem>>, vector<1x16x128xf32>
    %1 = vector.shape_cast %0 : vector<1x16x128xf32> to vector<16x128xf32>
    %c0_2 = arith.constant 0 : index
    %c0_3 = arith.constant 0 : index
    %2 = vector.load %arg7[%c0_2, %c0_3] : memref<1x128xf32, #tpu.memory_space<vmem>>, vector<1x128xf32>
    %c0_4 = arith.constant 0 : index
    %c0_5 = arith.constant 0 : index
    %3 = vector.load %arg8[%c0_4, %c0_5] : memref<1x128xf32, #tpu.memory_space<vmem>>, vector<1x128xf32>
    %cst = arith.constant dense<0.000000e+00> : vector<16xf32>
    %4 = vector.multi_reduction <add>, %1, %cst [1] : vector<16x128xf32> to vector<16xf32>
    %5 = vector.shape_cast %4 : vector<16xf32> to vector<16x1xf32>
    %cst_6 = arith.constant 1.280000e+02 : f32
    %6 = vector.broadcast %cst_6 : f32 to vector<16x1xf32>
    %7 = arith.divf %5, %6 : vector<16x1xf32>
    %8 = vector.broadcast %7 : vector<16x1xf32> to vector<16x128xf32>
    %9 = arith.subf %1, %8 : vector<16x128xf32>
    %10 = arith.mulf %9, %9 : vector<16x128xf32>
    %cst_7 = arith.constant dense<0.000000e+00> : vector<16xf32>
    %11 = vector.multi_reduction <add>, %10, %cst_7 [1] : vector<16x128xf32> to vector<16xf32>
    %12 = vector.shape_cast %11 : vector<16xf32> to vector<16x1xf32>
    %cst_8 = arith.constant 0.00787401571 : f32
    %13 = vector.broadcast %cst_8 : f32 to vector<16x1xf32>
    %14 = arith.mulf %12, %13 : vector<16x1xf32>
    %15 = math.sqrt %14 : vector<16x1xf32>
    %cst_9 = arith.constant 9.99999997E-7 : f32
    %16 = vector.broadcast %cst_9 : f32 to vector<16x1xf32>
    %17 = arith.addf %15, %16 : vector<16x1xf32>
    %18 = vector.broadcast %17 : vector<16x1xf32> to vector<16x128xf32>
    %19 = arith.divf %9, %18 : vector<16x128xf32>
    %20 = vector.broadcast %2 : vector<1x128xf32> to vector<16x128xf32>
    %21 = arith.mulf %20, %19 : vector<16x128xf32>
    %22 = vector.broadcast %3 : vector<1x128xf32> to vector<16x128xf32>
    %23 = arith.addf %21, %22 : vector<16x128xf32>
    %24 = arith.truncf %23 : vector<16x128xf32> to vector<16x128xbf16>
    %c0_10 = arith.constant 0 : index
    %c0_11 = arith.constant 0 : index
    %25 = vector.load %arg3[%c0_10, %c0_11] : memref<128x384xbf16, #tpu.memory_space<vmem>>, vector<128x384xbf16>
    %cst_12 = arith.constant dense<0.000000e+00> : vector<16x384xf32>
    %26 = tpu.matmul %24, %25, %cst_12 {dimension_numbers = #tpu.dot_dimension_numbers<[1], [0], [0], [1], [0, 0, 1, 1], [], []>} : vector<16x128xbf16>, vector<128x384xbf16>, vector<16x384xf32> -> vector<16x384xf32>
    %c0_13 = arith.constant 0 : index
    %c0_14 = arith.constant 0 : index
    %27 = vector.load %arg4[%c0_13, %c0_14] : memref<1x384xf32, #tpu.memory_space<vmem>>, vector<1x384xf32>
    %28 = vector.broadcast %27 : vector<1x384xf32> to vector<16x384xf32>
    %29 = arith.addf %26, %28 : vector<16x384xf32>
    %c0_15 = arith.constant 0 : index
    %c0_16 = arith.constant 0 : index
    %c0_17 = arith.constant 0 : index
    %30 = vector.load %arg2[%c0_15, %c0_16, %c0_17] : memref<1x1x16xf32, #tpu.memory_space<vmem>>, vector<1x1x16xf32>
    %cst_18 = arith.constant 0.000000e+00 : f32
    %31 = vector.broadcast %cst_18 : f32 to vector<1x1x16xf32>
    %32 = arith.cmpf oeq, %30, %31 : vector<1x1x16xf32>
    %cst_19 = arith.constant -1.000000e+09 : f32
    %cst_20 = arith.constant 0.000000e+00 : f32
    %33 = vector.broadcast %cst_19 : f32 to vector<1x1x16xf32>
    %34 = vector.broadcast %cst_20 : f32 to vector<1x1x16xf32>
    %35 = arith.select %32, %33, %34 : vector<1x1x16xi1>, vector<1x1x16xf32>
    %36 = tpu.iota {dimensions = array<i32: 0>} : vector<16x16xi32>
    %37 = tpu.iota {dimensions = array<i32: 1>} : vector<16x16xi32>
    %38 = arith.cmpi sge, %36, %37 : vector<16x16xi32>
    %cst_21 = arith.constant 0.000000e+00 : f32
    %cst_22 = arith.constant -1.000000e+09 : f32
    %39 = vector.broadcast %cst_21 : f32 to vector<16x16xf32>
    %40 = vector.broadcast %cst_22 : f32 to vector<16x16xf32>
    %41 = arith.select %38, %39, %40 : vector<16x16xi1>, vector<16x16xf32>
    %42 = vector.extract_strided_slice %29 {offsets = [0, 0], sizes = [16, 128], strides = [1, 1]} : vector<16x384xf32> to vector<16x128xf32>
    %43 = vector.shape_cast %42 : vector<16x128xf32> to vector<16x4x32xf32>
    %44 = tpu.transpose %43, [1, 0, 2] : vector<16x4x32xf32> -> vector<4x16x32xf32>
    %45 = vector.extract_strided_slice %29 {offsets = [0, 128], sizes = [16, 128], strides = [1, 1]} : vector<16x384xf32> to vector<16x128xf32>
    %46 = vector.shape_cast %45 : vector<16x128xf32> to vector<16x4x32xf32>
    %47 = tpu.transpose %46, [1, 0, 2] : vector<16x4x32xf32> -> vector<4x16x32xf32>
    %48 = vector.extract_strided_slice %29 {offsets = [0, 256], sizes = [16, 128], strides = [1, 1]} : vector<16x384xf32> to vector<16x128xf32>
    %49 = vector.shape_cast %48 : vector<16x128xf32> to vector<16x4x32xf32>
    %50 = tpu.transpose %49, [1, 0, 2] : vector<16x4x32xf32> -> vector<4x16x32xf32>
    %51 = vector.shape_cast %35 : vector<1x1x16xf32> to vector<1x16xf32>
    %52 = vector.broadcast %51 : vector<1x16xf32> to vector<16x16xf32>
    %53 = arith.addf %52, %41 : vector<16x16xf32>
    %54 = arith.truncf %44 : vector<4x16x32xf32> to vector<4x16x32xbf16>
    %55 = arith.truncf %47 : vector<4x16x32xf32> to vector<4x16x32xbf16>
    %cst_23 = arith.constant dense<0.000000e+00> : vector<4x16x16xf32>
    %56 = tpu.matmul %54, %55, %cst_23 {dimension_numbers = #tpu.dot_dimension_numbers<[2], [2], [1], [1], [0, 0, 0, 1, 1, 1], [0], [0]>} : vector<4x16x32xbf16>, vector<4x16x32xbf16>, vector<4x16x16xf32> -> vector<4x16x16xf32>
    %cst_24 = arith.constant 0.176776692 : f32
    %57 = vector.broadcast %cst_24 : f32 to vector<4x16x16xf32>
    %58 = arith.mulf %56, %57 : vector<4x16x16xf32>
    %59 = vector.shape_cast %53 : vector<16x16xf32> to vector<1x16x16xf32>
    %60 = vector.broadcast %59 : vector<1x16x16xf32> to vector<4x16x16xf32>
    %61 = arith.addf %58, %60 : vector<4x16x16xf32>
    %cst_25 = arith.constant dense<0xFF800000> : vector<4x16xf32>
    %62 = vector.multi_reduction <maximumf>, %61, %cst_25 [2] : vector<4x16x16xf32> to vector<4x16xf32>
    %63 = vector.shape_cast %62 : vector<4x16xf32> to vector<4x16x1xf32>
    %64 = vector.broadcast %63 : vector<4x16x1xf32> to vector<4x16x16xf32>
    %65 = arith.subf %61, %64 : vector<4x16x16xf32>
    %66 = math.exp %65 : vector<4x16x16xf32>
    %cst_26 = arith.constant dense<0.000000e+00> : vector<4x16xf32>
    %67 = vector.multi_reduction <add>, %66, %cst_26 [2] : vector<4x16x16xf32> to vector<4x16xf32>
    %68 = vector.shape_cast %67 : vector<4x16xf32> to vector<4x16x1xf32>
    %69 = tpu.reciprocal %68 {approx = true} : vector<4x16x1xf32> -> vector<4x16x1xf32>
    %70 = vector.broadcast %69 : vector<4x16x1xf32> to vector<4x16x16xf32>
    %71 = arith.mulf %66, %70 : vector<4x16x16xf32>
    %72 = arith.truncf %71 : vector<4x16x16xf32> to vector<4x16x16xbf16>
    %73 = arith.truncf %50 : vector<4x16x32xf32> to vector<4x16x32xbf16>
    %cst_27 = arith.constant dense<0.000000e+00> : vector<4x16x32xf32>
    %74 = tpu.matmul %72, %73, %cst_27 {dimension_numbers = #tpu.dot_dimension_numbers<[2], [1], [1], [2], [0, 0, 0, 1, 1, 2], [0], [0]>} : vector<4x16x16xbf16>, vector<4x16x32xbf16>, vector<4x16x32xf32> -> vector<4x16x32xf32>
    %75 = tpu.transpose %74, [1, 0, 2] : vector<4x16x32xf32> -> vector<16x4x32xf32>
    %76 = vector.shape_cast %75 : vector<16x4x32xf32> to vector<16x128xf32>
    %77 = arith.truncf %76 : vector<16x128xf32> to vector<16x128xbf16>
    %c0_28 = arith.constant 0 : index
    %c0_29 = arith.constant 0 : index
    %78 = vector.load %arg5[%c0_28, %c0_29] : memref<128x128xbf16, #tpu.memory_space<vmem>>, vector<128x128xbf16>
    %cst_30 = arith.constant dense<0.000000e+00> : vector<16x128xf32>
    %79 = tpu.matmul %77, %78, %cst_30 {dimension_numbers = #tpu.dot_dimension_numbers<[1], [0], [0], [1], [0, 0, 1, 1], [], []>} : vector<16x128xbf16>, vector<128x128xbf16>, vector<16x128xf32> -> vector<16x128xf32>
    %c0_31 = arith.constant 0 : index
    %c0_32 = arith.constant 0 : index
    %80 = vector.load %arg6[%c0_31, %c0_32] : memref<1x128xf32, #tpu.memory_space<vmem>>, vector<1x128xf32>
    %81 = vector.broadcast %80 : vector<1x128xf32> to vector<16x128xf32>
    %82 = arith.addf %79, %81 : vector<16x128xf32>
    %83 = arith.addf %1, %82 : vector<16x128xf32>
    %84 = vector.shape_cast %83 : vector<16x128xf32> to vector<1x16x128xf32>
    %c0_33 = arith.constant 0 : index
    %c0_34 = arith.constant 0 : index
    %c0_35 = arith.constant 0 : index
    %85 = vector.load %arg9[%c0_33, %c0_34, %c0_35] : memref<1x16x128xf32, #tpu.memory_space<vmem>>, vector<1x16x128xf32>
    tpu.vector_store %arg9[%c0_33, %c0_34, %c0_35], %84 {strides = array<i32>} : memref<1x16x128xf32, #tpu.memory_space<vmem>>, vector<1x16x128xf32>,
    return
  }
  func.func @transform_0(%arg0: i32) -> (i32, i32, i32) {
    %c0_i32 = arith.constant 0 : i32
    %c0_i32_0 = arith.constant 0 : i32
    %c0_i32_1 = arith.constant 0 : i32
    return %arg0, %c0_i32, %c0_i32_0 : i32, i32, i32
  }
  func.func @transform_1(%arg0: i32) -> (i32, i32, i32) {
    %c0_i32 = arith.constant 0 : i32
    %c0_i32_0 = arith.constant 0 : i32
    %c0_i32_1 = arith.constant 0 : i32
    return %arg0, %c0_i32, %c0_i32_0 : i32, i32, i32
  }
  func.func @transform_2(%arg0: i32) -> (i32, i32) {
    %c0_i32 = arith.constant 0 : i32
    %c0_i32_0 = arith.constant 0 : i32
    %c0_i32_1 = arith.constant 0 : i32
    return %c0_i32, %c0_i32_0 : i32, i32
  }
  func.func @transform_3(%arg0: i32) -> (i32, i32) {
    %c0_i32 = arith.constant 0 : i32
    %c0_i32_0 = arith.constant 0 : i32
    %c0_i32_1 = arith.constant 0 : i32
    return %c0_i32, %c0_i32_0 : i32, i32
  }
  func.func @transform_4(%arg0: i32) -> (i32, i32) {
    %c0_i32 = arith.constant 0 : i32
    %c0_i32_0 = arith.constant 0 : i32
    %c0_i32_1 = arith.constant 0 : i32
    return %c0_i32, %c0_i32_0 : i32, i32
  }
  func.func @transform_5(%arg0: i32) -> (i32, i32) {
    %c0_i32 = arith.constant 0 : i32
    %c0_i32_0 = arith.constant 0 : i32
    %c0_i32_1 = arith.constant 0 : i32
    return %c0_i32, %c0_i32_0 : i32, i32
  }
  func.func @transform_6(%arg0: i32) -> (i32, i32) {
    %c0_i32 = arith.constant 0 : i32
    %c0_i32_0 = arith.constant 0 : i32
    %c0_i32_1 = arith.constant 0 : i32
    return %c0_i32, %c0_i32_0 : i32, i32
  }
  func.func @transform_7(%arg0: i32) -> (i32, i32) {
    %c0_i32 = arith.constant 0 : i32
    %c0_i32_0 = arith.constant 0 : i32
    %c0_i32_1 = arith.constant 0 : i32
    return %c0_i32, %c0_i32_0 : i32, i32
  }
  func.func @transform_8(%arg0: i32) -> (i32, i32, i32) {
    %c0_i32 = arith.constant 0 : i32
    %c0_i32_0 = arith.constant 0 : i32
    %c0_i32_1 = arith.constant 0 : i32
    return %arg0, %c0_i32, %c0_i32_0 : i32, i32, i32
  }
}

</mosaic_0001>

<llo_original>
// kernel: decoder_layer.5
$region0: #{decoder_layer.5}
  #allocation0 [shape = 'u32[]', space=smem, size = 0x4, offset = 0x4, fixed_abs, tag = 'smem constant byte address 0x4 - core index']
  #allocation1 [shape = 'u32[72,128]{1,0:T(1,128)}', space=vmem, size = 0x9000, scoped, tag = 'internal scratch']
  %s0 = inlined_call_operand.vmem [shape: f32[32,128], index: 0, kind: input, shape index: {}]
  %s1 = inlined_call_operand.hbm [shape: bf16[128,512], index: 1, kind: input, shape index: {}]
  %s2 = inlined_call_operand.vmem [shape: f32[1,512], index: 2, kind: input, shape index: {}]
  %s3 = inlined_call_operand.hbm [shape: bf16[512,128], index: 3, kind: input, shape index: {}]
  %s4 = inlined_call_operand.hbm [shape: f32[1,128], index: 4, kind: input, shape index: {}]
  %s5 = inlined_call_operand.vmem [shape: f32[1,128], index: 5, kind: input, shape index: {}]
  %s6 = inlined_call_operand.vmem [shape: f32[1,128], index: 6, kind: input, shape index: {}]
  %s7 = inlined_call_operand.hbm [shape: f32[32,128], index: 7, kind: output, shape index: {}]
  %s8 = sld [smem:[#allocation0]]
  $region73: #{decoder_layer.5} parent=0
    _
  %s10 = ssub.s32 1, %s8
  %s11 = scalar_select 0, %s10, %s8
  $region1: #{decoder_layer.5} parent=0
    #allocation2 [shape = 'u8[131072]{0}', space=vmem, size = 0x20000, scoped, tag = 'input window, operand 1, single buffered']
    #allocation3 [shape = 's32[2]{0}', space=sflag, size = 0x8, scoped, tag = 'scoped memory for decoder_layer.5']
    #allocation4 [shape = 's32[2]{0}', space=sflag, size = 0x8, scoped, tag = 'scoped memory for decoder_layer.5']
    #allocation5 [shape = 'u8[131072]{0}', space=vmem, size = 0x20000, scoped, tag = 'input window, operand 3, single buffered']
    #allocation6 [shape = 's32[1]{0}', space=sflag, size = 0x4, scoped, tag = 'scoped memory for decoder_layer.5']
    #allocation7 [shape = 'u8[512]{0}', space=vmem, size = 0x400, scoped, tag = 'input window, operand 4, single buffered']
    #allocation8 [shape = 'u8[16384]{0}', space=vmem, size = 0x4000, scoped, tag = 'output window, operand 0']
    %12 = vsyncpa [#allocation3], 0
    %13 = vsyncpa [#allocation6], 0
    %14 = vsyncpa [#allocation4], 0
    %s15 = scalar_lea.sflag [#allocation4], 1
    %16 = vsyncpa %s15, 0
    loop: start=0, step=1, limit=4
    $region2: #{decoder_layer.5} parent=1 // loop_pre_header
      _
    $region3: #{decoder_layer.5} parent=1 // loop_header
      %s18 = sphi 0, %s22
      %p19 = scmp.ge.s32.totalorder %s18, 4
      %s28 = sphi 0, %s30
      %s31 = sphi 0, %s28
      %s32 = sphi 0, %s31
      %s48 = sphi 0, %s32
      %s52 = sphi 0, %s52
      %s54 = sphi 0, %s52
      %s55 = sphi 0, %s54
      %s69 = sphi 0, %s55
      %s73 = sphi 0, %s73
      %s75 = sphi 0, %s73
      %s76 = sphi 0, %s75
      %s90 = sphi 0, %s76
      %s94 = sphi 0, %s94
      %s96 = sphi 0, %s94
      %s97 = sphi 0, %s96
      %s111 = sphi 0, %s97
      %s115 = sphi 0, %s115
      %s117 = sphi 0, %s115
      %s118 = sphi 0, %s117
      %s132 = sphi 0, %s118
      %s136 = sphi 0, %s136
      %s138 = sphi 0, %s136
      %s139 = sphi 0, %s138
      %s153 = sphi 0, %s139
      %s157 = sphi 0, %s157
      %s159 = sphi 0, %s157
      %s160 = sphi 0, %s159
      %s174 = sphi 0, %s160
      %s180 = sphi 0, %s182
      %s183 = sphi 0, %s180
      %s184 = sphi 0, %s183
      %s200 = sphi 0, %s184
    $region4: #{decoder_layer.5} parent=1 // loop_header_branch
      %21 = sbr.rel (%p19) target = $region8
    $region5: #{decoder_layer.5} parent=1 // loop_body
      %s23 = ssub.s32 %s18, 1
      %s24 = ssub.s32 %s18, 2
      %s25 = sadd.s32 %s18, 1
      %s26 = ssub.s32 %s18, %s25
      %p27 = scmp.eq.s32.totalorder %s26, 0
      %s29 = sadd.s32 %s28, 1
      %s30 = scalar_select %p27, %s28, %s29
      %p33 = pneg %p27
      %p34 = scmp.eq.s32.totalorder %s18, 1
      %p35 = por %p33, %p34
      %p36 = scmp.ne.s32.totalorder %s28, %s31
      %p37 = scmp.eq.s32.totalorder %s18, 0
      %p38 = por %p36, %p37
      %p39 = scmp.ne.s32.totalorder %s28, %s31
      %p40 = scmp.eq.s32.totalorder %s23, 1
      %p41 = por %p39, %p40
      %p42 = scmp.ne.s32.totalorder %s31, %s32
      %p43 = scmp.eq.s32.totalorder %s23, 0
      %p44 = por %p42, %p43
      %p45 = scmp.ne.s32.totalorder %s31, %s32
      %p46 = scmp.eq.s32.totalorder %s24, 1
      %p47 = por %p45, %p46
      %p49 = scmp.ne.s32.totalorder %s32, %s48
      %p50 = scmp.eq.s32.totalorder %s24, 0
      %p51 = por %p49, %p50
      %s53 = sadd.s32 %s52, 1
      %p56 = scmp.eq.s32.totalorder %s18, 1
      %p57 = scmp.ne.s32.totalorder %s52, %s54
      %p58 = scmp.eq.s32.totalorder %s18, 0
      %p59 = por %p57, %p58
      %p60 = scmp.ne.s32.totalorder %s52, %s54
      %p61 = scmp.eq.s32.totalorder %s23, 1
      %p62 = por %p60, %p61
      %p63 = scmp.ne.s32.totalorder %s54, %s55
      %p64 = scmp.eq.s32.totalorder %s23, 0
      %p65 = por %p63, %p64
      %p66 = scmp.ne.s32.totalorder %s54, %s55
      %p67 = scmp.eq.s32.totalorder %s24, 1
      %p68 = por %p66, %p67
      %p70 = scmp.ne.s32.totalorder %s55, %s69
      %p71 = scmp.eq.s32.totalorder %s24, 0
      %p72 = por %p70, %p71
      %s74 = sadd.s32 %s73, 1
      %p77 = scmp.eq.s32.totalorder %s18, 1
      %p78 = scmp.ne.s32.totalorder %s73, %s75
      %p79 = scmp.eq.s32.totalorder %s18, 0
      %p80 = por %p78, %p79
      %p81 = scmp.ne.s32.totalorder %s73, %s75
      %p82 = scmp.eq.s32.totalorder %s23, 1
      %p83 = por %p81, %p82
      %p84 = scmp.ne.s32.totalorder %s75, %s76
      %p85 = scmp.eq.s32.totalorder %s23, 0
      %p86 = por %p84, %p85
      %p87 = scmp.ne.s32.totalorder %s75, %s76
      %p88 = scmp.eq.s32.totalorder %s24, 1
      %p89 = por %p87, %p88
      %p91 = scmp.ne.s32.totalorder %s76, %s90
      %p92 = scmp.eq.s32.totalorder %s24, 0
      %p93 = por %p91, %p92
      %s95 = sadd.s32 %s94, 1
      %p98 = scmp.eq.s32.totalorder %s18, 1
      %p99 = scmp.ne.s32.totalorder %s94, %s96
      %p100 = scmp.eq.s32.totalorder %s18, 0
      %p101 = por %p99, %p100
      %p102 = scmp.ne.s32.totalorder %s94, %s96
      %p103 = scmp.eq.s32.totalorder %s23, 1
      %p104 = por %p102, %p103
      %p105 = scmp.ne.s32.totalorder %s96, %s97
      %p106 = scmp.eq.s32.totalorder %s23, 0
      %p107 = por %p105, %p106
      %p108 = scmp.ne.s32.totalorder %s96, %s97
      %p109 = scmp.eq.s32.totalorder %s24, 1
      %p110 = por %p108, %p109
      %p112 = scmp.ne.s32.totalorder %s97, %s111
      %p113 = scmp.eq.s32.totalorder %s24, 0
      %p114 = por %p112, %p113
      %s116 = sadd.s32 %s115, 1
      %p119 = scmp.eq.s32.totalorder %s18, 1
      %p120 = scmp.ne.s32.totalorder %s115, %s117
      %p121 = scmp.eq.s32.totalorder %s18, 0
      %p122 = por %p120, %p121
      %p123 = scmp.ne.s32.totalorder %s115, %s117
      %p124 = scmp.eq.s32.totalorder %s23, 1
      %p125 = por %p123, %p124
      %p126 = scmp.ne.s32.totalorder %s117, %s118
      %p127 = scmp.eq.s32.totalorder %s23, 0
      %p128 = por %p126, %p127
      %p129 = scmp.ne.s32.totalorder %s117, %s118
      %p130 = scmp.eq.s32.totalorder %s24, 1
      %p131 = por %p129, %p130
      %p133 = scmp.ne.s32.totalorder %s118, %s132
      %p134 = scmp.eq.s32.totalorder %s24, 0
      %p135 = por %p133, %p134
      %s137 = sadd.s32 %s136, 1
      %p140 = scmp.eq.s32.totalorder %s18, 1
      %p141 = scmp.ne.s32.totalorder %s136, %s138
      %p142 = scmp.eq.s32.totalorder %s18, 0
      %p143 = por %p141, %p142
      %p144 = scmp.ne.s32.totalorder %s136, %s138
      %p145 = scmp.eq.s32.totalorder %s23, 1
      %p146 = por %p144, %p145
      %p147 = scmp.ne.s32.totalorder %s138, %s139
      %p148 = scmp.eq.s32.totalorder %s23, 0
      %p149 = por %p147, %p148
      %p150 = scmp.ne.s32.totalorder %s138, %s139
      %p151 = scmp.eq.s32.totalorder %s24, 1
      %p152 = por %p150, %p151
      %p154 = scmp.ne.s32.totalorder %s139, %s153
      %p155 = scmp.eq.s32.totalorder %s24, 0
      %p156 = por %p154, %p155
      %s158 = sadd.s32 %s157, 1
      %p161 = scmp.eq.s32.totalorder %s18, 1
      %p162 = scmp.ne.s32.totalorder %s157, %s159
      %p163 = scmp.eq.s32.totalorder %s18, 0
      %p164 = por %p162, %p163
      %p165 = scmp.ne.s32.totalorder %s157, %s159
      %p166 = scmp.eq.s32.totalorder %s23, 1
      %p167 = por %p165, %p166
      %p168 = scmp.ne.s32.totalorder %s159, %s160
      %p169 = scmp.eq.s32.totalorder %s23, 0
      %p170 = por %p168, %p169
      %p171 = scmp.ne.s32.totalorder %s159, %s160
      %p172 = scmp.eq.s32.totalorder %s24, 1
      %p173 = por %p171, %p172
      %p175 = scmp.ne.s32.totalorder %s160, %s174
      %p176 = scmp.eq.s32.totalorder %s24, 0
      %p177 = por %p175, %p176
      %s178 = ssub.s32 %s18, %s25
      %p179 = scmp.eq.s32.totalorder %s178, 0
      %s181 = sadd.s32 %s180, 1
      %s182 = scalar_select %p179, %s180, %s181
      %p185 = pneg %p179
      %p186 = scmp.eq.s32.totalorder %s18, 1
      %p187 = por %p185, %p186
      %p188 = scmp.ne.s32.totalorder %s180, %s183
      %p189 = scmp.eq.s32.totalorder %s18, 0
      %p190 = por %p188, %p189
      %p191 = scmp.ne.s32.totalorder %s180, %s183
      %p192 = scmp.eq.s32.totalorder %s23, 1
      %p193 = por %p191, %p192
      %p194 = scmp.ne.s32.totalorder %s183, %s184
      %p195 = scmp.eq.s32.totalorder %s23, 0
      %p196 = por %p194, %p195
      %p197 = scmp.ne.s32.totalorder %s183, %s184
      %p198 = scmp.eq.s32.totalorder %s24, 1
      %p199 = por %p197, %p198
      %p201 = scmp.ne.s32.totalorder %s184, %s200
      %p202 = scmp.eq.s32.totalorder %s24, 0
      %p203 = por %p201, %p202
      %p204 = scmp.le.s32.totalorder 1, %s18
      %p205 = scmp.lt.s32.totalorder %s18, 3
      %p206 = pnand %p204, %p205
      %p207 = pneg %p206
      // Predicated region
      $region9: #{decoder_layer.5} parent=5 // pred_check
        _
      $region10: #{decoder_layer.5} parent=5 // pred_check_branch
        %209 = sbr.rel (%p206) target = $region12
      $region11: #{decoder_layer.5} parent=5 // pred_region
        %s210 = ssub.s32 %s18, 1
        // Predicated region
        $region13: #{decoder_layer.5} parent=11 // pred_check
          %p211 = pneg %p65
        $region14: #{decoder_layer.5} parent=11 // pred_check_branch
          %213 = sbr.rel (%p211) target = $region16
        $region15: #{decoder_layer.5} parent=11 // pred_region
          %215 = vsyncadd [#allocation3], 0
          %s216 = sshll.u32 %s1, 4
          %s217 = int_to_ptr.hbm [resolvable:$true] %s216
          %s218 = sshll.u32 [#allocation2], 4
          %s219 = int_to_ptr.vmem [resolvable:$true] %s218
          %224 = dma.hbm_to_vmem [thread:$0]  %s217, 4096, %s219, [#allocation3], 256, 256, 16
        $region16: #{decoder_layer.5} parent=11 // pred_fallthru
          _
        // Predicated region
        $region17: #{decoder_layer.5} parent=11 // pred_check
          %p225 = pneg %p86
        $region18: #{decoder_layer.5} parent=11 // pred_check_branch
          %227 = sbr.rel (%p225) target = $region20
        $region19: #{decoder_layer.5} parent=11 // pred_region
          _
        $region20: #{decoder_layer.5} parent=11 // pred_fallthru
          _
        // Predicated region
        $region21: #{decoder_layer.5} parent=11 // pred_check
          %p228 = pneg %p107
        $region22: #{decoder_layer.5} parent=11 // pred_check_branch
          %230 = sbr.rel (%p228) target = $region24
        $region23: #{decoder_layer.5} parent=11 // pred_region
          %232 = vsyncadd [#allocation6], 0
          %s233 = sshll.u32 %s3, 4
          %s234 = int_to_ptr.hbm [resolvable:$true] %s233
          %s235 = sshll.u32 [#allocation5], 4
          %s236 = int_to_ptr.vmem [resolvable:$true] %s235
          %241 = dma.hbm_to_vmem [thread:$0]  %s234, 4096, %s236, [#allocation6], 64, 64, 4
        $region24: #{decoder_layer.5} parent=11 // pred_fallthru
          _
        // Predicated region
        $region25: #{decoder_layer.5} parent=11 // pred_check
          %p242 = pneg %p128
        $region26: #{decoder_layer.5} parent=11 // pred_check_branch
          %244 = sbr.rel (%p242) target = $region28
        $region27: #{decoder_layer.5} parent=11 // pred_region
          %246 = vsyncadd [#allocation6], 0
          %s248 = sshll.u32 %s4, 4
          %s249 = int_to_ptr.hbm [resolvable:$true] %s248
          %s250 = sshll.u32 [#allocation7], 4
          %s251 = int_to_ptr.vmem [resolvable:$true] %s250
          %253 = dma.hbm_to_vmem [thread:$0]  %s249, 16, %s251, [#allocation6]
        $region28: #{decoder_layer.5} parent=11 // pred_fallthru
          _
        // Predicated region
        $region29: #{decoder_layer.5} parent=11 // pred_check
          %p254 = pneg %p149
        $region30: #{decoder_layer.5} parent=11 // pred_check_branch
          %256 = sbr.rel (%p254) target = $region32
        $region31: #{decoder_layer.5} parent=11 // pred_region
          _
        $region32: #{decoder_layer.5} parent=11 // pred_fallthru
          _
        // Predicated region
        $region33: #{decoder_layer.5} parent=11 // pred_check
          %p257 = pneg %p170
        $region34: #{decoder_layer.5} parent=11 // pred_check_branch
          %259 = sbr.rel (%p257) target = $region36
        $region35: #{decoder_layer.5} parent=11 // pred_region
          _
        $region36: #{decoder_layer.5} parent=11 // pred_fallthru
          _
      $region12: #{decoder_layer.5} parent=5 // pred_fallthru
        _
      %p260 = scmp.lt.s32.totalorder %s18, 2
      // Predicated region
      $region37: #{decoder_layer.5} parent=5 // pred_check
        %p261 = pneg %p260
      $region38: #{decoder_layer.5} parent=5 // pred_check_branch
        %263 = sbr.rel (%p261) target = $region40
      $region39: #{decoder_layer.5} parent=5 // pred_region
        // Predicated region
        $region41: #{decoder_layer.5} parent=39 // pred_check
          %p264 = pneg %p38
        $region42: #{decoder_layer.5} parent=39 // pred_check_branch
          %266 = sbr.rel (%p264) target = $region44
        $region43: #{decoder_layer.5} parent=39 // pred_region
          %s267 = smul.u32 2, %s18
          %p268 = scmp.lt.s32.totalorder %s267, 3
          %s269 = scalar_select %p268, %s267, 3
          %s270 = smul.addr %s269, 8
          %s271 = scalar_lea.vmem %s0, %s270
          %s272 = smul.u32 2, %s18
        $region44: #{decoder_layer.5} parent=39 // pred_fallthru
          _
      $region40: #{decoder_layer.5} parent=5 // pred_fallthru
        _
      %p273 = scmp.le.s32.totalorder 1, %s18
      %p274 = scmp.lt.s32.totalorder %s18, 3
      %p275 = pnand %p273, %p274
      %p276 = pneg %p275
      // Predicated region
      $region45: #{decoder_layer.5} parent=5 // pred_check
        _
      $region46: #{decoder_layer.5} parent=5 // pred_check_branch
        %278 = sbr.rel (%p275) target = $region48
      $region47: #{decoder_layer.5} parent=5 // pred_region
        %s279 = ssub.s32 %s18, 1
        // Predicated region
        $region49: #{decoder_layer.5} parent=47 // pred_check
          %p280 = pneg %p65
        $region50: #{decoder_layer.5} parent=47 // pred_check_branch
          %282 = sbr.rel (%p280) target = $region52
        $region51: #{decoder_layer.5} parent=47 // pred_region
          %284 = dma.done [#allocation3], 4096
        $region52: #{decoder_layer.5} parent=47 // pred_fallthru
          _
        // Predicated region
        $region53: #{decoder_layer.5} parent=47 // pred_check
          %p285 = pneg %p107
        $region54: #{decoder_layer.5} parent=47 // pred_check_branch
          %287 = sbr.rel (%p285) target = $region56
        $region55: #{decoder_layer.5} parent=47 // pred_region
          %289 = dma.done [#allocation6], 4096
        $region56: #{decoder_layer.5} parent=47 // pred_fallthru
          _
        // Predicated region
        $region57: #{decoder_layer.5} parent=47 // pred_check
          %p290 = pneg %p128
        $region58: #{decoder_layer.5} parent=47 // pred_check_branch
          %292 = sbr.rel (%p290) target = $region60
        $region59: #{decoder_layer.5} parent=47 // pred_region
          %294 = dma.done [#allocation6], 16
        $region60: #{decoder_layer.5} parent=47 // pred_fallthru
          _
        %s295 = smul.u32 2, %s23
        %p296 = scmp.lt.s32.totalorder %s295, 3
        %s297 = scalar_select %p296, %s295, 3
        %s298 = smul.addr %s297, 8
        %s299 = scalar_lea.vmem %s0, %s298
        %p300 = pneg %p44
        %p301 = pneg %p41
        %p302 = pneg %p65
        %p303 = pneg %p62
        %p304 = pneg %p86
        %p305 = pneg %p83
        %p306 = pneg %p107
        %p307 = pneg %p104
        %p308 = pneg %p128
        %p309 = pneg %p125
        %p310 = pneg %p149
        %p311 = pneg %p146
        %p312 = pneg %p170
        %p313 = pneg %p167
        %p314 = pneg %p196
        %p315 = pneg %p193
        %s316 = sand.u32 %s183, 1
        %s317 = scalar_lea.sflag [#allocation4], %s316
        %s318 = sand.u32 %s183, 1
        %s319 = smul.addr %s318, 16
        %s320 = scalar_lea.vmem [#allocation8], %s319
        %s321 = smul.u32 2, %s23
        %p322 = scmp.lt.s32.totalorder %s321, 3
        %s323 = scalar_select %p322, %s321, 3
        %s324 = smul.addr %s323, 8
        %s325 = scalar_lea.vmem %s0, %s324
        %s326 = smul.u32 2, %s23
        %s327 = smul.u32 2, %s23
        %v328 = vld [vmem:[%s325] sm:$0xff]
        %v329 = vld [vmem:[%s325 + $0x8] sm:$0xff]
        %v330 = vld [vmem:[%s5] sm:$0x1]
        %v331 = vld [vmem:[%s6] sm:$0x1]
        %332 = vadd.xlane.f32.xlu0 %v328
        %v333 = vpop.xlane.xlu0 %332
        %334 = vadd.xlane.f32.xlu0 %v329
        %v335 = vpop.xlane.xlu0 %334
        %v336 = vrcp.pop 128.0
        %v337 = vmul.f32 128.0, %v336
        %v338 = vsub.f32 1.0, %v337
        %v339 = vmul.f32 %v336, %v338
        %v340 = vadd.f32 %v336, %v339
        %vm341 = vweird.f32 %v336
        %v342 = vsel %vm341, %v336, %v340
        %v343 = vmul.f32 %v333, %v342
        %v344 = vmul.f32 %v335, %v342
        %v345 = vsub.f32 %v328, %v343
        %v346 = vsub.f32 %v329, %v344
        %v347 = vmul.f32 %v345, %v345
        %v348 = vmul.f32 %v346, %v346
        %349 = vadd.xlane.f32.xlu0 %v347
        %v350 = vpop.xlane.xlu0 %349
        %351 = vadd.xlane.f32.xlu0 %v348
        %v352 = vpop.xlane.xlu0 %351
        %v353 = vmul.f32 %v350, 0.007874016
        %v354 = vmul.f32 %v352, 0.007874016
        %v355 = vrsqrt.pop %v353
        %v356 = vmul.f32 %v355, %v353
        %v357 = vmul.f32 %v356, %v355
        %v358 = vmul.f32 0.5, %v357
        %v359 = vsub.f32 1.5, %v358
        %v360 = vmul.f32 %v355, %v359
        %v361 = vmul.f32 %v353, %v360
        %vm362 = vcmp.eq.f32.partialorder %v353, inf
        %v363 = vsel %vm362, %v353, %v361
        %vm364 = vcmp.eq.f32.partialorder %v353, 0.0
        %v365 = vand.u32 %v353, 2147483648
        %v366 = vsel %vm364, %v365, %v363
        %v367 = vrsqrt.pop %v354
        %v368 = vmul.f32 %v367, %v354
        %v369 = vmul.f32 %v368, %v367
        %v370 = vmul.f32 0.5, %v369
        %v371 = vsub.f32 1.5, %v370
        %v372 = vmul.f32 %v367, %v371
        %v373 = vmul.f32 %v354, %v372
        %vm374 = vcmp.eq.f32.partialorder %v354, inf
        %v375 = vsel %vm374, %v354, %v373
        %vm376 = vcmp.eq.f32.partialorder %v354, 0.0
        %v377 = vand.u32 %v354, 2147483648
        %v378 = vsel %vm376, %v377, %v375
        %v379 = vadd.f32 %v366, 1e-06
        %v380 = vadd.f32 %v378, 1e-06
        %v381 = vrcp.pop %v379
        %v382 = vmul.f32 %v379, %v381
        %v383 = vsub.f32 1.0, %v382
        %v384 = vmul.f32 %v381, %v383
        %v385 = vadd.f32 %v381, %v384
        %vm386 = vweird.f32 %v379
        %vm387 = vweird.f32 %v381
        %vm388 = vmor %vm386, %vm387
        %v389 = vsel %vm388, %v381, %v385
        %v390 = vand.u32 2147483647, %v379
        %vm391 = vcmp.eq.f32.partialorder %v390, 8.507059e+37
        %v392 = vand.u32 %v379, 2147483648
        %v393 = vor.u32 1.1754944e-38, %v392
        %v394 = vsel %vm391, %v393, %v389
        %v395 = vmul.f32 %v345, %v394
        %v396 = vrcp.pop %v380
        %v397 = vmul.f32 %v380, %v396
        %v398 = vsub.f32 1.0, %v397
        %v399 = vmul.f32 %v396, %v398
        %v400 = vadd.f32 %v396, %v399
        %vm401 = vweird.f32 %v380
        %vm402 = vweird.f32 %v396
        %vm403 = vmor %vm401, %vm402
        %v404 = vsel %vm403, %v396, %v400
        %v405 = vand.u32 2147483647, %v380
        %vm406 = vcmp.eq.f32.partialorder %v405, 8.507059e+37
        %v407 = vand.u32 %v380, 2147483648
        %v408 = vor.u32 1.1754944e-38, %v407
        %v409 = vsel %vm406, %v408, %v404
        %v410 = vmul.f32 %v346, %v409
        %v412 = vperm.slane %v330, 0
        %v414 = vmul.f32 %v412, %v395
        %v415 = vmul.f32 %v412, %v410
        %v417 = vperm.slane %v331, 0
        %v419 = vadd.f32 %v414, %v417
        %v420 = vadd.f32 %v415, %v417
        %v421 = vpack.c.bf16 %v420, %v419
        %v422 = vld [vmem:[#allocation2] sm:$0xff]
        %v423 = vld [vmem:[#allocation2 + $0x8] sm:$0xff]
        %v424 = vld [vmem:[#allocation2 + $0x10] sm:$0xff]
        %v425 = vld [vmem:[#allocation2 + $0x18] sm:$0xff]
        %v426 = vld [vmem:[#allocation2 + $0x20] sm:$0xff]
        %v427 = vld [vmem:[#allocation2 + $0x28] sm:$0xff]
        %v428 = vld [vmem:[#allocation2 + $0x30] sm:$0xff]
        %v429 = vld [vmem:[#allocation2 + $0x38] sm:$0xff]
        %v430 = vld [vmem:[#allocation2 + $0x40] sm:$0xff]
        %v431 = vld [vmem:[#allocation2 + $0x48] sm:$0xff]
        %v432 = vld [vmem:[#allocation2 + $0x50] sm:$0xff]
        %v433 = vld [vmem:[#allocation2 + $0x58] sm:$0xff]
        %v434 = vld [vmem:[#allocation2 + $0x60] sm:$0xff]
        %v435 = vld [vmem:[#allocation2 + $0x68] sm:$0xff]
        %v436 = vld [vmem:[#allocation2 + $0x70] sm:$0xff]
        %v437 = vld [vmem:[#allocation2 + $0x78] sm:$0xff]
        %v438 = vld [vmem:[#allocation2 + $0x80] sm:$0xff]
        %v439 = vld [vmem:[#allocation2 + $0x88] sm:$0xff]
        %v440 = vld [vmem:[#allocation2 + $0x90] sm:$0xff]
        %v441 = vld [vmem:[#allocation2 + $0x98] sm:$0xff]
        %v442 = vld [vmem:[#allocation2 + $0xa0] sm:$0xff]
        %v443 = vld [vmem:[#allocation2 + $0xa8] sm:$0xff]
        %v444 = vld [vmem:[#allocation2 + $0xb0] sm:$0xff]
        %v445 = vld [vmem:[#allocation2 + $0xb8] sm:$0xff]
        %v446 = vld [vmem:[#allocation2 + $0xc0] sm:$0xff]
        %v447 = vld [vmem:[#allocation2 + $0xc8] sm:$0xff]
        %v448 = vld [vmem:[#allocation2 + $0xd0] sm:$0xff]
        %v449 = vld [vmem:[#allocation2 + $0xd8] sm:$0xff]
        %v450 = vld [vmem:[#allocation2 + $0xe0] sm:$0xff]
        %v451 = vld [vmem:[#allocation2 + $0xe8] sm:$0xff]
        %v452 = vld [vmem:[#allocation2 + $0xf0] sm:$0xff]
        %v453 = vld [vmem:[#allocation2 + $0xf8] sm:$0xff]
        %v454 = vld [vmem:[%s2] sm:$0xf]
        %v456 = vperm.slane %v454, 0
        %v457 = vperm.slane %v454, 1
        %v458 = vperm.slane %v454, 2
        %v459 = vperm.slane %v454, 3
        %v496 = vunpack.c.l.b16 %v422
        %v497 = vunpack.c.h.b16 %v422
        %v498 = vunpack.c.l.b16 %v423
        %v499 = vunpack.c.h.b16 %v423
        %v500 = vunpack.c.l.b16 %v424
        %v501 = vunpack.c.h.b16 %v424
        %v502 = vunpack.c.l.b16 %v425
        %v503 = vunpack.c.h.b16 %v425
        %v504 = vunpack.c.l.b16 %v426
        %v505 = vunpack.c.h.b16 %v426
        %v506 = vunpack.c.l.b16 %v427
        %v507 = vunpack.c.h.b16 %v427
        %v508 = vunpack.c.l.b16 %v428
        %v509 = vunpack.c.h.b16 %v428
        %v510 = vunpack.c.l.b16 %v429
        %v511 = vunpack.c.h.b16 %v429
        %v512 = vunpack.c.l.b16 %v430
        %v513 = vunpack.c.h.b16 %v430
        %v514 = vunpack.c.l.b16 %v431
        %v515 = vunpack.c.h.b16 %v431
        %v516 = vunpack.c.l.b16 %v432
        %v517 = vunpack.c.h.b16 %v432
        %v518 = vunpack.c.l.b16 %v433
        %v519 = vunpack.c.h.b16 %v433
        %v520 = vunpack.c.l.b16 %v434
        %v521 = vunpack.c.h.b16 %v434
        %v522 = vunpack.c.l.b16 %v435
        %v523 = vunpack.c.h.b16 %v435
        %v524 = vunpack.c.l.b16 %v436
        %v525 = vunpack.c.h.b16 %v436
        %v526 = vunpack.c.l.b16 %v437
        %v527 = vunpack.c.h.b16 %v437
        %v528 = vunpack.c.l.b16 %v438
        %v529 = vunpack.c.h.b16 %v438
        %v530 = vunpack.c.l.b16 %v439
        %v531 = vunpack.c.h.b16 %v439
        %v532 = vunpack.c.l.b16 %v440
        %v533 = vunpack.c.h.b16 %v440
        %v534 = vunpack.c.l.b16 %v441
        %v535 = vunpack.c.h.b16 %v441
        %v536 = vunpack.c.l.b16 %v442
        %v537 = vunpack.c.h.b16 %v442
        %v538 = vunpack.c.l.b16 %v443
        %v539 = vunpack.c.h.b16 %v443
        %v540 = vunpack.c.l.b16 %v444
        %v541 = vunpack.c.h.b16 %v444
        %v542 = vunpack.c.l.b16 %v445
        %v543 = vunpack.c.h.b16 %v445
        %v544 = vunpack.c.l.b16 %v446
        %v545 = vunpack.c.h.b16 %v446
        %v546 = vunpack.c.l.b16 %v447
        %v547 = vunpack.c.h.b16 %v447
        %v548 = vunpack.c.l.b16 %v448
        %v549 = vunpack.c.h.b16 %v448
        %v550 = vunpack.c.l.b16 %v449
        %v551 = vunpack.c.h.b16 %v449
        %v552 = vunpack.c.l.b16 %v450
        %v553 = vunpack.c.h.b16 %v450
        %v554 = vunpack.c.l.b16 %v451
        %v555 = vunpack.c.h.b16 %v451
        %v556 = vunpack.c.l.b16 %v452
        %v557 = vunpack.c.h.b16 %v452
        %v558 = vunpack.c.l.b16 %v453
        %v559 = vunpack.c.h.b16 %v453
        %v560 = vpack.c.b16 %v500, %v496
        %v561 = vpack.c.b16 %v501, %v497
        %v562 = vpack.c.b16 %v502, %v498
        %v563 = vpack.c.b16 %v503, %v499
        %v564 = vpack.c.b16 %v508, %v504
        %v565 = vpack.c.b16 %v509, %v505
        %v566 = vpack.c.b16 %v510, %v506
        %v567 = vpack.c.b16 %v511, %v507
        %v568 = vpack.c.b16 %v516, %v512
        %v569 = vpack.c.b16 %v517, %v513
        %v570 = vpack.c.b16 %v518, %v514
        %v571 = vpack.c.b16 %v519, %v515
        %v572 = vpack.c.b16 %v524, %v520
        %v573 = vpack.c.b16 %v525, %v521
        %v574 = vpack.c.b16 %v526, %v522
        %v575 = vpack.c.b16 %v527, %v523
        %v576 = vpack.c.b16 %v532, %v528
        %v577 = vpack.c.b16 %v533, %v529
        %v578 = vpack.c.b16 %v534, %v530
        %v579 = vpack.c.b16 %v535, %v531
        %v580 = vpack.c.b16 %v540, %v536
        %v581 = vpack.c.b16 %v541, %v537
        %v582 = vpack.c.b16 %v542, %v538
        %v583 = vpack.c.b16 %v543, %v539
        %v584 = vpack.c.b16 %v548, %v544
        %v585 = vpack.c.b16 %v549, %v545
        %v586 = vpack.c.b16 %v550, %v546
        %v587 = vpack.c.b16 %v551, %v547
        %v588 = vpack.c.b16 %v556, %v552
        %v589 = vpack.c.b16 %v557, %v553
        %v590 = vpack.c.b16 %v558, %v554
        %v591 = vpack.c.b16 %v559, %v555
        %624 = vmatpush.bf16.msra.mxu0 %v588
        %625 = vmatpush.bf16.msra.mxu0 %v584
        %626 = vmatpush.bf16.msra.mxu0 %v580
        %627 = vmatpush.bf16.msra.mxu0 %v576
        %628 = vmatpush.bf16.msra.mxu0 %v572
        %629 = vmatpush.bf16.msra.mxu0 %v568
        %630 = vmatpush.bf16.msra.mxu0 %v564
        %631 = vmatpush.bf16.msra.mxu0 %v560
        %632 = vmatmul.bf16.gmra.mxu0 %v421
        %v633 = vpop.f32.mrf.mxu0
        %v634 = vadd.f32 %v456, %v633
        %v635 = vpop.f32.mrf.mxu0
        %v636 = vadd.f32 %v456, %v635
        %637 = vdwg.mxu0
        %638 = vmatpush.bf16.msra.mxu0 %v589
        %639 = vmatpush.bf16.msra.mxu0 %v585
        %640 = vmatpush.bf16.msra.mxu0 %v581
        %641 = vmatpush.bf16.msra.mxu0 %v577
        %642 = vmatpush.bf16.msra.mxu0 %v573
        %643 = vmatpush.bf16.msra.mxu0 %v569
        %644 = vmatpush.bf16.msra.mxu0 %v565
        %645 = vmatpush.bf16.msra.mxu0 %v561
        %646 = vmatmul.bf16.gmra.mxu0 %v421
        %v647 = vpop.f32.mrf.mxu0
        %v648 = vadd.f32 %v457, %v647
        %v649 = vpop.f32.mrf.mxu0
        %v650 = vadd.f32 %v457, %v649
        %651 = vdwg.mxu0
        %652 = vmatpush.bf16.msra.mxu0 %v590
        %653 = vmatpush.bf16.msra.mxu0 %v586
        %654 = vmatpush.bf16.msra.mxu0 %v582
        %655 = vmatpush.bf16.msra.mxu0 %v578
        %656 = vmatpush.bf16.msra.mxu0 %v574
        %657 = vmatpush.bf16.msra.mxu0 %v570
        %658 = vmatpush.bf16.msra.mxu0 %v566
        %659 = vmatpush.bf16.msra.mxu0 %v562
        %660 = vmatmul.bf16.gmra.mxu0 %v421
        %v661 = vpop.f32.mrf.mxu0
        %v662 = vadd.f32 %v458, %v661
        %v663 = vpop.f32.mrf.mxu0
        %v664 = vadd.f32 %v458, %v663
        %665 = vdwg.mxu0
        %666 = vmatpush.bf16.msra.mxu0 %v591
        %667 = vmatpush.bf16.msra.mxu0 %v587
        %668 = vmatpush.bf16.msra.mxu0 %v583
        %669 = vmatpush.bf16.msra.mxu0 %v579
        %670 = vmatpush.bf16.msra.mxu0 %v575
        %671 = vmatpush.bf16.msra.mxu0 %v571
        %672 = vmatpush.bf16.msra.mxu0 %v567
        %673 = vmatpush.bf16.msra.mxu0 %v563
        %674 = vmatmul.bf16.gmra.mxu0 %v421
        %v675 = vpop.f32.mrf.mxu0
        %v676 = vadd.f32 %v459, %v675
        %v677 = vpop.f32.mrf.mxu0
        %v678 = vadd.f32 %v459, %v677
        %679 = vdwg.mxu0
        %v680 = vmax.f32 %v634, 0.0
        %v681 = vmax.f32 %v648, 0.0
        %v682 = vmax.f32 %v662, 0.0
        %v683 = vmax.f32 %v676, 0.0
        %v684 = vmax.f32 %v636, 0.0
        %v685 = vmax.f32 %v650, 0.0
        %v686 = vmax.f32 %v664, 0.0
        %v687 = vmax.f32 %v678, 0.0
        %v688 = vpack.c.bf16 %v684, %v680
        %v689 = vpack.c.bf16 %v685, %v681
        %v690 = vpack.c.bf16 %v686, %v682
        %v691 = vpack.c.bf16 %v687, %v683
        %v692 = vld [vmem:[#allocation5] sm:$0xf]
        %v693 = vld [vmem:[#allocation5 + $0x4] sm:$0xf]
        %v694 = vld [vmem:[#allocation5 + $0x8] sm:$0xf]
        %v695 = vld [vmem:[#allocation5 + $0xc] sm:$0xf]
        %v696 = vld [vmem:[#allocation5 + $0x10] sm:$0xf]
        %v697 = vld [vmem:[#allocation5 + $0x14] sm:$0xf]
        %v698 = vld [vmem:[#allocation5 + $0x18] sm:$0xf]
        %v699 = vld [vmem:[#allocation5 + $0x1c] sm:$0xf]
        %v700 = vld [vmem:[#allocation5 + $0x20] sm:$0xf]
        %v701 = vld [vmem:[#allocation5 + $0x24] sm:$0xf]
        %v702 = vld [vmem:[#allocation5 + $0x28] sm:$0xf]
        %v703 = vld [vmem:[#allocation5 + $0x2c] sm:$0xf]
        %v704 = vld [vmem:[#allocation5 + $0x30] sm:$0xf]
        %v705 = vld [vmem:[#allocation5 + $0x34] sm:$0xf]
        %v706 = vld [vmem:[#allocation5 + $0x38] sm:$0xf]
        %v707 = vld [vmem:[#allocation5 + $0x3c] sm:$0xf]
        %v708 = vld [vmem:[#allocation5 + $0x40] sm:$0xf]
        %v709 = vld [vmem:[#allocation5 + $0x44] sm:$0xf]
        %v710 = vld [vmem:[#allocation5 + $0x48] sm:$0xf]
        %v711 = vld [vmem:[#allocation5 + $0x4c] sm:$0xf]
        %v712 = vld [vmem:[#allocation5 + $0x50] sm:$0xf]
        %v713 = vld [vmem:[#allocation5 + $0x54] sm:$0xf]
        %v714 = vld [vmem:[#allocation5 + $0x58] sm:$0xf]
        %v715 = vld [vmem:[#allocation5 + $0x5c] sm:$0xf]
        %v716 = vld [vmem:[#allocation5 + $0x60] sm:$0xf]
        %v717 = vld [vmem:[#allocation5 + $0x64] sm:$0xf]
        %v718 = vld [vmem:[#allocation5 + $0x68] sm:$0xf]
        %v719 = vld [vmem:[#allocation5 + $0x6c] sm:$0xf]
        %v720 = vld [vmem:[#allocation5 + $0x70] sm:$0xf]
        %v721 = vld [vmem:[#allocation5 + $0x74] sm:$0xf]
        %v722 = vld [vmem:[#allocation5 + $0x78] sm:$0xf]
        %v723 = vld [vmem:[#allocation5 + $0x7c] sm:$0xf]
        %v724 = vld [vmem:[#allocation5 + $0x80] sm:$0xf]
        %v725 = vld [vmem:[#allocation5 + $0x84] sm:$0xf]
        %v726 = vld [vmem:[#allocation5 + $0x88] sm:$0xf]
        %v727 = vld [vmem:[#allocation5 + $0x8c] sm:$0xf]
        %v728 = vld [vmem:[#allocation5 + $0x90] sm:$0xf]
        %v729 = vld [vmem:[#allocation5 + $0x94] sm:$0xf]
        %v730 = vld [vmem:[#allocation5 + $0x98] sm:$0xf]
        %v731 = vld [vmem:[#allocation5 + $0x9c] sm:$0xf]
        %v732 = vld [vmem:[#allocation5 + $0xa0] sm:$0xf]
        %v733 = vld [vmem:[#allocation5 + $0xa4] sm:$0xf]
        %v734 = vld [vmem:[#allocation5 + $0xa8] sm:$0xf]
        %v735 = vld [vmem:[#allocation5 + $0xac] sm:$0xf]
        %v736 = vld [vmem:[#allocation5 + $0xb0] sm:$0xf]
        %v737 = vld [vmem:[#allocation5 + $0xb4] sm:$0xf]
        %v738 = vld [vmem:[#allocation5 + $0xb8] sm:$0xf]
        %v739 = vld [vmem:[#allocation5 + $0xbc] sm:$0xf]
        %v740 = vld [vmem:[#allocation5 + $0xc0] sm:$0xf]
        %v741 = vld [vmem:[#allocation5 + $0xc4] sm:$0xf]
        %v742 = vld [vmem:[#allocation5 + $0xc8] sm:$0xf]
        %v743 = vld [vmem:[#allocation5 + $0xcc] sm:$0xf]
        %v744 = vld [vmem:[#allocation5 + $0xd0] sm:$0xf]
        %v745 = vld [vmem:[#allocation5 + $0xd4] sm:$0xf]
        %v746 = vld [vmem:[#allocation5 + $0xd8] sm:$0xf]
        %v747 = vld [vmem:[#allocation5 + $0xdc] sm:$0xf]
        %v748 = vld [vmem:[#allocation5 + $0xe0] sm:$0xf]
        %v749 = vld [vmem:[#allocation5 + $0xe4] sm:$0xf]
        %v750 = vld [vmem:[#allocation5 + $0xe8] sm:$0xf]
        %v751 = vld [vmem:[#allocation5 + $0xec] sm:$0xf]
        %v752 = vld [vmem:[#allocation5 + $0xf0] sm:$0xf]
        %v753 = vld [vmem:[#allocation5 + $0xf4] sm:$0xf]
        %v754 = vld [vmem:[#allocation5 + $0xf8] sm:$0xf]
        %v755 = vld [vmem:[#allocation5 + $0xfc] sm:$0xf]
        %v756 = vld [vmem:[#allocation7] sm:$0x1]
        %v758 = vperm.slane %v756, 0
        %v824 = vunpack.c.l.b16 %v692
        %v825 = vunpack.c.l.b16 %v693
        %v826 = vunpack.c.l.b16 %v694
        %v827 = vunpack.c.l.b16 %v695
        %v828 = vunpack.c.l.b16 %v696
        %v829 = vunpack.c.l.b16 %v697
        %v830 = vunpack.c.l.b16 %v698
        %v831 = vunpack.c.l.b16 %v699
        %v832 = vunpack.c.l.b16 %v700
        %v833 = vunpack.c.l.b16 %v701
        %v834 = vunpack.c.l.b16 %v702
        %v835 = vunpack.c.l.b16 %v703
        %v836 = vunpack.c.l.b16 %v704
        %v837 = vunpack.c.l.b16 %v705
        %v838 = vunpack.c.l.b16 %v706
        %v839 = vunpack.c.l.b16 %v707
        %v840 = vunpack.c.l.b16 %v708
        %v841 = vunpack.c.l.b16 %v709
        %v842 = vunpack.c.l.b16 %v710
        %v843 = vunpack.c.l.b16 %v711
        %v844 = vunpack.c.l.b16 %v712
        %v845 = vunpack.c.l.b16 %v713
        %v846 = vunpack.c.l.b16 %v714
        %v847 = vunpack.c.l.b16 %v715
        %v848 = vunpack.c.l.b16 %v716
        %v849 = vunpack.c.l.b16 %v717
        %v850 = vunpack.c.l.b16 %v718
        %v851 = vunpack.c.l.b16 %v719
        %v852 = vunpack.c.l.b16 %v720
        %v853 = vunpack.c.l.b16 %v721
        %v854 = vunpack.c.l.b16 %v722
        %v855 = vunpack.c.l.b16 %v723
        %v856 = vunpack.c.l.b16 %v724
        %v857 = vunpack.c.l.b16 %v725
        %v858 = vunpack.c.l.b16 %v726
        %v859 = vunpack.c.l.b16 %v727
        %v860 = vunpack.c.l.b16 %v728
        %v861 = vunpack.c.l.b16 %v729
        %v862 = vunpack.c.l.b16 %v730
        %v863 = vunpack.c.l.b16 %v731
        %v864 = vunpack.c.l.b16 %v732
        %v865 = vunpack.c.l.b16 %v733
        %v866 = vunpack.c.l.b16 %v734
        %v867 = vunpack.c.l.b16 %v735
        %v868 = vunpack.c.l.b16 %v736
        %v869 = vunpack.c.l.b16 %v737
        %v870 = vunpack.c.l.b16 %v738
        %v871 = vunpack.c.l.b16 %v739
        %v872 = vunpack.c.l.b16 %v740
        %v873 = vunpack.c.l.b16 %v741
        %v874 = vunpack.c.l.b16 %v742
        %v875 = vunpack.c.l.b16 %v743
        %v876 = vunpack.c.l.b16 %v744
        %v877 = vunpack.c.l.b16 %v745
        %v878 = vunpack.c.l.b16 %v746
        %v879 = vunpack.c.l.b16 %v747
        %v880 = vunpack.c.l.b16 %v748
        %v881 = vunpack.c.l.b16 %v749
        %v882 = vunpack.c.l.b16 %v750
        %v883 = vunpack.c.l.b16 %v751
        %v884 = vunpack.c.l.b16 %v752
        %v885 = vunpack.c.l.b16 %v753
        %v886 = vunpack.c.l.b16 %v754
        %v887 = vunpack.c.l.b16 %v755
        %v888 = vpack.c.b16 %v825, %v824
        %v889 = vpack.c.b16 %v827, %v826
        %v890 = vpack.c.b16 %v829, %v828
        %v891 = vpack.c.b16 %v831, %v830
        %v892 = vpack.c.b16 %v833, %v832
        %v893 = vpack.c.b16 %v835, %v834
        %v894 = vpack.c.b16 %v837, %v836
        %v895 = vpack.c.b16 %v839, %v838
        %v896 = vpack.c.b16 %v841, %v840
        %v897 = vpack.c.b16 %v843, %v842
        %v898 = vpack.c.b16 %v845, %v844
        %v899 = vpack.c.b16 %v847, %v846
        %v900 = vpack.c.b16 %v849, %v848
        %v901 = vpack.c.b16 %v851, %v850
        %v902 = vpack.c.b16 %v853, %v852
        %v903 = vpack.c.b16 %v855, %v854
        %v904 = vpack.c.b16 %v857, %v856
        %v905 = vpack.c.b16 %v859, %v858
        %v906 = vpack.c.b16 %v861, %v860
        %v907 = vpack.c.b16 %v863, %v862
        %v908 = vpack.c.b16 %v865, %v864
        %v909 = vpack.c.b16 %v867, %v866
        %v910 = vpack.c.b16 %v869, %v868
        %v911 = vpack.c.b16 %v871, %v870
        %v912 = vpack.c.b16 %v873, %v872
        %v913 = vpack.c.b16 %v875, %v874
        %v914 = vpack.c.b16 %v877, %v876
        %v915 = vpack.c.b16 %v879, %v878
        %v916 = vpack.c.b16 %v881, %v880
        %v917 = vpack.c.b16 %v883, %v882
        %v918 = vpack.c.b16 %v885, %v884
        %v919 = vpack.c.b16 %v887, %v886
        %952 = vmatpush.bf16.msra.mxu0 %v895
        %953 = vmatpush.bf16.msra.mxu0 %v894
        %954 = vmatpush.bf16.msra.mxu0 %v893
        %955 = vmatpush.bf16.msra.mxu0 %v892
        %956 = vmatpush.bf16.msra.mxu0 %v891
        %957 = vmatpush.bf16.msra.mxu0 %v890
        %958 = vmatpush.bf16.msra.mxu0 %v889
        %959 = vmatpush.bf16.msra.mxu0 %v888
        %960 = vmatmul.bf16.gmra.mxu0 %v688
        %v961 = vpop.f32.mrf.mxu0
        %v962 = vadd.f32 %v758, %v961
        %v963 = vpop.f32.mrf.mxu0
        %v964 = vadd.f32 %v758, %v963
        %965 = vdwg.mxu0
        %966 = vmatpush.bf16.msra.mxu0 %v903
        %967 = vmatpush.bf16.msra.mxu0 %v902
        %968 = vmatpush.bf16.msra.mxu0 %v901
        %969 = vmatpush.bf16.msra.mxu0 %v900
        %970 = vmatpush.bf16.msra.mxu0 %v899
        %971 = vmatpush.bf16.msra.mxu0 %v898
        %972 = vmatpush.bf16.msra.mxu0 %v897
        %973 = vmatpush.bf16.msra.mxu0 %v896
        %974 = vmatmul.bf16.gmra.mxu0 %v689
        %v975 = vpop.f32.mrf.mxu0
        %v976 = vadd.f32 %v962, %v975
        %v977 = vpop.f32.mrf.mxu0
        %v978 = vadd.f32 %v964, %v977
        %979 = vdwg.mxu0
        %980 = vmatpush.bf16.msra.mxu0 %v911
        %981 = vmatpush.bf16.msra.mxu0 %v910
        %982 = vmatpush.bf16.msra.mxu0 %v909
        %983 = vmatpush.bf16.msra.mxu0 %v908
        %984 = vmatpush.bf16.msra.mxu0 %v907
        %985 = vmatpush.bf16.msra.mxu0 %v906
        %986 = vmatpush.bf16.msra.mxu0 %v905
        %987 = vmatpush.bf16.msra.mxu0 %v904
        %988 = vmatmul.bf16.gmra.mxu0 %v690
        %v989 = vpop.f32.mrf.mxu0
        %v990 = vadd.f32 %v976, %v989
        %v991 = vpop.f32.mrf.mxu0
        %v992 = vadd.f32 %v978, %v991
        %993 = vdwg.mxu0
        %994 = vmatpush.bf16.msra.mxu0 %v919
        %995 = vmatpush.bf16.msra.mxu0 %v918
        %996 = vmatpush.bf16.msra.mxu0 %v917
        %997 = vmatpush.bf16.msra.mxu0 %v916
        %998 = vmatpush.bf16.msra.mxu0 %v915
        %999 = vmatpush.bf16.msra.mxu0 %v914
        %1000 = vmatpush.bf16.msra.mxu0 %v913
        %1001 = vmatpush.bf16.msra.mxu0 %v912
        %1002 = vmatmul.bf16.gmra.mxu0 %v691
        %v1003 = vpop.f32.mrf.mxu0
        %v1004 = vadd.f32 %v990, %v1003
        %v1005 = vpop.f32.mrf.mxu0
        %v1006 = vadd.f32 %v992, %v1005
        %1007 = vdwg.mxu0
        %v1008 = vadd.f32 %v328, %v1004
        %v1009 = vadd.f32 %v329, %v1006
        %1010 = vst [vmem:[%s320] sm:$0xff] %v1008
        %1011 = vst [vmem:[%s320 + $0x8] sm:$0xff] %v1009
        %s1012 = sand.u32 %s183, 1
        %s1013 = scalar_lea.sflag [#allocation4], %s1012
        %s1014 = sand.u32 %s183, 1
        %s1015 = smul.addr %s1014, 16
        %s1016 = scalar_lea.vmem [#allocation8], %s1015
        // Predicated region
        $region61: #{decoder_layer.5} parent=47 // pred_check
          %p1017 = pneg %p193
        $region62: #{decoder_layer.5} parent=47 // pred_check_branch
          %1019 = sbr.rel (%p1017) target = $region64
        $region63: #{decoder_layer.5} parent=47 // pred_region
          %s1020 = smul.u32 2, %s23
          %1022 = vsyncadd %s1013, 0
          %s1023 = smul.addr %s1020, 8
          %s1024 = scalar_lea.hbm %s7, %s1023
          %s1025 = sshll.u32 %s1016, 4
          %s1026 = int_to_ptr.vmem [resolvable:$true] %s1025
          %s1027 = sshll.u32 %s1024, 4
          %s1028 = int_to_ptr.hbm [resolvable:$true] %s1027
          %1033 = dma.vmem_to_hbm [thread:$0]  %s1026, 256, %s1028, %s1013, 128, 128, 8
        $region64: #{decoder_layer.5} parent=47 // pred_fallthru
          _
      $region48: #{decoder_layer.5} parent=5 // pred_fallthru
        _
      %p1034 = scmp.le.s32.totalorder 2, %s18
      // Predicated region
      $region65: #{decoder_layer.5} parent=5 // pred_check
        %p1035 = pneg %p1034
      $region66: #{decoder_layer.5} parent=5 // pred_check_branch
        %1037 = sbr.rel (%p1035) target = $region68
      $region67: #{decoder_layer.5} parent=5 // pred_region
        %s1038 = ssub.s32 %s18, 2
        // Predicated region
        $region69: #{decoder_layer.5} parent=67 // pred_check
          %p1039 = pneg %p199
        $region70: #{decoder_layer.5} parent=67 // pred_check_branch
          %1041 = sbr.rel (%p1039) target = $region72
        $region71: #{decoder_layer.5} parent=67 // pred_region
          %s1042 = sand.u32 %s184, 1
          %s1043 = scalar_lea.sflag [#allocation4], %s1042
          %s1044 = sand.u32 %s184, 1
          %s1045 = smul.addr %s1044, 16
          %s1046 = scalar_lea.vmem [#allocation8], %s1045
          %1048 = dma.done %s1043, 256
        $region72: #{decoder_layer.5} parent=67 // pred_fallthru
          _
      $region68: #{decoder_layer.5} parent=5 // pred_fallthru
        _
    $region6: #{decoder_layer.5} parent=1 // loop_footer
      %s22 = sadd.s32 1, %s18
    $region7: #{decoder_layer.5} parent=1 // loop_footer_branch
      %17 = sbr.rel target = $region3
    $region8: #{decoder_layer.5} parent=1 // loop_exit
      _
    %1049 = vsyncpa [#allocation3], 1
    %s1050 = scalar_lea.sflag [#allocation3], 1
    %1051 = vsyncpa %s1050, 1
    %1052 = vsyncpa [#allocation6], 1
    %1053 = vsyncpa [#allocation4], 1
    %s1054 = scalar_lea.sflag [#allocation4], 1
    %1055 = vsyncpa %s1054, 1

// kernel: decoder_layer.4
$region0: #{decoder_layer.4}
  #allocation0 [shape = 'u32[]', space=smem, size = 0x4, offset = 0x4, fixed_abs, tag = 'smem constant byte address 0x4 - core index']
  #allocation1 [shape = 'u32[72,128]{1,0:T(1,128)}', space=vmem, size = 0x9000, scoped, tag = 'internal scratch']
  %s0 = inlined_call_operand.vmem [shape: f32[2,16,128], index: 0, kind: input, shape index: {}]
  %s1 = inlined_call_operand.hbm [shape: f32[2,16,128], index: 1, kind: input, shape index: {}]
  %s2 = inlined_call_operand.hbm [shape: f32[2,1,16], index: 2, kind: input, shape index: {}]
  %s3 = inlined_call_operand.hbm [shape: bf16[128,128], index: 3, kind: input, shape index: {}]
  %s4 = inlined_call_operand.vmem [shape: f32[1,128], index: 4, kind: input, shape index: {}]
  %s5 = inlined_call_operand.hbm [shape: bf16[128,256], index: 5, kind: input, shape index: {}]
  %s6 = inlined_call_operand.vmem [shape: f32[1,256], index: 6, kind: input, shape index: {}]
  %s7 = inlined_call_operand.hbm [shape: bf16[128,128], index: 7, kind: input, shape index: {}]
  %s8 = inlined_call_operand.vmem [shape: f32[1,128], index: 8, kind: input, shape index: {}]
  %s9 = inlined_call_operand.hbm [shape: f32[1,128], index: 9, kind: input, shape index: {}]
  %s10 = inlined_call_operand.hbm [shape: f32[1,128], index: 10, kind: input, shape index: {}]
  %s11 = inlined_call_operand.vmem [shape: f32[2,16,128], index: 11, kind: output, shape index: {}]
  %s12 = sld [smem:[#allocation0]]
  $region105: #{decoder_layer.4} parent=0
    _
  %s14 = ssub.s32 1, %s12
  %s15 = scalar_select 0, %s14, %s12
  $region1: #{decoder_layer.4} parent=0
    #allocation2 [shape = 'u8[16384]{0}', space=vmem, size = 0x4000, scoped, tag = 'input window, operand 1']
    #allocation3 [shape = 's32[2]{0}', space=sflag, size = 0x8, scoped, tag = 'scoped memory for decoder_layer.4']
    #allocation4 [shape = 'u8[1024]{0}', space=vmem, size = 0x400, scoped, tag = 'input window, operand 2']
    #allocation5 [shape = 's32[2]{0}', space=sflag, size = 0x8, scoped, tag = 'scoped memory for decoder_layer.4']
    #allocation6 [shape = 'u8[32768]{0}', space=vmem, size = 0x8000, scoped, tag = 'input window, operand 3, single buffered']
    #allocation7 [shape = 'u8[65536]{0}', space=vmem, size = 0x10000, scoped, tag = 'input window, operand 5, single buffered']
    #allocation8 [shape = 's32[1]{0}', space=sflag, size = 0x4, scoped, tag = 'scoped memory for decoder_layer.4']
    #allocation9 [shape = 'u8[32768]{0}', space=vmem, size = 0x8000, scoped, tag = 'input window, operand 7, single buffered']
    #allocation10 [shape = 'u8[512]{0}', space=vmem, size = 0x400, scoped, tag = 'input window, operand 9, single buffered']
    #allocation11 [shape = 's32[1]{0}', space=sflag, size = 0x4, scoped, tag = 'scoped memory for decoder_layer.4']
    #allocation12 [shape = 'u8[512]{0}', space=vmem, size = 0x400, scoped, tag = 'input window, operand 10, single buffered']
    %16 = vsyncpa [#allocation3], 0
    %s17 = scalar_lea.sflag [#allocation3], 1
    %18 = vsyncpa %s17, 0
    %19 = vsyncpa [#allocation5], 0
    %s20 = scalar_lea.sflag [#allocation5], 1
    %21 = vsyncpa %s20, 0
    %22 = vsyncpa [#allocation8], 0
    %23 = vsyncpa [#allocation11], 0
    loop: start=0, step=1, limit=4
    $region2: #{decoder_layer.4} parent=1 // loop_pre_header
      _
    $region3: #{decoder_layer.4} parent=1 // loop_header
      %s25 = sphi 0, %s29
      %p26 = scmp.ge.s32.totalorder %s25, 4
      %s35 = sphi 0, %s37
      %s38 = sphi 0, %s35
      %s39 = sphi 0, %s38
      %s55 = sphi 0, %s39
      %s61 = sphi 0, %s63
      %s64 = sphi 0, %s61
      %s65 = sphi 0, %s64
      %s81 = sphi 0, %s65
      %s87 = sphi 0, %s89
      %s90 = sphi 0, %s87
      %s91 = sphi 0, %s90
      %s107 = sphi 0, %s91
      %s111 = sphi 0, %s111
      %s113 = sphi 0, %s111
      %s114 = sphi 0, %s113
      %s128 = sphi 0, %s114
      %s132 = sphi 0, %s132
      %s134 = sphi 0, %s132
      %s135 = sphi 0, %s134
      %s149 = sphi 0, %s135
      %s153 = sphi 0, %s153
      %s155 = sphi 0, %s153
      %s156 = sphi 0, %s155
      %s170 = sphi 0, %s156
      %s174 = sphi 0, %s174
      %s176 = sphi 0, %s174
      %s177 = sphi 0, %s176
      %s191 = sphi 0, %s177
      %s195 = sphi 0, %s195
      %s197 = sphi 0, %s195
      %s198 = sphi 0, %s197
      %s212 = sphi 0, %s198
      %s216 = sphi 0, %s216
      %s218 = sphi 0, %s216
      %s219 = sphi 0, %s218
      %s233 = sphi 0, %s219
      %s237 = sphi 0, %s237
      %s239 = sphi 0, %s237
      %s240 = sphi 0, %s239
      %s254 = sphi 0, %s240
      %s258 = sphi 0, %s258
      %s260 = sphi 0, %s258
      %s261 = sphi 0, %s260
      %s275 = sphi 0, %s261
      %s281 = sphi 0, %s283
      %s284 = sphi 0, %s281
      %s285 = sphi 0, %s284
      %s301 = sphi 0, %s285
    $region4: #{decoder_layer.4} parent=1 // loop_header_branch
      %28 = sbr.rel (%p26) target = $region8
    $region5: #{decoder_layer.4} parent=1 // loop_body
      %s30 = ssub.s32 %s25, 1
      %s31 = ssub.s32 %s25, 2
      %s32 = sadd.s32 %s25, 1
      %s33 = ssub.s32 %s25, %s32
      %p34 = scmp.eq.s32.totalorder %s33, 0
      %s36 = sadd.s32 %s35, 1
      %s37 = scalar_select %p34, %s35, %s36
      %p40 = pneg %p34
      %p41 = scmp.eq.s32.totalorder %s25, 1
      %p42 = por %p40, %p41
      %p43 = scmp.ne.s32.totalorder %s35, %s38
      %p44 = scmp.eq.s32.totalorder %s25, 0
      %p45 = por %p43, %p44
      %p46 = scmp.ne.s32.totalorder %s35, %s38
      %p47 = scmp.eq.s32.totalorder %s30, 1
      %p48 = por %p46, %p47
      %p49 = scmp.ne.s32.totalorder %s38, %s39
      %p50 = scmp.eq.s32.totalorder %s30, 0
      %p51 = por %p49, %p50
      %p52 = scmp.ne.s32.totalorder %s38, %s39
      %p53 = scmp.eq.s32.totalorder %s31, 1
      %p54 = por %p52, %p53
      %p56 = scmp.ne.s32.totalorder %s39, %s55
      %p57 = scmp.eq.s32.totalorder %s31, 0
      %p58 = por %p56, %p57
      %s59 = ssub.s32 %s25, %s32
      %p60 = scmp.eq.s32.totalorder %s59, 0
      %s62 = sadd.s32 %s61, 1
      %s63 = scalar_select %p60, %s61, %s62
      %p66 = pneg %p60
      %p67 = scmp.eq.s32.totalorder %s25, 1
      %p68 = por %p66, %p67
      %p69 = scmp.ne.s32.totalorder %s61, %s64
      %p70 = scmp.eq.s32.totalorder %s25, 0
      %p71 = por %p69, %p70
      %p72 = scmp.ne.s32.totalorder %s61, %s64
      %p73 = scmp.eq.s32.totalorder %s30, 1
      %p74 = por %p72, %p73
      %p75 = scmp.ne.s32.totalorder %s64, %s65
      %p76 = scmp.eq.s32.totalorder %s30, 0
      %p77 = por %p75, %p76
      %p78 = scmp.ne.s32.totalorder %s64, %s65
      %p79 = scmp.eq.s32.totalorder %s31, 1
      %p80 = por %p78, %p79
      %p82 = scmp.ne.s32.totalorder %s65, %s81
      %p83 = scmp.eq.s32.totalorder %s31, 0
      %p84 = por %p82, %p83
      %s85 = ssub.s32 %s25, %s32
      %p86 = scmp.eq.s32.totalorder %s85, 0
      %s88 = sadd.s32 %s87, 1
      %s89 = scalar_select %p86, %s87, %s88
      %p92 = pneg %p86
      %p93 = scmp.eq.s32.totalorder %s25, 1
      %p94 = por %p92, %p93
      %p95 = scmp.ne.s32.totalorder %s87, %s90
      %p96 = scmp.eq.s32.totalorder %s25, 0
      %p97 = por %p95, %p96
      %p98 = scmp.ne.s32.totalorder %s87, %s90
      %p99 = scmp.eq.s32.totalorder %s30, 1
      %p100 = por %p98, %p99
      %p101 = scmp.ne.s32.totalorder %s90, %s91
      %p102 = scmp.eq.s32.totalorder %s30, 0
      %p103 = por %p101, %p102
      %p104 = scmp.ne.s32.totalorder %s90, %s91
      %p105 = scmp.eq.s32.totalorder %s31, 1
      %p106 = por %p104, %p105
      %p108 = scmp.ne.s32.totalorder %s91, %s107
      %p109 = scmp.eq.s32.totalorder %s31, 0
      %p110 = por %p108, %p109
      %s112 = sadd.s32 %s111, 1
      %p115 = scmp.eq.s32.totalorder %s25, 1
      %p116 = scmp.ne.s32.totalorder %s111, %s113
      %p117 = scmp.eq.s32.totalorder %s25, 0
      %p118 = por %p116, %p117
      %p119 = scmp.ne.s32.totalorder %s111, %s113
      %p120 = scmp.eq.s32.totalorder %s30, 1
      %p121 = por %p119, %p120
      %p122 = scmp.ne.s32.totalorder %s113, %s114
      %p123 = scmp.eq.s32.totalorder %s30, 0
      %p124 = por %p122, %p123
      %p125 = scmp.ne.s32.totalorder %s113, %s114
      %p126 = scmp.eq.s32.totalorder %s31, 1
      %p127 = por %p125, %p126
      %p129 = scmp.ne.s32.totalorder %s114, %s128
      %p130 = scmp.eq.s32.totalorder %s31, 0
      %p131 = por %p129, %p130
      %s133 = sadd.s32 %s132, 1
      %p136 = scmp.eq.s32.totalorder %s25, 1
      %p137 = scmp.ne.s32.totalorder %s132, %s134
      %p138 = scmp.eq.s32.totalorder %s25, 0
      %p139 = por %p137, %p138
      %p140 = scmp.ne.s32.totalorder %s132, %s134
      %p141 = scmp.eq.s32.totalorder %s30, 1
      %p142 = por %p140, %p141
      %p143 = scmp.ne.s32.totalorder %s134, %s135
      %p144 = scmp.eq.s32.totalorder %s30, 0
      %p145 = por %p143, %p144
      %p146 = scmp.ne.s32.totalorder %s134, %s135
      %p147 = scmp.eq.s32.totalorder %s31, 1
      %p148 = por %p146, %p147
      %p150 = scmp.ne.s32.totalorder %s135, %s149
      %p151 = scmp.eq.s32.totalorder %s31, 0
      %p152 = por %p150, %p151
      %s154 = sadd.s32 %s153, 1
      %p157 = scmp.eq.s32.totalorder %s25, 1
      %p158 = scmp.ne.s32.totalorder %s153, %s155
      %p159 = scmp.eq.s32.totalorder %s25, 0
      %p160 = por %p158, %p159
      %p161 = scmp.ne.s32.totalorder %s153, %s155
      %p162 = scmp.eq.s32.totalorder %s30, 1
      %p163 = por %p161, %p162
      %p164 = scmp.ne.s32.totalorder %s155, %s156
      %p165 = scmp.eq.s32.totalorder %s30, 0
      %p166 = por %p164, %p165
      %p167 = scmp.ne.s32.totalorder %s155, %s156
      %p168 = scmp.eq.s32.totalorder %s31, 1
      %p169 = por %p167, %p168
      %p171 = scmp.ne.s32.totalorder %s156, %s170
      %p172 = scmp.eq.s32.totalorder %s31, 0
      %p173 = por %p171, %p172
      %s175 = sadd.s32 %s174, 1
      %p178 = scmp.eq.s32.totalorder %s25, 1
      %p179 = scmp.ne.s32.totalorder %s174, %s176
      %p180 = scmp.eq.s32.totalorder %s25, 0
      %p181 = por %p179, %p180
      %p182 = scmp.ne.s32.totalorder %s174, %s176
      %p183 = scmp.eq.s32.totalorder %s30, 1
      %p184 = por %p182, %p183
      %p185 = scmp.ne.s32.totalorder %s176, %s177
      %p186 = scmp.eq.s32.totalorder %s30, 0
      %p187 = por %p185, %p186
      %p188 = scmp.ne.s32.totalorder %s176, %s177
      %p189 = scmp.eq.s32.totalorder %s31, 1
      %p190 = por %p188, %p189
      %p192 = scmp.ne.s32.totalorder %s177, %s191
      %p193 = scmp.eq.s32.totalorder %s31, 0
      %p194 = por %p192, %p193
      %s196 = sadd.s32 %s195, 1
      %p199 = scmp.eq.s32.totalorder %s25, 1
      %p200 = scmp.ne.s32.totalorder %s195, %s197
      %p201 = scmp.eq.s32.totalorder %s25, 0
      %p202 = por %p200, %p201
      %p203 = scmp.ne.s32.totalorder %s195, %s197
      %p204 = scmp.eq.s32.totalorder %s30, 1
      %p205 = por %p203, %p204
      %p206 = scmp.ne.s32.totalorder %s197, %s198
      %p207 = scmp.eq.s32.totalorder %s30, 0
      %p208 = por %p206, %p207
      %p209 = scmp.ne.s32.totalorder %s197, %s198
      %p210 = scmp.eq.s32.totalorder %s31, 1
      %p211 = por %p209, %p210
      %p213 = scmp.ne.s32.totalorder %s198, %s212
      %p214 = scmp.eq.s32.totalorder %s31, 0
      %p215 = por %p213, %p214
      %s217 = sadd.s32 %s216, 1
      %p220 = scmp.eq.s32.totalorder %s25, 1
      %p221 = scmp.ne.s32.totalorder %s216, %s218
      %p222 = scmp.eq.s32.totalorder %s25, 0
      %p223 = por %p221, %p222
      %p224 = scmp.ne.s32.totalorder %s216, %s218
      %p225 = scmp.eq.s32.totalorder %s30, 1
      %p226 = por %p224, %p225
      %p227 = scmp.ne.s32.totalorder %s218, %s219
      %p228 = scmp.eq.s32.totalorder %s30, 0
      %p229 = por %p227, %p228
      %p230 = scmp.ne.s32.totalorder %s218, %s219
      %p231 = scmp.eq.s32.totalorder %s31, 1
      %p232 = por %p230, %p231
      %p234 = scmp.ne.s32.totalorder %s219, %s233
      %p235 = scmp.eq.s32.totalorder %s31, 0
      %p236 = por %p234, %p235
      %s238 = sadd.s32 %s237, 1
      %p241 = scmp.eq.s32.totalorder %s25, 1
      %p242 = scmp.ne.s32.totalorder %s237, %s239
      %p243 = scmp.eq.s32.totalorder %s25, 0
      %p244 = por %p242, %p243
      %p245 = scmp.ne.s32.totalorder %s237, %s239
      %p246 = scmp.eq.s32.totalorder %s30, 1
      %p247 = por %p245, %p246
      %p248 = scmp.ne.s32.totalorder %s239, %s240
      %p249 = scmp.eq.s32.totalorder %s30, 0
      %p250 = por %p248, %p249
      %p251 = scmp.ne.s32.totalorder %s239, %s240
      %p252 = scmp.eq.s32.totalorder %s31, 1
      %p253 = por %p251, %p252
      %p255 = scmp.ne.s32.totalorder %s240, %s254
      %p256 = scmp.eq.s32.totalorder %s31, 0
      %p257 = por %p255, %p256
      %s259 = sadd.s32 %s258, 1
      %p262 = scmp.eq.s32.totalorder %s25, 1
      %p263 = scmp.ne.s32.totalorder %s258, %s260
      %p264 = scmp.eq.s32.totalorder %s25, 0
      %p265 = por %p263, %p264
      %p266 = scmp.ne.s32.totalorder %s258, %s260
      %p267 = scmp.eq.s32.totalorder %s30, 1
      %p268 = por %p266, %p267
      %p269 = scmp.ne.s32.totalorder %s260, %s261
      %p270 = scmp.eq.s32.totalorder %s30, 0
      %p271 = por %p269, %p270
      %p272 = scmp.ne.s32.totalorder %s260, %s261
      %p273 = scmp.eq.s32.totalorder %s31, 1
      %p274 = por %p272, %p273
      %p276 = scmp.ne.s32.totalorder %s261, %s275
      %p277 = scmp.eq.s32.totalorder %s31, 0
      %p278 = por %p276, %p277
      %s279 = ssub.s32 %s25, %s32
      %p280 = scmp.eq.s32.totalorder %s279, 0
      %s282 = sadd.s32 %s281, 1
      %s283 = scalar_select %p280, %s281, %s282
      %p286 = pneg %p280
      %p287 = scmp.eq.s32.totalorder %s25, 1
      %p288 = por %p286, %p287
      %p289 = scmp.ne.s32.totalorder %s281, %s284
      %p290 = scmp.eq.s32.totalorder %s25, 0
      %p291 = por %p289, %p290
      %p292 = scmp.ne.s32.totalorder %s281, %s284
      %p293 = scmp.eq.s32.totalorder %s30, 1
      %p294 = por %p292, %p293
      %p295 = scmp.ne.s32.totalorder %s284, %s285
      %p296 = scmp.eq.s32.totalorder %s30, 0
      %p297 = por %p295, %p296
      %p298 = scmp.ne.s32.totalorder %s284, %s285
      %p299 = scmp.eq.s32.totalorder %s31, 1
      %p300 = por %p298, %p299
      %p302 = scmp.ne.s32.totalorder %s285, %s301
      %p303 = scmp.eq.s32.totalorder %s31, 0
      %p304 = por %p302, %p303
      %p305 = scmp.le.s32.totalorder 1, %s25
      %p306 = scmp.lt.s32.totalorder %s25, 3
      %p307 = pnand %p305, %p306
      %p308 = pneg %p307
      // Predicated region
      $region9: #{decoder_layer.4} parent=5 // pred_check
        _
      $region10: #{decoder_layer.4} parent=5 // pred_check_branch
        %310 = sbr.rel (%p307) target = $region12
      $region11: #{decoder_layer.4} parent=5 // pred_region
        %s311 = ssub.s32 %s25, 1
        // Predicated region
        $region13: #{decoder_layer.4} parent=11 // pred_check
          %p312 = pneg %p124
        $region14: #{decoder_layer.4} parent=11 // pred_check_branch
          %314 = sbr.rel (%p312) target = $region16
        $region15: #{decoder_layer.4} parent=11 // pred_region
          %316 = vsyncadd [#allocation5], 0
          %s317 = sshll.u32 %s3, 4
          %s318 = int_to_ptr.hbm [resolvable:$true] %s317
          %s319 = sshll.u32 [#allocation6], 4
          %s320 = int_to_ptr.vmem [resolvable:$true] %s319
          %325 = dma.hbm_to_vmem [thread:$0]  %s318, 1024, %s320, [#allocation5], 64, 64, 4
        $region16: #{decoder_layer.4} parent=11 // pred_fallthru
          _
        // Predicated region
        $region17: #{decoder_layer.4} parent=11 // pred_check
          %p326 = pneg %p145
        $region18: #{decoder_layer.4} parent=11 // pred_check_branch
          %328 = sbr.rel (%p326) target = $region20
        $region19: #{decoder_layer.4} parent=11 // pred_region
          _
        $region20: #{decoder_layer.4} parent=11 // pred_fallthru
          _
        // Predicated region
        $region21: #{decoder_layer.4} parent=11 // pred_check
          %p329 = pneg %p166
        $region22: #{decoder_layer.4} parent=11 // pred_check_branch
          %331 = sbr.rel (%p329) target = $region24
        $region23: #{decoder_layer.4} parent=11 // pred_region
          %333 = vsyncadd [#allocation8], 0
          %s334 = sshll.u32 %s5, 4
          %s335 = int_to_ptr.hbm [resolvable:$true] %s334
          %s336 = sshll.u32 [#allocation7], 4
          %s337 = int_to_ptr.vmem [resolvable:$true] %s336
          %342 = dma.hbm_to_vmem [thread:$0]  %s335, 2048, %s337, [#allocation8], 128, 128, 8
        $region24: #{decoder_layer.4} parent=11 // pred_fallthru
          _
        // Predicated region
        $region25: #{decoder_layer.4} parent=11 // pred_check
          %p343 = pneg %p187
        $region26: #{decoder_layer.4} parent=11 // pred_check_branch
          %345 = sbr.rel (%p343) target = $region28
        $region27: #{decoder_layer.4} parent=11 // pred_region
          _
        $region28: #{decoder_layer.4} parent=11 // pred_fallthru
          _
        // Predicated region
        $region29: #{decoder_layer.4} parent=11 // pred_check
          %p346 = pneg %p208
        $region30: #{decoder_layer.4} parent=11 // pred_check_branch
          %348 = sbr.rel (%p346) target = $region32
        $region31: #{decoder_layer.4} parent=11 // pred_region
          %350 = vsyncadd [#allocation8], 0
          %s351 = sshll.u32 %s7, 4
          %s352 = int_to_ptr.hbm [resolvable:$true] %s351
          %s353 = sshll.u32 [#allocation9], 4
          %s354 = int_to_ptr.vmem [resolvable:$true] %s353
          %359 = dma.hbm_to_vmem [thread:$0]  %s352, 1024, %s354, [#allocation8], 64, 64, 4
        $region32: #{decoder_layer.4} parent=11 // pred_fallthru
          _
        // Predicated region
        $region33: #{decoder_layer.4} parent=11 // pred_check
          %p360 = pneg %p229
        $region34: #{decoder_layer.4} parent=11 // pred_check_branch
          %362 = sbr.rel (%p360) target = $region36
        $region35: #{decoder_layer.4} parent=11 // pred_region
          _
        $region36: #{decoder_layer.4} parent=11 // pred_fallthru
          _
        // Predicated region
        $region37: #{decoder_layer.4} parent=11 // pred_check
          %p363 = pneg %p250
        $region38: #{decoder_layer.4} parent=11 // pred_check_branch
          %365 = sbr.rel (%p363) target = $region40
        $region39: #{decoder_layer.4} parent=11 // pred_region
          %367 = vsyncadd [#allocation11], 0
          %s369 = sshll.u32 %s9, 4
          %s370 = int_to_ptr.hbm [resolvable:$true] %s369
          %s371 = sshll.u32 [#allocation10], 4
          %s372 = int_to_ptr.vmem [resolvable:$true] %s371
          %374 = dma.hbm_to_vmem [thread:$0]  %s370, 16, %s372, [#allocation11]
        $region40: #{decoder_layer.4} parent=11 // pred_fallthru
          _
        // Predicated region
        $region41: #{decoder_layer.4} parent=11 // pred_check
          %p375 = pneg %p271
        $region42: #{decoder_layer.4} parent=11 // pred_check_branch
          %377 = sbr.rel (%p375) target = $region44
        $region43: #{decoder_layer.4} parent=11 // pred_region
          %379 = vsyncadd [#allocation11], 0
          %s381 = sshll.u32 %s10, 4
          %s382 = int_to_ptr.hbm [resolvable:$true] %s381
          %s383 = sshll.u32 [#allocation12], 4
          %s384 = int_to_ptr.vmem [resolvable:$true] %s383
          %386 = dma.hbm_to_vmem [thread:$0]  %s382, 16, %s384, [#allocation11]
        $region44: #{decoder_layer.4} parent=11 // pred_fallthru
          _
      $region12: #{decoder_layer.4} parent=5 // pred_fallthru
        _
      %p387 = scmp.lt.s32.totalorder %s25, 2
      // Predicated region
      $region45: #{decoder_layer.4} parent=5 // pred_check
        %p388 = pneg %p387
      $region46: #{decoder_layer.4} parent=5 // pred_check_branch
        %390 = sbr.rel (%p388) target = $region48
      $region47: #{decoder_layer.4} parent=5 // pred_region
        // Predicated region
        $region49: #{decoder_layer.4} parent=47 // pred_check
          %p391 = pneg %p45
        $region50: #{decoder_layer.4} parent=47 // pred_check_branch
          %393 = sbr.rel (%p391) target = $region52
        $region51: #{decoder_layer.4} parent=47 // pred_region
          %p394 = scmp.lt.s32.totalorder %s25, 1
          %s395 = scalar_select %p394, %s25, 1
          %s396 = smul.addr %s395, 2
          %s397 = smul.addr %s396, 8
          %s398 = scalar_lea.vmem %s0, %s397
        $region52: #{decoder_layer.4} parent=47 // pred_fallthru
          _
        // Predicated region
        $region53: #{decoder_layer.4} parent=47 // pred_check
          %p399 = pneg %p71
        $region54: #{decoder_layer.4} parent=47 // pred_check_branch
          %401 = sbr.rel (%p399) target = $region56
        $region55: #{decoder_layer.4} parent=47 // pred_region
          %s402 = sand.u32 %s61, 1
          %s403 = scalar_lea.sflag [#allocation3], %s402
          %s404 = sand.u32 %s61, 1
          %s405 = smul.addr %s404, 16
          %s406 = scalar_lea.vmem [#allocation2], %s405
          %408 = vsyncadd %s403, 0
          %s409 = smul.addr %s25, 2
          %s410 = smul.addr %s409, 8
          %s411 = scalar_lea.hbm %s1, %s410
          %s412 = sshll.u32 %s411, 4
          %s413 = int_to_ptr.hbm [resolvable:$true] %s412
          %s414 = sshll.u32 %s406, 4
          %s415 = int_to_ptr.vmem [resolvable:$true] %s414
          %420 = dma.hbm_to_vmem [thread:$0]  %s413, 256, %s415, %s403, 128, 128, 8
        $region56: #{decoder_layer.4} parent=47 // pred_fallthru
          _
        // Predicated region
        $region57: #{decoder_layer.4} parent=47 // pred_check
          %p421 = pneg %p97
        $region58: #{decoder_layer.4} parent=47 // pred_check_branch
          %423 = sbr.rel (%p421) target = $region60
        $region59: #{decoder_layer.4} parent=47 // pred_region
          %s424 = sand.u32 %s25, 1
          %s425 = scalar_lea.sflag [#allocation5], %s424
          %s426 = sand.u32 %s87, 1
          %s427 = scalar_lea.vmem [#allocation4], %s426
          %429 = vsyncadd %s425, 0
          %s430 = scalar_lea.hbm %s2, %s25
          %s432 = sshll.u32 %s430, 4
          %s433 = int_to_ptr.hbm [resolvable:$true] %s432
          %s434 = sshll.u32 %s427, 4
          %s435 = int_to_ptr.vmem [resolvable:$true] %s434
          %437 = dma.hbm_to_vmem [thread:$0]  %s433, 16, %s435, %s425
        $region60: #{decoder_layer.4} parent=47 // pred_fallthru
          _
      $region48: #{decoder_layer.4} parent=5 // pred_fallthru
        _
      %p438 = scmp.le.s32.totalorder 1, %s25
      %p439 = scmp.lt.s32.totalorder %s25, 3
      %p440 = pnand %p438, %p439
      %p441 = pneg %p440
      // Predicated region
      $region61: #{decoder_layer.4} parent=5 // pred_check
        _
      $region62: #{decoder_layer.4} parent=5 // pred_check_branch
        %443 = sbr.rel (%p440) target = $region64
      $region63: #{decoder_layer.4} parent=5 // pred_region
        %s444 = ssub.s32 %s25, 1
        %s445 = sand.u32 %s64, 1
        %s446 = scalar_lea.sflag [#allocation3], %s445
        %s447 = sand.u32 %s64, 1
        %s448 = smul.addr %s447, 16
        %s449 = scalar_lea.vmem [#allocation2], %s448
        // Predicated region
        $region65: #{decoder_layer.4} parent=63 // pred_check
          %p450 = pneg %p77
        $region66: #{decoder_layer.4} parent=63 // pred_check_branch
          %452 = sbr.rel (%p450) target = $region68
        $region67: #{decoder_layer.4} parent=63 // pred_region
          %454 = dma.done %s446, 256
        $region68: #{decoder_layer.4} parent=63 // pred_fallthru
          _
        %s455 = sand.u32 %s30, 1
        %s456 = scalar_lea.sflag [#allocation5], %s455
        %s457 = sand.u32 %s90, 1
        %s458 = scalar_lea.vmem [#allocation4], %s457
        // Predicated region
        $region69: #{decoder_layer.4} parent=63 // pred_check
          %p459 = pneg %p103
        $region70: #{decoder_layer.4} parent=63 // pred_check_branch
          %461 = sbr.rel (%p459) target = $region72
        $region71: #{decoder_layer.4} parent=63 // pred_region
          %463 = dma.done %s456, 16
        $region72: #{decoder_layer.4} parent=63 // pred_fallthru
          _
        // Predicated region
        $region73: #{decoder_layer.4} parent=63 // pred_check
          %p464 = pneg %p124
        $region74: #{decoder_layer.4} parent=63 // pred_check_branch
          %466 = sbr.rel (%p464) target = $region76
        $region75: #{decoder_layer.4} parent=63 // pred_region
          %468 = dma.done [#allocation5], 1024
        $region76: #{decoder_layer.4} parent=63 // pred_fallthru
          _
        // Predicated region
        $region77: #{decoder_layer.4} parent=63 // pred_check
          %p469 = pneg %p166
        $region78: #{decoder_layer.4} parent=63 // pred_check_branch
          %471 = sbr.rel (%p469) target = $region80
        $region79: #{decoder_layer.4} parent=63 // pred_region
          %473 = dma.done [#allocation8], 2048
        $region80: #{decoder_layer.4} parent=63 // pred_fallthru
          _
        // Predicated region
        $region81: #{decoder_layer.4} parent=63 // pred_check
          %p474 = pneg %p208
        $region82: #{decoder_layer.4} parent=63 // pred_check_branch
          %476 = sbr.rel (%p474) target = $region84
        $region83: #{decoder_layer.4} parent=63 // pred_region
          %478 = dma.done [#allocation8], 1024
        $region84: #{decoder_layer.4} parent=63 // pred_fallthru
          _
        // Predicated region
        $region85: #{decoder_layer.4} parent=63 // pred_check
          %p479 = pneg %p250
        $region86: #{decoder_layer.4} parent=63 // pred_check_branch
          %481 = sbr.rel (%p479) target = $region88
        $region87: #{decoder_layer.4} parent=63 // pred_region
          %483 = dma.done [#allocation11], 16
        $region88: #{decoder_layer.4} parent=63 // pred_fallthru
          _
        // Predicated region
        $region89: #{decoder_layer.4} parent=63 // pred_check
          %p484 = pneg %p271
        $region90: #{decoder_layer.4} parent=63 // pred_check_branch
          %486 = sbr.rel (%p484) target = $region92
        $region91: #{decoder_layer.4} parent=63 // pred_region
          %488 = dma.done [#allocation11], 16
        $region92: #{decoder_layer.4} parent=63 // pred_fallthru
          _
        %p489 = scmp.lt.s32.totalorder %s30, 1
        %s490 = scalar_select %p489, %s30, 1
        %s491 = smul.addr %s490, 2
        %s492 = smul.addr %s491, 8
        %s493 = scalar_lea.vmem %s0, %s492
        %p494 = pneg %p51
        %p495 = pneg %p48
        %s496 = sand.u32 %s64, 1
        %s497 = scalar_lea.sflag [#allocation3], %s496
        %s498 = sand.u32 %s64, 1
        %s499 = smul.addr %s498, 16
        %s500 = scalar_lea.vmem [#allocation2], %s499
        %p501 = pneg %p77
        %p502 = pneg %p74
        %s503 = sand.u32 %s30, 1
        %s504 = scalar_lea.sflag [#allocation5], %s503
        %s505 = sand.u32 %s90, 1
        %s506 = scalar_lea.vmem [#allocation4], %s505
        %p507 = pneg %p103
        %p508 = pneg %p100
        %p509 = pneg %p124
        %p510 = pneg %p121
        %p511 = pneg %p145
        %p512 = pneg %p142
        %p513 = pneg %p166
        %p514 = pneg %p163
        %p515 = pneg %p187
        %p516 = pneg %p184
        %p517 = pneg %p208
        %p518 = pneg %p205
        %p519 = pneg %p229
        %p520 = pneg %p226
        %p521 = pneg %p250
        %p522 = pneg %p247
        %p523 = pneg %p271
        %p524 = pneg %p268
        %p525 = pneg %p297
        %p526 = pneg %p294
        %p527 = scmp.lt.s32.totalorder %s30, 1
        %s528 = scalar_select %p527, %s30, 1
        %s529 = smul.addr %s528, 2
        %s530 = smul.addr %s529, 8
        %s531 = scalar_lea.vmem %s11, %s530
        %p532 = scmp.lt.s32.totalorder %s30, 1
        %s533 = scalar_select %p532, %s30, 1
        %s534 = smul.addr %s533, 2
        %s535 = smul.addr %s534, 8
        %s536 = scalar_lea.vmem %s0, %s535
        %p537 = scmp.lt.s32.totalorder %s30, 1
        %s538 = scalar_select %p537, %s30, 1
        %s539 = smul.addr %s538, 2
        %s540 = smul.addr %s539, 8
        %s541 = scalar_lea.vmem %s11, %s540
        %v543 = vld [vmem:[%s536] sm:$0xff]
        %v544 = vld [vmem:[%s536 + $0x8] sm:$0xff]
        %v545 = vld [vmem:[%s449] sm:$0xff]
        %v546 = vld [vmem:[%s449 + $0x8] sm:$0xff]
        %v547 = vld [vmem:[#allocation10] sm:$0x1]
        %v548 = vld [vmem:[#allocation12] sm:$0x1]
        %549 = vadd.xlane.f32.xlu0 %v543
        %v550 = vpop.xlane.xlu0 %549
        %551 = vadd.xlane.f32.xlu0 %v544
        %v552 = vpop.xlane.xlu0 %551
        %v553 = vrcp.pop 128.0
        %v554 = vmul.f32 128.0, %v553
        %v555 = vsub.f32 1.0, %v554
        %v556 = vmul.f32 %v553, %v555
        %v557 = vadd.f32 %v553, %v556
        %vm558 = vweird.f32 %v553
        %v559 = vsel %vm558, %v553, %v557
        %v560 = vmul.f32 %v550, %v559
        %v561 = vmul.f32 %v552, %v559
        %v562 = vsub.f32 %v543, %v560
        %v563 = vsub.f32 %v544, %v561
        %v564 = vmul.f32 %v562, %v562
        %v565 = vmul.f32 %v563, %v563
        %566 = vadd.xlane.f32.xlu0 %v564
        %v567 = vpop.xlane.xlu0 %566
        %568 = vadd.xlane.f32.xlu0 %v565
        %v569 = vpop.xlane.xlu0 %568
        %v570 = vmul.f32 %v567, 0.007874016
        %v571 = vmul.f32 %v569, 0.007874016
        %v572 = vrsqrt.pop %v570
        %v573 = vmul.f32 %v572, %v570
        %v574 = vmul.f32 %v573, %v572
        %v575 = vmul.f32 0.5, %v574
        %v576 = vsub.f32 1.5, %v575
        %v577 = vmul.f32 %v572, %v576
        %v578 = vmul.f32 %v570, %v577
        %vm579 = vcmp.eq.f32.partialorder %v570, inf
        %v580 = vsel %vm579, %v570, %v578
        %vm581 = vcmp.eq.f32.partialorder %v570, 0.0
        %v582 = vand.u32 %v570, 2147483648
        %v583 = vsel %vm581, %v582, %v580
        %v584 = vrsqrt.pop %v571
        %v585 = vmul.f32 %v584, %v571
        %v586 = vmul.f32 %v585, %v584
        %v587 = vmul.f32 0.5, %v586
        %v588 = vsub.f32 1.5, %v587
        %v589 = vmul.f32 %v584, %v588
        %v590 = vmul.f32 %v571, %v589
        %vm591 = vcmp.eq.f32.partialorder %v571, inf
        %v592 = vsel %vm591, %v571, %v590
        %vm593 = vcmp.eq.f32.partialorder %v571, 0.0
        %v594 = vand.u32 %v571, 2147483648
        %v595 = vsel %vm593, %v594, %v592
        %v596 = vadd.f32 %v583, 1e-06
        %v597 = vadd.f32 %v595, 1e-06
        %v598 = vrcp.pop %v596
        %v599 = vmul.f32 %v596, %v598
        %v600 = vsub.f32 1.0, %v599
        %v601 = vmul.f32 %v598, %v600
        %v602 = vadd.f32 %v598, %v601
        %vm603 = vweird.f32 %v596
        %vm604 = vweird.f32 %v598
        %vm605 = vmor %vm603, %vm604
        %v606 = vsel %vm605, %v598, %v602
        %v607 = vand.u32 2147483647, %v596
        %vm608 = vcmp.eq.f32.partialorder %v607, 8.507059e+37
        %v609 = vand.u32 %v596, 2147483648
        %v610 = vor.u32 1.1754944e-38, %v609
        %v611 = vsel %vm608, %v610, %v606
        %v612 = vmul.f32 %v562, %v611
        %v613 = vrcp.pop %v597
        %v614 = vmul.f32 %v597, %v613
        %v615 = vsub.f32 1.0, %v614
        %v616 = vmul.f32 %v613, %v615
        %v617 = vadd.f32 %v613, %v616
        %vm618 = vweird.f32 %v597
        %vm619 = vweird.f32 %v613
        %vm620 = vmor %vm618, %vm619
        %v621 = vsel %vm620, %v613, %v617
        %v622 = vand.u32 2147483647, %v597
        %vm623 = vcmp.eq.f32.partialorder %v622, 8.507059e+37
        %v624 = vand.u32 %v597, 2147483648
        %v625 = vor.u32 1.1754944e-38, %v624
        %v626 = vsel %vm623, %v625, %v621
        %v627 = vmul.f32 %v563, %v626
        %v629 = vperm.slane %v547, 0
        %v631 = vmul.f32 %v629, %v612
        %v632 = vmul.f32 %v629, %v627
        %v634 = vperm.slane %v548, 0
        %v636 = vadd.f32 %v631, %v634
        %v637 = vadd.f32 %v632, %v634
        %v638 = vpack.c.bf16 %v637, %v636
        %v639 = vld [vmem:[#allocation6] sm:$0xf]
        %v640 = vld [vmem:[#allocation6 + $0x4] sm:$0xf]
        %v641 = vld [vmem:[#allocation6 + $0x8] sm:$0xf]
        %v642 = vld [vmem:[#allocation6 + $0xc] sm:$0xf]
        %v643 = vld [vmem:[#allocation6 + $0x10] sm:$0xf]
        %v644 = vld [vmem:[#allocation6 + $0x14] sm:$0xf]
        %v645 = vld [vmem:[#allocation6 + $0x18] sm:$0xf]
        %v646 = vld [vmem:[#allocation6 + $0x1c] sm:$0xf]
        %v647 = vld [vmem:[#allocation6 + $0x20] sm:$0xf]
        %v648 = vld [vmem:[#allocation6 + $0x24] sm:$0xf]
        %v649 = vld [vmem:[#allocation6 + $0x28] sm:$0xf]
        %v650 = vld [vmem:[#allocation6 + $0x2c] sm:$0xf]
        %v651 = vld [vmem:[#allocation6 + $0x30] sm:$0xf]
        %v652 = vld [vmem:[#allocation6 + $0x34] sm:$0xf]
        %v653 = vld [vmem:[#allocation6 + $0x38] sm:$0xf]
        %v654 = vld [vmem:[#allocation6 + $0x3c] sm:$0xf]
        %v655 = vld [vmem:[%s4] sm:$0x1]
        %v657 = vperm.slane %v655, 0
        %v675 = vunpack.c.l.b16 %v639
        %v676 = vunpack.c.l.b16 %v640
        %v677 = vunpack.c.l.b16 %v641
        %v678 = vunpack.c.l.b16 %v642
        %v679 = vunpack.c.l.b16 %v643
        %v680 = vunpack.c.l.b16 %v644
        %v681 = vunpack.c.l.b16 %v645
        %v682 = vunpack.c.l.b16 %v646
        %v683 = vunpack.c.l.b16 %v647
        %v684 = vunpack.c.l.b16 %v648
        %v685 = vunpack.c.l.b16 %v649
        %v686 = vunpack.c.l.b16 %v650
        %v687 = vunpack.c.l.b16 %v651
        %v688 = vunpack.c.l.b16 %v652
        %v689 = vunpack.c.l.b16 %v653
        %v690 = vunpack.c.l.b16 %v654
        %v691 = vpack.c.b16 %v676, %v675
        %v692 = vpack.c.b16 %v678, %v677
        %v693 = vpack.c.b16 %v680, %v679
        %v694 = vpack.c.b16 %v682, %v681
        %v695 = vpack.c.b16 %v684, %v683
        %v696 = vpack.c.b16 %v686, %v685
        %v697 = vpack.c.b16 %v688, %v687
        %v698 = vpack.c.b16 %v690, %v689
        %707 = vmatpush.bf16.msra.mxu0 %v698
        %708 = vmatpush.bf16.msra.mxu0 %v697
        %709 = vmatpush.bf16.msra.mxu0 %v696
        %710 = vmatpush.bf16.msra.mxu0 %v695
        %711 = vmatpush.bf16.msra.mxu0 %v694
        %712 = vmatpush.bf16.msra.mxu0 %v693
        %713 = vmatpush.bf16.msra.mxu0 %v692
        %714 = vmatpush.bf16.msra.mxu0 %v691
        %715 = vmatmul.bf16.gmra.mxu0 %v638
        %v716 = vpop.f32.mrf.mxu0
        %v717 = vadd.f32 %v657, %v716
        %v718 = vpop.f32.mrf.mxu0
        %v719 = vadd.f32 %v657, %v718
        %720 = vdwg.mxu0
        %v721 = vpack.c.bf16 %v546, %v545
        %v722 = vld [vmem:[#allocation7] sm:$0xff]
        %v723 = vld [vmem:[#allocation7 + $0x8] sm:$0xff]
        %v724 = vld [vmem:[#allocation7 + $0x10] sm:$0xff]
        %v725 = vld [vmem:[#allocation7 + $0x18] sm:$0xff]
        %v726 = vld [vmem:[#allocation7 + $0x20] sm:$0xff]
        %v727 = vld [vmem:[#allocation7 + $0x28] sm:$0xff]
        %v728 = vld [vmem:[#allocation7 + $0x30] sm:$0xff]
        %v729 = vld [vmem:[#allocation7 + $0x38] sm:$0xff]
        %v730 = vld [vmem:[#allocation7 + $0x40] sm:$0xff]
        %v731 = vld [vmem:[#allocation7 + $0x48] sm:$0xff]
        %v732 = vld [vmem:[#allocation7 + $0x50] sm:$0xff]
        %v733 = vld [vmem:[#allocation7 + $0x58] sm:$0xff]
        %v734 = vld [vmem:[#allocation7 + $0x60] sm:$0xff]
        %v735 = vld [vmem:[#allocation7 + $0x68] sm:$0xff]
        %v736 = vld [vmem:[#allocation7 + $0x70] sm:$0xff]
        %v737 = vld [vmem:[#allocation7 + $0x78] sm:$0xff]
        %v738 = vld [vmem:[%s6] sm:$0x3]
        %v740 = vperm.slane %v738, 0
        %v741 = vperm.slane %v738, 1
        %v760 = vunpack.c.l.b16 %v722
        %v761 = vunpack.c.h.b16 %v722
        %v762 = vunpack.c.l.b16 %v723
        %v763 = vunpack.c.h.b16 %v723
        %v764 = vunpack.c.l.b16 %v724
        %v765 = vunpack.c.h.b16 %v724
        %v766 = vunpack.c.l.b16 %v725
        %v767 = vunpack.c.h.b16 %v725
        %v768 = vunpack.c.l.b16 %v726
        %v769 = vunpack.c.h.b16 %v726
        %v770 = vunpack.c.l.b16 %v727
        %v771 = vunpack.c.h.b16 %v727
        %v772 = vunpack.c.l.b16 %v728
        %v773 = vunpack.c.h.b16 %v728
        %v774 = vunpack.c.l.b16 %v729
        %v775 = vunpack.c.h.b16 %v729
        %v776 = vunpack.c.l.b16 %v730
        %v777 = vunpack.c.h.b16 %v730
        %v778 = vunpack.c.l.b16 %v731
        %v779 = vunpack.c.h.b16 %v731
        %v780 = vunpack.c.l.b16 %v732
        %v781 = vunpack.c.h.b16 %v732
        %v782 = vunpack.c.l.b16 %v733
        %v783 = vunpack.c.h.b16 %v733
        %v784 = vunpack.c.l.b16 %v734
        %v785 = vunpack.c.h.b16 %v734
        %v786 = vunpack.c.l.b16 %v735
        %v787 = vunpack.c.h.b16 %v735
        %v788 = vunpack.c.l.b16 %v736
        %v789 = vunpack.c.h.b16 %v736
        %v790 = vunpack.c.l.b16 %v737
        %v791 = vunpack.c.h.b16 %v737
        %v792 = vpack.c.b16 %v762, %v760
        %v793 = vpack.c.b16 %v763, %v761
        %v794 = vpack.c.b16 %v766, %v764
        %v795 = vpack.c.b16 %v767, %v765
        %v796 = vpack.c.b16 %v770, %v768
        %v797 = vpack.c.b16 %v771, %v769
        %v798 = vpack.c.b16 %v774, %v772
        %v799 = vpack.c.b16 %v775, %v773
        %v800 = vpack.c.b16 %v778, %v776
        %v801 = vpack.c.b16 %v779, %v777
        %v802 = vpack.c.b16 %v782, %v780
        %v803 = vpack.c.b16 %v783, %v781
        %v804 = vpack.c.b16 %v786, %v784
        %v805 = vpack.c.b16 %v787, %v785
        %v806 = vpack.c.b16 %v790, %v788
        %v807 = vpack.c.b16 %v791, %v789
        %824 = vmatpush.bf16.msra.mxu0 %v806
        %825 = vmatpush.bf16.msra.mxu0 %v804
        %826 = vmatpush.bf16.msra.mxu0 %v802
        %827 = vmatpush.bf16.msra.mxu0 %v800
        %828 = vmatpush.bf16.msra.mxu0 %v798
        %829 = vmatpush.bf16.msra.mxu0 %v796
        %830 = vmatpush.bf16.msra.mxu0 %v794
        %831 = vmatpush.bf16.msra.mxu0 %v792
        %832 = vmatmul.bf16.gmra.mxu0 %v721
        %v833 = vpop.f32.mrf.mxu0
        %v834 = vadd.f32 %v740, %v833
        %v835 = vpop.f32.mrf.mxu0
        %v836 = vadd.f32 %v740, %v835
        %837 = vdwg.mxu0
        %838 = vmatpush.bf16.msra.mxu0 %v807
        %839 = vmatpush.bf16.msra.mxu0 %v805
        %840 = vmatpush.bf16.msra.mxu0 %v803
        %841 = vmatpush.bf16.msra.mxu0 %v801
        %842 = vmatpush.bf16.msra.mxu0 %v799
        %843 = vmatpush.bf16.msra.mxu0 %v797
        %844 = vmatpush.bf16.msra.mxu0 %v795
        %845 = vmatpush.bf16.msra.mxu0 %v793
        %846 = vmatmul.bf16.gmra.mxu0 %v721
        %v847 = vpop.f32.mrf.mxu0
        %v848 = vadd.f32 %v741, %v847
        %v849 = vpop.f32.mrf.mxu0
        %v850 = vadd.f32 %v741, %v849
        %851 = vdwg.mxu0
        %v852 = vld [vmem:[%s458] sm:$0x1]
        %vm853 = vcmp.eq.f32.partialorder %v852, 0.0
        %v854 = vsel %vm853, -1e+09, 0.0
        %857 = vrot.lane.b32.xlu0 %v717, 96
        %v858 = vpop.permute.xlu0 %857
        %859 = vrot.lane.b32.xlu0 %v719, 96
        %v860 = vpop.permute.xlu0 %859
        %863 = vrot.lane.b32.xlu0 %v717, 64
        %v864 = vpop.permute.xlu0 %863
        %865 = vrot.lane.b32.xlu0 %v719, 64
        %v866 = vpop.permute.xlu0 %865
        %869 = vrot.lane.b32.xlu0 %v717, 32
        %v870 = vpop.permute.xlu0 %869
        %871 = vrot.lane.b32.xlu0 %v719, 32
        %v872 = vpop.permute.xlu0 %871
        %v875 = vrot.slane %v864, 4
        %vm876 = vcmask 1047556
        %v877 = vsel %vm876, %v875, %v717
        %v878 = vrot.slane %v717, 4
        %v879 = vsel %vm876, %v864, %v878
        %v881 = vunpack.c.l.s4 1983009808
        %v882 = vunpack.c.0.s8 %v881
        %v883 = vperm.slane %v877, %v882
        %v885 = vunpack.c.l.s4 1983009808
        %v886 = vunpack.c.0.s8 %v885
        %v887 = vperm.slane %v879, %v886
        %v888 = vrot.slane %v870, 4
        %v889 = vsel %vm876, %v888, %v858
        %v890 = vrot.slane %v858, 4
        %v891 = vsel %vm876, %v870, %v890
        %v893 = vunpack.c.l.s4 1983009808
        %v894 = vunpack.c.0.s8 %v893
        %v895 = vperm.slane %v889, %v894
        %v897 = vunpack.c.l.s4 1983009808
        %v898 = vunpack.c.0.s8 %v897
        %v899 = vperm.slane %v891, %v898
        %v900 = vrot.slane %v895, 4
        %v901 = vsel %vm876, %v900, %v883
        %v902 = vrot.slane %v883, 4
        %v903 = vsel %vm876, %v895, %v902
        %v905 = vunpack.c.l.s4 1934713408
        %v906 = vunpack.c.0.s8 %v905
        %v907 = vperm.slane %v901, %v906
        %v909 = vunpack.c.l.s4 1934713408
        %v910 = vunpack.c.0.s8 %v909
        %v911 = vperm.slane %v903, %v910
        %v912 = vrot.slane %v899, 4
        %v913 = vsel %vm876, %v912, %v887
        %v914 = vrot.slane %v887, 4
        %v915 = vsel %vm876, %v899, %v914
        %v917 = vunpack.c.l.s4 1934713408
        %v918 = vunpack.c.0.s8 %v917
        %v919 = vperm.slane %v913, %v918
        %v921 = vunpack.c.l.s4 1934713408
        %v922 = vunpack.c.0.s8 %v921
        %v923 = vperm.slane %v915, %v922
        %v924 = vrot.slane %v907, 4
        %v925 = vsel %vm876, 0.0, %v924
        %v926 = vrot.slane %v911, 4
        %v927 = vsel %vm876, 0.0, %v926
        %v928 = vrot.slane %v919, 4
        %v929 = vsel %vm876, 0.0, %v928
        %v930 = vrot.slane %v923, 4
        %v931 = vsel %vm876, 0.0, %v930
        %v932 = vrot.slane %v866, 4
        %v933 = vsel %vm876, %v932, %v719
        %v934 = vrot.slane %v719, 4
        %v935 = vsel %vm876, %v866, %v934
        %v937 = vunpack.c.l.s4 1983009808
        %v938 = vunpack.c.0.s8 %v937
        %v939 = vperm.slane %v933, %v938
        %v941 = vunpack.c.l.s4 1983009808
        %v942 = vunpack.c.0.s8 %v941
        %v943 = vperm.slane %v935, %v942
        %v944 = vrot.slane %v872, 4
        %v945 = vsel %vm876, %v944, %v860
        %v946 = vrot.slane %v860, 4
        %v947 = vsel %vm876, %v872, %v946
        %v949 = vunpack.c.l.s4 1983009808
        %v950 = vunpack.c.0.s8 %v949
        %v951 = vperm.slane %v945, %v950
        %v953 = vunpack.c.l.s4 1983009808
        %v954 = vunpack.c.0.s8 %v953
        %v955 = vperm.slane %v947, %v954
        %v956 = vrot.slane %v951, 4
        %v957 = vsel %vm876, %v956, %v939
        %v958 = vrot.slane %v939, 4
        %v959 = vsel %vm876, %v951, %v958
        %v961 = vunpack.c.l.s4 1934713408
        %v962 = vunpack.c.0.s8 %v961
        %v963 = vperm.slane %v957, %v962
        %v965 = vunpack.c.l.s4 1934713408
        %v966 = vunpack.c.0.s8 %v965
        %v967 = vperm.slane %v959, %v966
        %v968 = vrot.slane %v955, 4
        %v969 = vsel %vm876, %v968, %v943
        %v970 = vrot.slane %v943, 4
        %v971 = vsel %vm876, %v955, %v970
        %v973 = vunpack.c.l.s4 1934713408
        %v974 = vunpack.c.0.s8 %v973
        %v975 = vperm.slane %v969, %v974
        %v977 = vunpack.c.l.s4 1934713408
        %v978 = vunpack.c.0.s8 %v977
        %v979 = vperm.slane %v971, %v978
        %v980 = vrot.slane %v963, 4
        %v981 = vsel %vm876, 0.0, %v980
        %v982 = vrot.slane %v967, 4
        %v983 = vsel %vm876, 0.0, %v982
        %v984 = vrot.slane %v975, 4
        %v985 = vsel %vm876, 0.0, %v984
        %v986 = vrot.slane %v979, 4
        %v987 = vsel %vm876, 0.0, %v986
        %v988 = vsel %vm876, %v926, %v907
        %v990 = vunpack.c.l.s4 1983009808
        %v991 = vunpack.c.0.s8 %v990
        %v992 = vperm.slane %v988, %v991
        %v993 = vrot.slane %v927, 4
        %v994 = vsel %vm876, %v993, %v925
        %v996 = vunpack.c.l.s4 1983009808
        %v997 = vunpack.c.0.s8 %v996
        %v998 = vperm.slane %v994, %v997
        %v999 = vsel %vm876, %v930, %v919
        %v1001 = vunpack.c.l.s4 1983009808
        %v1002 = vunpack.c.0.s8 %v1001
        %v1003 = vperm.slane %v999, %v1002
        %v1004 = vrot.slane %v931, 4
        %v1005 = vsel %vm876, %v1004, %v929
        %v1007 = vunpack.c.l.s4 1983009808
        %v1008 = vunpack.c.0.s8 %v1007
        %v1009 = vperm.slane %v1005, %v1008
        %v1010 = vrot.slane %v998, 4
        %v1011 = vsel %vm876, %v1010, %v992
        %v1012 = vrot.slane %v992, 4
        %v1013 = vsel %vm876, %v998, %v1012
        %v1015 = vunpack.c.l.s4 1934713408
        %v1016 = vunpack.c.0.s8 %v1015
        %v1017 = vperm.slane %v1011, %v1016
        %v1019 = vunpack.c.l.s4 1934713408
        %v1020 = vunpack.c.0.s8 %v1019
        %v1021 = vperm.slane %v1013, %v1020
        %v1022 = vrot.slane %v1009, 4
        %v1023 = vsel %vm876, %v1022, %v1003
        %v1024 = vrot.slane %v1003, 4
        %v1025 = vsel %vm876, %v1009, %v1024
        %v1027 = vunpack.c.l.s4 1934713408
        %v1028 = vunpack.c.0.s8 %v1027
        %v1029 = vperm.slane %v1023, %v1028
        %v1031 = vunpack.c.l.s4 1934713408
        %v1032 = vunpack.c.0.s8 %v1031
        %v1033 = vperm.slane %v1025, %v1032
        %v1034 = vrot.slane %v1029, 4
        %v1035 = vsel %vm876, %v1034, %v1017
        %v1036 = vrot.slane %v1017, 4
        %v1037 = vsel %vm876, %v1029, %v1036
        %v1038 = vrot.slane %v1033, 4
        %v1039 = vsel %vm876, %v1038, %v1021
        %v1040 = vrot.slane %v1021, 4
        %v1041 = vsel %vm876, %v1033, %v1040
        %v1042 = vsel %vm876, %v982, %v963
        %v1044 = vunpack.c.l.s4 1983009808
        %v1045 = vunpack.c.0.s8 %v1044
        %v1046 = vperm.slane %v1042, %v1045
        %v1047 = vrot.slane %v983, 4
        %v1048 = vsel %vm876, %v1047, %v981
        %v1050 = vunpack.c.l.s4 1983009808
        %v1051 = vunpack.c.0.s8 %v1050
        %v1052 = vperm.slane %v1048, %v1051
        %v1053 = vsel %vm876, %v986, %v975
        %v1055 = vunpack.c.l.s4 1983009808
        %v1056 = vunpack.c.0.s8 %v1055
        %v1057 = vperm.slane %v1053, %v1056
        %v1058 = vrot.slane %v987, 4
        %v1059 = vsel %vm876, %v1058, %v985
        %v1061 = vunpack.c.l.s4 1983009808
        %v1062 = vunpack.c.0.s8 %v1061
        %v1063 = vperm.slane %v1059, %v1062
        %v1064 = vrot.slane %v1052, 4
        %v1065 = vsel %vm876, %v1064, %v1046
        %v1066 = vrot.slane %v1046, 4
        %v1067 = vsel %vm876, %v1052, %v1066
        %v1069 = vunpack.c.l.s4 1934713408
        %v1070 = vunpack.c.0.s8 %v1069
        %v1071 = vperm.slane %v1065, %v1070
        %v1073 = vunpack.c.l.s4 1934713408
        %v1074 = vunpack.c.0.s8 %v1073
        %v1075 = vperm.slane %v1067, %v1074
        %v1076 = vrot.slane %v1063, 4
        %v1077 = vsel %vm876, %v1076, %v1057
        %v1078 = vrot.slane %v1057, 4
        %v1079 = vsel %vm876, %v1063, %v1078
        %v1081 = vunpack.c.l.s4 1934713408
        %v1082 = vunpack.c.0.s8 %v1081
        %v1083 = vperm.slane %v1077, %v1082
        %v1085 = vunpack.c.l.s4 1934713408
        %v1086 = vunpack.c.0.s8 %v1085
        %v1087 = vperm.slane %v1079, %v1086
        %v1088 = vrot.slane %v1083, 4
        %v1089 = vsel %vm876, %v1088, %v1071
        %v1090 = vrot.slane %v1071, 4
        %v1091 = vsel %vm876, %v1083, %v1090
        %v1092 = vrot.slane %v1087, 4
        %v1093 = vsel %vm876, %v1092, %v1075
        %v1094 = vrot.slane %v1075, 4
        %v1095 = vsel %vm876, %v1087, %v1094
        %1098 = vrot.lane.b32.xlu0 %v834, 96
        %v1099 = vpop.permute.xlu0 %1098
        %1100 = vrot.lane.b32.xlu0 %v836, 96
        %v1101 = vpop.permute.xlu0 %1100
        %1104 = vrot.lane.b32.xlu0 %v834, 64
        %v1105 = vpop.permute.xlu0 %1104
        %1106 = vrot.lane.b32.xlu0 %v836, 64
        %v1107 = vpop.permute.xlu0 %1106
        %1110 = vrot.lane.b32.xlu0 %v834, 32
        %v1111 = vpop.permute.xlu0 %1110
        %1112 = vrot.lane.b32.xlu0 %v836, 32
        %v1113 = vpop.permute.xlu0 %1112
        %v1116 = vrot.slane %v1105, 4
        %v1117 = vsel %vm876, %v1116, %v834
        %v1118 = vrot.slane %v834, 4
        %v1119 = vsel %vm876, %v1105, %v1118
        %v1121 = vunpack.c.l.s4 1983009808
        %v1122 = vunpack.c.0.s8 %v1121
        %v1123 = vperm.slane %v1117, %v1122
        %v1125 = vunpack.c.l.s4 1983009808
        %v1126 = vunpack.c.0.s8 %v1125
        %v1127 = vperm.slane %v1119, %v1126
        %v1128 = vrot.slane %v1111, 4
        %v1129 = vsel %vm876, %v1128, %v1099
        %v1130 = vrot.slane %v1099, 4
        %v1131 = vsel %vm876, %v1111, %v1130
        %v1133 = vunpack.c.l.s4 1983009808
        %v1134 = vunpack.c.0.s8 %v1133
        %v1135 = vperm.slane %v1129, %v1134
        %v1137 = vunpack.c.l.s4 1983009808
        %v1138 = vunpack.c.0.s8 %v1137
        %v1139 = vperm.slane %v1131, %v1138
        %v1140 = vrot.slane %v1135, 4
        %v1141 = vsel %vm876, %v1140, %v1123
        %v1142 = vrot.slane %v1123, 4
        %v1143 = vsel %vm876, %v1135, %v1142
        %v1145 = vunpack.c.l.s4 1934713408
        %v1146 = vunpack.c.0.s8 %v1145
        %v1147 = vperm.slane %v1141, %v1146
        %v1149 = vunpack.c.l.s4 1934713408
        %v1150 = vunpack.c.0.s8 %v1149
        %v1151 = vperm.slane %v1143, %v1150
        %v1152 = vrot.slane %v1139, 4
        %v1153 = vsel %vm876, %v1152, %v1127
        %v1154 = vrot.slane %v1127, 4
        %v1155 = vsel %vm876, %v1139, %v1154
        %v1157 = vunpack.c.l.s4 1934713408
        %v1158 = vunpack.c.0.s8 %v1157
        %v1159 = vperm.slane %v1153, %v1158
        %v1161 = vunpack.c.l.s4 1934713408
        %v1162 = vunpack.c.0.s8 %v1161
        %v1163 = vperm.slane %v1155, %v1162
        %v1164 = vrot.slane %v1147, 4
        %v1165 = vsel %vm876, 0.0, %v1164
        %v1166 = vrot.slane %v1151, 4
        %v1167 = vsel %vm876, 0.0, %v1166
        %v1168 = vrot.slane %v1159, 4
        %v1169 = vsel %vm876, 0.0, %v1168
        %v1170 = vrot.slane %v1163, 4
        %v1171 = vsel %vm876, 0.0, %v1170
        %v1172 = vrot.slane %v1107, 4
        %v1173 = vsel %vm876, %v1172, %v836
        %v1174 = vrot.slane %v836, 4
        %v1175 = vsel %vm876, %v1107, %v1174
        %v1177 = vunpack.c.l.s4 1983009808
        %v1178 = vunpack.c.0.s8 %v1177
        %v1179 = vperm.slane %v1173, %v1178
        %v1181 = vunpack.c.l.s4 1983009808
        %v1182 = vunpack.c.0.s8 %v1181
        %v1183 = vperm.slane %v1175, %v1182
        %v1184 = vrot.slane %v1113, 4
        %v1185 = vsel %vm876, %v1184, %v1101
        %v1186 = vrot.slane %v1101, 4
        %v1187 = vsel %vm876, %v1113, %v1186
        %v1189 = vunpack.c.l.s4 1983009808
        %v1190 = vunpack.c.0.s8 %v1189
        %v1191 = vperm.slane %v1185, %v1190
        %v1193 = vunpack.c.l.s4 1983009808
        %v1194 = vunpack.c.0.s8 %v1193
        %v1195 = vperm.slane %v1187, %v1194
        %v1196 = vrot.slane %v1191, 4
        %v1197 = vsel %vm876, %v1196, %v1179
        %v1198 = vrot.slane %v1179, 4
        %v1199 = vsel %vm876, %v1191, %v1198
        %v1201 = vunpack.c.l.s4 1934713408
        %v1202 = vunpack.c.0.s8 %v1201
        %v1203 = vperm.slane %v1197, %v1202
        %v1205 = vunpack.c.l.s4 1934713408
        %v1206 = vunpack.c.0.s8 %v1205
        %v1207 = vperm.slane %v1199, %v1206
        %v1208 = vrot.slane %v1195, 4
        %v1209 = vsel %vm876, %v1208, %v1183
        %v1210 = vrot.slane %v1183, 4
        %v1211 = vsel %vm876, %v1195, %v1210
        %v1213 = vunpack.c.l.s4 1934713408
        %v1214 = vunpack.c.0.s8 %v1213
        %v1215 = vperm.slane %v1209, %v1214
        %v1217 = vunpack.c.l.s4 1934713408
        %v1218 = vunpack.c.0.s8 %v1217
        %v1219 = vperm.slane %v1211, %v1218
        %v1220 = vrot.slane %v1203, 4
        %v1221 = vsel %vm876, 0.0, %v1220
        %v1222 = vrot.slane %v1207, 4
        %v1223 = vsel %vm876, 0.0, %v1222
        %v1224 = vrot.slane %v1215, 4
        %v1225 = vsel %vm876, 0.0, %v1224
        %v1226 = vrot.slane %v1219, 4
        %v1227 = vsel %vm876, 0.0, %v1226
        %v1228 = vsel %vm876, %v1166, %v1147
        %v1230 = vunpack.c.l.s4 1983009808
        %v1231 = vunpack.c.0.s8 %v1230
        %v1232 = vperm.slane %v1228, %v1231
        %v1233 = vrot.slane %v1167, 4
        %v1234 = vsel %vm876, %v1233, %v1165
        %v1236 = vunpack.c.l.s4 1983009808
        %v1237 = vunpack.c.0.s8 %v1236
        %v1238 = vperm.slane %v1234, %v1237
        %v1239 = vsel %vm876, %v1170, %v1159
        %v1241 = vunpack.c.l.s4 1983009808
        %v1242 = vunpack.c.0.s8 %v1241
        %v1243 = vperm.slane %v1239, %v1242
        %v1244 = vrot.slane %v1171, 4
        %v1245 = vsel %vm876, %v1244, %v1169
        %v1247 = vunpack.c.l.s4 1983009808
        %v1248 = vunpack.c.0.s8 %v1247
        %v1249 = vperm.slane %v1245, %v1248
        %v1250 = vrot.slane %v1238, 4
        %v1251 = vsel %vm876, %v1250, %v1232
        %v1252 = vrot.slane %v1232, 4
        %v1253 = vsel %vm876, %v1238, %v1252
        %v1255 = vunpack.c.l.s4 1934713408
        %v1256 = vunpack.c.0.s8 %v1255
        %v1257 = vperm.slane %v1251, %v1256
        %v1259 = vunpack.c.l.s4 1934713408
        %v1260 = vunpack.c.0.s8 %v1259
        %v1261 = vperm.slane %v1253, %v1260
        %v1262 = vrot.slane %v1249, 4
        %v1263 = vsel %vm876, %v1262, %v1243
        %v1264 = vrot.slane %v1243, 4
        %v1265 = vsel %vm876, %v1249, %v1264
        %v1267 = vunpack.c.l.s4 1934713408
        %v1268 = vunpack.c.0.s8 %v1267
        %v1269 = vperm.slane %v1263, %v1268
        %v1271 = vunpack.c.l.s4 1934713408
        %v1272 = vunpack.c.0.s8 %v1271
        %v1273 = vperm.slane %v1265, %v1272
        %v1274 = vrot.slane %v1269, 4
        %v1275 = vsel %vm876, %v1274, %v1257
        %v1276 = vrot.slane %v1257, 4
        %v1277 = vsel %vm876, %v1269, %v1276
        %v1278 = vrot.slane %v1273, 4
        %v1279 = vsel %vm876, %v1278, %v1261
        %v1280 = vrot.slane %v1261, 4
        %v1281 = vsel %vm876, %v1273, %v1280
        %v1282 = vsel %vm876, %v1222, %v1203
        %v1284 = vunpack.c.l.s4 1983009808
        %v1285 = vunpack.c.0.s8 %v1284
        %v1286 = vperm.slane %v1282, %v1285
        %v1287 = vrot.slane %v1223, 4
        %v1288 = vsel %vm876, %v1287, %v1221
        %v1290 = vunpack.c.l.s4 1983009808
        %v1291 = vunpack.c.0.s8 %v1290
        %v1292 = vperm.slane %v1288, %v1291
        %v1293 = vsel %vm876, %v1226, %v1215
        %v1295 = vunpack.c.l.s4 1983009808
        %v1296 = vunpack.c.0.s8 %v1295
        %v1297 = vperm.slane %v1293, %v1296
        %v1298 = vrot.slane %v1227, 4
        %v1299 = vsel %vm876, %v1298, %v1225
        %v1301 = vunpack.c.l.s4 1983009808
        %v1302 = vunpack.c.0.s8 %v1301
        %v1303 = vperm.slane %v1299, %v1302
        %v1304 = vrot.slane %v1292, 4
        %v1305 = vsel %vm876, %v1304, %v1286
        %v1306 = vrot.slane %v1286, 4
        %v1307 = vsel %vm876, %v1292, %v1306
        %v1309 = vunpack.c.l.s4 1934713408
        %v1310 = vunpack.c.0.s8 %v1309
        %v1311 = vperm.slane %v1305, %v1310
        %v1313 = vunpack.c.l.s4 1934713408
        %v1314 = vunpack.c.0.s8 %v1313
        %v1315 = vperm.slane %v1307, %v1314
        %v1316 = vrot.slane %v1303, 4
        %v1317 = vsel %vm876, %v1316, %v1297
        %v1318 = vrot.slane %v1297, 4
        %v1319 = vsel %vm876, %v1303, %v1318
        %v1321 = vunpack.c.l.s4 1934713408
        %v1322 = vunpack.c.0.s8 %v1321
        %v1323 = vperm.slane %v1317, %v1322
        %v1325 = vunpack.c.l.s4 1934713408
        %v1326 = vunpack.c.0.s8 %v1325
        %v1327 = vperm.slane %v1319, %v1326
        %v1328 = vrot.slane %v1323, 4
        %v1329 = vsel %vm876, %v1328, %v1311
        %v1330 = vrot.slane %v1311, 4
        %v1331 = vsel %vm876, %v1323, %v1330
        %v1332 = vrot.slane %v1327, 4
        %v1333 = vsel %vm876, %v1332, %v1315
        %v1334 = vrot.slane %v1315, 4
        %v1335 = vsel %vm876, %v1327, %v1334
        %1338 = vrot.lane.b32.xlu0 %v848, 96
        %v1339 = vpop.permute.xlu0 %1338
        %1340 = vrot.lane.b32.xlu0 %v850, 96
        %v1341 = vpop.permute.xlu0 %1340
        %1344 = vrot.lane.b32.xlu0 %v848, 64
        %v1345 = vpop.permute.xlu0 %1344
        %1346 = vrot.lane.b32.xlu0 %v850, 64
        %v1347 = vpop.permute.xlu0 %1346
        %1350 = vrot.lane.b32.xlu0 %v848, 32
        %v1351 = vpop.permute.xlu0 %1350
        %1352 = vrot.lane.b32.xlu0 %v850, 32
        %v1353 = vpop.permute.xlu0 %1352
        %v1356 = vrot.slane %v1345, 4
        %v1357 = vsel %vm876, %v1356, %v848
        %v1358 = vrot.slane %v848, 4
        %v1359 = vsel %vm876, %v1345, %v1358
        %v1361 = vunpack.c.l.s4 1983009808
        %v1362 = vunpack.c.0.s8 %v1361
        %v1363 = vperm.slane %v1357, %v1362
        %v1365 = vunpack.c.l.s4 1983009808
        %v1366 = vunpack.c.0.s8 %v1365
        %v1367 = vperm.slane %v1359, %v1366
        %v1368 = vrot.slane %v1351, 4
        %v1369 = vsel %vm876, %v1368, %v1339
        %v1370 = vrot.slane %v1339, 4
        %v1371 = vsel %vm876, %v1351, %v1370
        %v1373 = vunpack.c.l.s4 1983009808
        %v1374 = vunpack.c.0.s8 %v1373
        %v1375 = vperm.slane %v1369, %v1374
        %v1377 = vunpack.c.l.s4 1983009808
        %v1378 = vunpack.c.0.s8 %v1377
        %v1379 = vperm.slane %v1371, %v1378
        %v1380 = vrot.slane %v1375, 4
        %v1381 = vsel %vm876, %v1380, %v1363
        %v1382 = vrot.slane %v1363, 4
        %v1383 = vsel %vm876, %v1375, %v1382
        %v1385 = vunpack.c.l.s4 1934713408
        %v1386 = vunpack.c.0.s8 %v1385
        %v1387 = vperm.slane %v1381, %v1386
        %v1389 = vunpack.c.l.s4 1934713408
        %v1390 = vunpack.c.0.s8 %v1389
        %v1391 = vperm.slane %v1383, %v1390
        %v1392 = vrot.slane %v1379, 4
        %v1393 = vsel %vm876, %v1392, %v1367
        %v1394 = vrot.slane %v1367, 4
        %v1395 = vsel %vm876, %v1379, %v1394
        %v1397 = vunpack.c.l.s4 1934713408
        %v1398 = vunpack.c.0.s8 %v1397
        %v1399 = vperm.slane %v1393, %v1398
        %v1401 = vunpack.c.l.s4 1934713408
        %v1402 = vunpack.c.0.s8 %v1401
        %v1403 = vperm.slane %v1395, %v1402
        %v1404 = vrot.slane %v1387, 4
        %v1405 = vsel %vm876, 0.0, %v1404
        %v1406 = vrot.slane %v1391, 4
        %v1407 = vsel %vm876, 0.0, %v1406
        %v1408 = vrot.slane %v1399, 4
        %v1409 = vsel %vm876, 0.0, %v1408
        %v1410 = vrot.slane %v1403, 4
        %v1411 = vsel %vm876, 0.0, %v1410
        %v1412 = vrot.slane %v1347, 4
        %v1413 = vsel %vm876, %v1412, %v850
        %v1414 = vrot.slane %v850, 4
        %v1415 = vsel %vm876, %v1347, %v1414
        %v1417 = vunpack.c.l.s4 1983009808
        %v1418 = vunpack.c.0.s8 %v1417
        %v1419 = vperm.slane %v1413, %v1418
        %v1421 = vunpack.c.l.s4 1983009808
        %v1422 = vunpack.c.0.s8 %v1421
        %v1423 = vperm.slane %v1415, %v1422
        %v1424 = vrot.slane %v1353, 4
        %v1425 = vsel %vm876, %v1424, %v1341
        %v1426 = vrot.slane %v1341, 4
        %v1427 = vsel %vm876, %v1353, %v1426
        %v1429 = vunpack.c.l.s4 1983009808
        %v1430 = vunpack.c.0.s8 %v1429
        %v1431 = vperm.slane %v1425, %v1430
        %v1433 = vunpack.c.l.s4 1983009808
        %v1434 = vunpack.c.0.s8 %v1433
        %v1435 = vperm.slane %v1427, %v1434
        %v1436 = vrot.slane %v1431, 4
        %v1437 = vsel %vm876, %v1436, %v1419
        %v1438 = vrot.slane %v1419, 4
        %v1439 = vsel %vm876, %v1431, %v1438
        %v1441 = vunpack.c.l.s4 1934713408
        %v1442 = vunpack.c.0.s8 %v1441
        %v1443 = vperm.slane %v1437, %v1442
        %v1445 = vunpack.c.l.s4 1934713408
        %v1446 = vunpack.c.0.s8 %v1445
        %v1447 = vperm.slane %v1439, %v1446
        %v1448 = vrot.slane %v1435, 4
        %v1449 = vsel %vm876, %v1448, %v1423
        %v1450 = vrot.slane %v1423, 4
        %v1451 = vsel %vm876, %v1435, %v1450
        %v1453 = vunpack.c.l.s4 1934713408
        %v1454 = vunpack.c.0.s8 %v1453
        %v1455 = vperm.slane %v1449, %v1454
        %v1457 = vunpack.c.l.s4 1934713408
        %v1458 = vunpack.c.0.s8 %v1457
        %v1459 = vperm.slane %v1451, %v1458
        %v1460 = vrot.slane %v1443, 4
        %v1461 = vsel %vm876, 0.0, %v1460
        %v1462 = vrot.slane %v1447, 4
        %v1463 = vsel %vm876, 0.0, %v1462
        %v1464 = vrot.slane %v1455, 4
        %v1465 = vsel %vm876, 0.0, %v1464
        %v1466 = vrot.slane %v1459, 4
        %v1467 = vsel %vm876, 0.0, %v1466
        %v1468 = vsel %vm876, %v1406, %v1387
        %v1470 = vunpack.c.l.s4 1983009808
        %v1471 = vunpack.c.0.s8 %v1470
        %v1472 = vperm.slane %v1468, %v1471
        %v1473 = vrot.slane %v1407, 4
        %v1474 = vsel %vm876, %v1473, %v1405
        %v1476 = vunpack.c.l.s4 1983009808
        %v1477 = vunpack.c.0.s8 %v1476
        %v1478 = vperm.slane %v1474, %v1477
        %v1479 = vsel %vm876, %v1410, %v1399
        %v1481 = vunpack.c.l.s4 1983009808
        %v1482 = vunpack.c.0.s8 %v1481
        %v1483 = vperm.slane %v1479, %v1482
        %v1484 = vrot.slane %v1411, 4
        %v1485 = vsel %vm876, %v1484, %v1409
        %v1487 = vunpack.c.l.s4 1983009808
        %v1488 = vunpack.c.0.s8 %v1487
        %v1489 = vperm.slane %v1485, %v1488
        %v1490 = vrot.slane %v1478, 4
        %v1491 = vsel %vm876, %v1490, %v1472
        %v1492 = vrot.slane %v1472, 4
        %v1493 = vsel %vm876, %v1478, %v1492
        %v1495 = vunpack.c.l.s4 1934713408
        %v1496 = vunpack.c.0.s8 %v1495
        %v1497 = vperm.slane %v1491, %v1496
        %v1499 = vunpack.c.l.s4 1934713408
        %v1500 = vunpack.c.0.s8 %v1499
        %v1501 = vperm.slane %v1493, %v1500
        %v1502 = vrot.slane %v1489, 4
        %v1503 = vsel %vm876, %v1502, %v1483
        %v1504 = vrot.slane %v1483, 4
        %v1505 = vsel %vm876, %v1489, %v1504
        %v1507 = vunpack.c.l.s4 1934713408
        %v1508 = vunpack.c.0.s8 %v1507
        %v1509 = vperm.slane %v1503, %v1508
        %v1511 = vunpack.c.l.s4 1934713408
        %v1512 = vunpack.c.0.s8 %v1511
        %v1513 = vperm.slane %v1505, %v1512
        %v1514 = vrot.slane %v1509, 4
        %v1515 = vsel %vm876, %v1514, %v1497
        %v1516 = vrot.slane %v1497, 4
        %v1517 = vsel %vm876, %v1509, %v1516
        %v1518 = vrot.slane %v1513, 4
        %v1519 = vsel %vm876, %v1518, %v1501
        %v1520 = vrot.slane %v1501, 4
        %v1521 = vsel %vm876, %v1513, %v1520
        %v1522 = vsel %vm876, %v1462, %v1443
        %v1524 = vunpack.c.l.s4 1983009808
        %v1525 = vunpack.c.0.s8 %v1524
        %v1526 = vperm.slane %v1522, %v1525
        %v1527 = vrot.slane %v1463, 4
        %v1528 = vsel %vm876, %v1527, %v1461
        %v1530 = vunpack.c.l.s4 1983009808
        %v1531 = vunpack.c.0.s8 %v1530
        %v1532 = vperm.slane %v1528, %v1531
        %v1533 = vsel %vm876, %v1466, %v1455
        %v1535 = vunpack.c.l.s4 1983009808
        %v1536 = vunpack.c.0.s8 %v1535
        %v1537 = vperm.slane %v1533, %v1536
        %v1538 = vrot.slane %v1467, 4
        %v1539 = vsel %vm876, %v1538, %v1465
        %v1541 = vunpack.c.l.s4 1983009808
        %v1542 = vunpack.c.0.s8 %v1541
        %v1543 = vperm.slane %v1539, %v1542
        %v1544 = vrot.slane %v1532, 4
        %v1545 = vsel %vm876, %v1544, %v1526
        %v1546 = vrot.slane %v1526, 4
        %v1547 = vsel %vm876, %v1532, %v1546
        %v1549 = vunpack.c.l.s4 1934713408
        %v1550 = vunpack.c.0.s8 %v1549
        %v1551 = vperm.slane %v1545, %v1550
        %v1553 = vunpack.c.l.s4 1934713408
        %v1554 = vunpack.c.0.s8 %v1553
        %v1555 = vperm.slane %v1547, %v1554
        %v1556 = vrot.slane %v1543, 4
        %v1557 = vsel %vm876, %v1556, %v1537
        %v1558 = vrot.slane %v1537, 4
        %v1559 = vsel %vm876, %v1543, %v1558
        %v1561 = vunpack.c.l.s4 1934713408
        %v1562 = vunpack.c.0.s8 %v1561
        %v1563 = vperm.slane %v1557, %v1562
        %v1565 = vunpack.c.l.s4 1934713408
        %v1566 = vunpack.c.0.s8 %v1565
        %v1567 = vperm.slane %v1559, %v1566
        %v1568 = vrot.slane %v1563, 4
        %v1569 = vsel %vm876, %v1568, %v1551
        %v1570 = vrot.slane %v1551, 4
        %v1571 = vsel %vm876, %v1563, %v1570
        %v1572 = vrot.slane %v1567, 4
        %v1573 = vsel %vm876, %v1572, %v1555
        %v1574 = vrot.slane %v1555, 4
        %v1575 = vsel %vm876, %v1567, %v1574
        %v1576 = vpack.c.bf16 %v1035, %v1035
        %v1577 = vpack.c.bf16 %v1089, %v1089
        %v1578 = vpack.c.bf16 %v1037, %v1037
        %v1579 = vpack.c.bf16 %v1091, %v1091
        %v1580 = vpack.c.bf16 %v1039, %v1039
        %v1581 = vpack.c.bf16 %v1093, %v1093
        %v1582 = vpack.c.bf16 %v1041, %v1041
        %v1583 = vpack.c.bf16 %v1095, %v1095
        %v1584 = vpack.c.bf16 %v1275, %v1275
        %v1585 = vpack.c.bf16 %v1329, %v1329
        %v1586 = vpack.c.bf16 %v1277, %v1277
        %v1587 = vpack.c.bf16 %v1331, %v1331
        %v1588 = vpack.c.bf16 %v1279, %v1279
        %v1589 = vpack.c.bf16 %v1333, %v1333
        %v1590 = vpack.c.bf16 %v1281, %v1281
        %v1591 = vpack.c.bf16 %v1335, %v1335
        %v1594 = vunpack.c.l.b16 %v1576
        %v1595 = vunpack.c.l.b16 %v1577
        %v1596 = vpack.c.b16 %v1595, %v1594
        %v1599 = vunpack.c.l.b16 %v1584
        %v1600 = vunpack.c.l.b16 %v1585
        %v1601 = vpack.c.b16 %v1600, %v1599
        %vm1602 = vcmask 261120
        %v1604 = vsel %vm1602, %v1596, 0
        %v1607 = vsel %vm1602, %v1601, 0
        %1609 = vmatpush.bf16.xpose.msra.mxu0 0
        %1610 = vmatpush.bf16.xpose.msra.mxu0 0
        %1611 = vmatpush.bf16.xpose.msra.mxu0 0
        %1612 = vmatpush.bf16.xpose.msra.mxu0 0
        %1613 = vmatpush.bf16.xpose.msra.mxu0 0
        %1614 = vmatpush.bf16.xpose.msra.mxu0 0
        %1615 = vmatpush.bf16.xpose.msra.mxu0 0
        %1616 = vmatpush.bf16.xpose.msra.mxu0 %v1607
        %1617 = vmatmul.bf16.gmra.mxu0 %v1604
        %v1618 = vpop.f32.mrf.mxu0
        %v1619 = vadd.f32 0.0, %v1618
        %v1620 = vpop.f32.mrf.mxu0
        %v1621 = vadd.f32 0.0, %v1620
        %1622 = vdwg.mxu0
        %v1625 = vunpack.c.l.b16 %v1578
        %v1626 = vunpack.c.l.b16 %v1579
        %v1627 = vpack.c.b16 %v1626, %v1625
        %v1630 = vunpack.c.l.b16 %v1586
        %v1631 = vunpack.c.l.b16 %v1587
        %v1632 = vpack.c.b16 %v1631, %v1630
        %v1634 = vsel %vm1602, %v1627, 0
        %v1637 = vsel %vm1602, %v1632, 0
        %1639 = vmatpush.bf16.xpose.msra.mxu0 0
        %1640 = vmatpush.bf16.xpose.msra.mxu0 0
        %1641 = vmatpush.bf16.xpose.msra.mxu0 0
        %1642 = vmatpush.bf16.xpose.msra.mxu0 0
        %1643 = vmatpush.bf16.xpose.msra.mxu0 0
        %1644 = vmatpush.bf16.xpose.msra.mxu0 0
        %1645 = vmatpush.bf16.xpose.msra.mxu0 0
        %1646 = vmatpush.bf16.xpose.msra.mxu0 %v1637
        %1647 = vmatmul.bf16.gmra.mxu0 %v1634
        %v1648 = vpop.f32.mrf.mxu0
        %v1649 = vadd.f32 0.0, %v1648
        %v1650 = vpop.f32.mrf.mxu0
        %v1651 = vadd.f32 0.0, %v1650
        %1652 = vdwg.mxu0
        %v1655 = vunpack.c.l.b16 %v1580
        %v1656 = vunpack.c.l.b16 %v1581
        %v1657 = vpack.c.b16 %v1656, %v1655
        %v1660 = vunpack.c.l.b16 %v1588
        %v1661 = vunpack.c.l.b16 %v1589
        %v1662 = vpack.c.b16 %v1661, %v1660
        %v1664 = vsel %vm1602, %v1657, 0
        %v1667 = vsel %vm1602, %v1662, 0
        %1669 = vmatpush.bf16.xpose.msra.mxu0 0
        %1670 = vmatpush.bf16.xpose.msra.mxu0 0
        %1671 = vmatpush.bf16.xpose.msra.mxu0 0
        %1672 = vmatpush.bf16.xpose.msra.mxu0 0
        %1673 = vmatpush.bf16.xpose.msra.mxu0 0
        %1674 = vmatpush.bf16.xpose.msra.mxu0 0
        %1675 = vmatpush.bf16.xpose.msra.mxu0 0
        %1676 = vmatpush.bf16.xpose.msra.mxu0 %v1667
        %1677 = vmatmul.bf16.gmra.mxu0 %v1664
        %v1678 = vpop.f32.mrf.mxu0
        %v1679 = vadd.f32 0.0, %v1678
        %v1680 = vpop.f32.mrf.mxu0
        %v1681 = vadd.f32 0.0, %v1680
        %1682 = vdwg.mxu0
        %v1685 = vunpack.c.l.b16 %v1582
        %v1686 = vunpack.c.l.b16 %v1583
        %v1687 = vpack.c.b16 %v1686, %v1685
        %v1690 = vunpack.c.l.b16 %v1590
        %v1691 = vunpack.c.l.b16 %v1591
        %v1692 = vpack.c.b16 %v1691, %v1690
        %v1694 = vsel %vm1602, %v1687, 0
        %v1697 = vsel %vm1602, %v1692, 0
        %1699 = vmatpush.bf16.xpose.msra.mxu0 0
        %1700 = vmatpush.bf16.xpose.msra.mxu0 0
        %1701 = vmatpush.bf16.xpose.msra.mxu0 0
        %1702 = vmatpush.bf16.xpose.msra.mxu0 0
        %1703 = vmatpush.bf16.xpose.msra.mxu0 0
        %1704 = vmatpush.bf16.xpose.msra.mxu0 0
        %1705 = vmatpush.bf16.xpose.msra.mxu0 0
        %1706 = vmatpush.bf16.xpose.msra.mxu0 %v1697
        %1707 = vmatmul.bf16.gmra.mxu0 %v1694
        %v1708 = vpop.f32.mrf.mxu0
        %v1709 = vadd.f32 0.0, %v1708
        %v1710 = vpop.f32.mrf.mxu0
        %v1711 = vadd.f32 0.0, %v1710
        %1712 = vdwg.mxu0
        %v1713 = vmul.f32 %v1619, 0.17677669
        %v1714 = vmul.f32 %v1621, 0.17677669
        %v1715 = vmul.f32 %v1649, 0.17677669
        %v1716 = vmul.f32 %v1651, 0.17677669
        %v1717 = vmul.f32 %v1679, 0.17677669
        %v1718 = vmul.f32 %v1681, 0.17677669
        %v1719 = vmul.f32 %v1709, 0.17677669
        %v1720 = vmul.f32 %v1711, 0.17677669
        %v1722 = vperm.slane %v854, 0
        %v1724 = vadd.f32 %v1713, %v1722
        %v1725 = vadd.f32 %v1714, %v1722
        %v1726 = vadd.f32 %v1715, %v1722
        %v1727 = vadd.f32 %v1716, %v1722
        %v1728 = vadd.f32 %v1717, %v1722
        %v1729 = vadd.f32 %v1718, %v1722
        %v1730 = vadd.f32 %v1719, %v1722
        %v1731 = vadd.f32 %v1720, %v1722
        %vm1732 = vcmask 130048
        %v1733 = vsel %vm1732, %v1724, -inf
        %1734 = vmax.xlane.f32.xlu0 %v1733
        %v1735 = vpop.xlane.xlu0 %1734
        %v1736 = vsel %vm1732, %v1725, -inf
        %1737 = vmax.xlane.f32.xlu0 %v1736
        %v1738 = vpop.xlane.xlu0 %1737
        %v1739 = vsel %vm1732, %v1726, -inf
        %1740 = vmax.xlane.f32.xlu0 %v1739
        %v1741 = vpop.xlane.xlu0 %1740
        %v1742 = vsel %vm1732, %v1727, -inf
        %1743 = vmax.xlane.f32.xlu0 %v1742
        %v1744 = vpop.xlane.xlu0 %1743
        %v1745 = vsel %vm1732, %v1728, -inf
        %1746 = vmax.xlane.f32.xlu0 %v1745
        %v1747 = vpop.xlane.xlu0 %1746
        %v1748 = vsel %vm1732, %v1729, -inf
        %1749 = vmax.xlane.f32.xlu0 %v1748
        %v1750 = vpop.xlane.xlu0 %1749
        %v1751 = vsel %vm1732, %v1730, -inf
        %1752 = vmax.xlane.f32.xlu0 %v1751
        %v1753 = vpop.xlane.xlu0 %1752
        %v1754 = vsel %vm1732, %v1731, -inf
        %1755 = vmax.xlane.f32.xlu0 %v1754
        %v1756 = vpop.xlane.xlu0 %1755
        %v1757 = vsub.f32 %v1724, %v1735
        %v1758 = vsub.f32 %v1725, %v1738
        %v1759 = vsub.f32 %v1726, %v1741
        %v1760 = vsub.f32 %v1727, %v1744
        %v1761 = vsub.f32 %v1728, %v1747
        %v1762 = vsub.f32 %v1729, %v1750
        %v1763 = vsub.f32 %v1730, %v1753
        %v1764 = vsub.f32 %v1731, %v1756
        %v1765 = vmul.f32 %v1757, 1.442695
        %v1766 = vpow.pop %v1765
        %v1767 = vmul.f32 %v1758, 1.442695
        %v1768 = vpow.pop %v1767
        %v1769 = vmul.f32 %v1759, 1.442695
        %v1770 = vpow.pop %v1769
        %v1771 = vmul.f32 %v1760, 1.442695
        %v1772 = vpow.pop %v1771
        %v1773 = vmul.f32 %v1761, 1.442695
        %v1774 = vpow.pop %v1773
        %v1775 = vmul.f32 %v1762, 1.442695
        %v1776 = vpow.pop %v1775
        %v1777 = vmul.f32 %v1763, 1.442695
        %v1778 = vpow.pop %v1777
        %v1779 = vmul.f32 %v1764, 1.442695
        %v1780 = vpow.pop %v1779
        %v1781 = vsel %vm1732, %v1766, 0.0
        %1782 = vadd.xlane.f32.xlu0 %v1781
        %v1783 = vpop.xlane.xlu0 %1782
        %v1784 = vsel %vm1732, %v1768, 0.0
        %1785 = vadd.xlane.f32.xlu0 %v1784
        %v1786 = vpop.xlane.xlu0 %1785
        %v1787 = vsel %vm1732, %v1770, 0.0
        %1788 = vadd.xlane.f32.xlu0 %v1787
        %v1789 = vpop.xlane.xlu0 %1788
        %v1790 = vsel %vm1732, %v1772, 0.0
        %1791 = vadd.xlane.f32.xlu0 %v1790
        %v1792 = vpop.xlane.xlu0 %1791
        %v1793 = vsel %vm1732, %v1774, 0.0
        %1794 = vadd.xlane.f32.xlu0 %v1793
        %v1795 = vpop.xlane.xlu0 %1794
        %v1796 = vsel %vm1732, %v1776, 0.0
        %1797 = vadd.xlane.f32.xlu0 %v1796
        %v1798 = vpop.xlane.xlu0 %1797
        %v1799 = vsel %vm1732, %v1778, 0.0
        %1800 = vadd.xlane.f32.xlu0 %v1799
        %v1801 = vpop.xlane.xlu0 %1800
        %v1802 = vsel %vm1732, %v1780, 0.0
        %1803 = vadd.xlane.f32.xlu0 %v1802
        %v1804 = vpop.xlane.xlu0 %1803
        %v1805 = vrcp.pop %v1783
        %v1806 = vrcp.pop %v1786
        %v1807 = vrcp.pop %v1789
        %v1808 = vrcp.pop %v1792
        %v1809 = vrcp.pop %v1795
        %v1810 = vrcp.pop %v1798
        %v1811 = vrcp.pop %v1801
        %v1812 = vrcp.pop %v1804
        %v1813 = vmul.f32 %v1766, %v1805
        %v1814 = vmul.f32 %v1768, %v1806
        %v1815 = vmul.f32 %v1770, %v1807
        %v1816 = vmul.f32 %v1772, %v1808
        %v1817 = vmul.f32 %v1774, %v1809
        %v1818 = vmul.f32 %v1776, %v1810
        %v1819 = vmul.f32 %v1778, %v1811
        %v1820 = vmul.f32 %v1780, %v1812
        %v1821 = vpack.c.bf16 %v1813, %v1813
        %v1822 = vpack.c.bf16 %v1814, %v1814
        %v1823 = vpack.c.bf16 %v1815, %v1815
        %v1824 = vpack.c.bf16 %v1816, %v1816
        %v1825 = vpack.c.bf16 %v1817, %v1817
        %v1826 = vpack.c.bf16 %v1818, %v1818
        %v1827 = vpack.c.bf16 %v1819, %v1819
        %v1828 = vpack.c.bf16 %v1820, %v1820
        %v1829 = vpack.c.bf16 %v1515, %v1515
        %v1830 = vpack.c.bf16 %v1569, %v1569
        %v1831 = vpack.c.bf16 %v1517, %v1517
        %v1832 = vpack.c.bf16 %v1571, %v1571
        %v1833 = vpack.c.bf16 %v1519, %v1519
        %v1834 = vpack.c.bf16 %v1573, %v1573
        %v1835 = vpack.c.bf16 %v1521, %v1521
        %v1836 = vpack.c.bf16 %v1575, %v1575
        %v1839 = vunpack.c.l.b16 %v1821
        %v1840 = vunpack.c.l.b16 %v1822
        %v1841 = vpack.c.b16 %v1840, %v1839
        %v1844 = vunpack.c.l.b16 %v1829
        %v1845 = vunpack.c.l.b16 %v1830
        %v1846 = vpack.c.b16 %v1845, %v1844
        %v1849 = vsel %vm1732, %v1841, 0
        %1851 = vmatpush.bf16.msra.mxu0 0
        %1852 = vmatpush.bf16.msra.mxu0 0
        %1853 = vmatpush.bf16.msra.mxu0 0
        %1854 = vmatpush.bf16.msra.mxu0 0
        %1855 = vmatpush.bf16.msra.mxu0 0
        %1856 = vmatpush.bf16.msra.mxu0 0
        %1857 = vmatpush.bf16.msra.mxu0 0
        %1858 = vmatpush.bf16.msra.mxu0 %v1846
        %1859 = vmatmul.bf16.gmra.mxu0 %v1849
        %v1860 = vpop.f32.mrf.mxu0
        %v1861 = vadd.f32 0.0, %v1860
        %v1862 = vpop.f32.mrf.mxu0
        %v1863 = vadd.f32 0.0, %v1862
        %1864 = vdwg.mxu0
        %v1867 = vunpack.c.l.b16 %v1823
        %v1868 = vunpack.c.l.b16 %v1824
        %v1869 = vpack.c.b16 %v1868, %v1867
        %v1872 = vunpack.c.l.b16 %v1831
        %v1873 = vunpack.c.l.b16 %v1832
        %v1874 = vpack.c.b16 %v1873, %v1872
        %v1877 = vsel %vm1732, %v1869, 0
        %1879 = vmatpush.bf16.msra.mxu0 0
        %1880 = vmatpush.bf16.msra.mxu0 0
        %1881 = vmatpush.bf16.msra.mxu0 0
        %1882 = vmatpush.bf16.msra.mxu0 0
        %1883 = vmatpush.bf16.msra.mxu0 0
        %1884 = vmatpush.bf16.msra.mxu0 0
        %1885 = vmatpush.bf16.msra.mxu0 0
        %1886 = vmatpush.bf16.msra.mxu0 %v1874
        %1887 = vmatmul.bf16.gmra.mxu0 %v1877
        %v1888 = vpop.f32.mrf.mxu0
        %v1889 = vadd.f32 0.0, %v1888
        %v1890 = vpop.f32.mrf.mxu0
        %v1891 = vadd.f32 0.0, %v1890
        %1892 = vdwg.mxu0
        %v1895 = vunpack.c.l.b16 %v1825
        %v1896 = vunpack.c.l.b16 %v1826
        %v1897 = vpack.c.b16 %v1896, %v1895
        %v1900 = vunpack.c.l.b16 %v1833
        %v1901 = vunpack.c.l.b16 %v1834
        %v1902 = vpack.c.b16 %v1901, %v1900
        %v1905 = vsel %vm1732, %v1897, 0
        %1907 = vmatpush.bf16.msra.mxu0 0
        %1908 = vmatpush.bf16.msra.mxu0 0
        %1909 = vmatpush.bf16.msra.mxu0 0
        %1910 = vmatpush.bf16.msra.mxu0 0
        %1911 = vmatpush.bf16.msra.mxu0 0
        %1912 = vmatpush.bf16.msra.mxu0 0
        %1913 = vmatpush.bf16.msra.mxu0 0
        %1914 = vmatpush.bf16.msra.mxu0 %v1902
        %1915 = vmatmul.bf16.gmra.mxu0 %v1905
        %v1916 = vpop.f32.mrf.mxu0
        %v1917 = vadd.f32 0.0, %v1916
        %v1918 = vpop.f32.mrf.mxu0
        %v1919 = vadd.f32 0.0, %v1918
        %1920 = vdwg.mxu0
        %v1923 = vunpack.c.l.b16 %v1827
        %v1924 = vunpack.c.l.b16 %v1828
        %v1925 = vpack.c.b16 %v1924, %v1923
        %v1928 = vunpack.c.l.b16 %v1835
        %v1929 = vunpack.c.l.b16 %v1836
        %v1930 = vpack.c.b16 %v1929, %v1928
        %v1933 = vsel %vm1732, %v1925, 0
        %1935 = vmatpush.bf16.msra.mxu0 0
        %1936 = vmatpush.bf16.msra.mxu0 0
        %1937 = vmatpush.bf16.msra.mxu0 0
        %1938 = vmatpush.bf16.msra.mxu0 0
        %1939 = vmatpush.bf16.msra.mxu0 0
        %1940 = vmatpush.bf16.msra.mxu0 0
        %1941 = vmatpush.bf16.msra.mxu0 0
        %1942 = vmatpush.bf16.msra.mxu0 %v1930
        %1943 = vmatmul.bf16.gmra.mxu0 %v1933
        %v1944 = vpop.f32.mrf.mxu0
        %v1945 = vadd.f32 0.0, %v1944
        %v1946 = vpop.f32.mrf.mxu0
        %v1947 = vadd.f32 0.0, %v1946
        %1948 = vdwg.mxu0
        %v1949 = vrot.slane %v1917, 4
        %v1950 = vsel %vm876, %v1949, %v1861
        %v1951 = vrot.slane %v1861, 4
        %v1952 = vsel %vm876, %v1917, %v1951
        %v1954 = vunpack.c.l.s4 1983009808
        %v1955 = vunpack.c.0.s8 %v1954
        %v1956 = vperm.slane %v1950, %v1955
        %v1958 = vunpack.c.l.s4 1983009808
        %v1959 = vunpack.c.0.s8 %v1958
        %v1960 = vperm.slane %v1952, %v1959
        %v1961 = vrot.slane %v1945, 4
        %v1962 = vsel %vm876, %v1961, %v1889
        %v1963 = vrot.slane %v1889, 4
        %v1964 = vsel %vm876, %v1945, %v1963
        %v1966 = vunpack.c.l.s4 1983009808
        %v1967 = vunpack.c.0.s8 %v1966
        %v1968 = vperm.slane %v1962, %v1967
        %v1970 = vunpack.c.l.s4 1983009808
        %v1971 = vunpack.c.0.s8 %v1970
        %v1972 = vperm.slane %v1964, %v1971
        %v1973 = vrot.slane %v1968, 4
        %v1974 = vsel %vm876, %v1973, %v1956
        %v1975 = vrot.slane %v1956, 4
        %v1976 = vsel %vm876, %v1968, %v1975
        %v1978 = vunpack.c.l.s4 1934713408
        %v1979 = vunpack.c.0.s8 %v1978
        %v1980 = vperm.slane %v1974, %v1979
        %v1982 = vunpack.c.l.s4 1934713408
        %v1983 = vunpack.c.0.s8 %v1982
        %v1984 = vperm.slane %v1976, %v1983
        %v1985 = vrot.slane %v1972, 4
        %v1986 = vsel %vm876, %v1985, %v1960
        %v1987 = vrot.slane %v1960, 4
        %v1988 = vsel %vm876, %v1972, %v1987
        %v1990 = vunpack.c.l.s4 1934713408
        %v1991 = vunpack.c.0.s8 %v1990
        %v1992 = vperm.slane %v1986, %v1991
        %v1994 = vunpack.c.l.s4 1934713408
        %v1995 = vunpack.c.0.s8 %v1994
        %v1996 = vperm.slane %v1988, %v1995
        %v1997 = vrot.slane %v1980, 4
        %v1998 = vsel %vm876, 0.0, %v1997
        %v1999 = vrot.slane %v1984, 4
        %v2000 = vsel %vm876, 0.0, %v1999
        %v2001 = vrot.slane %v1992, 4
        %v2002 = vsel %vm876, 0.0, %v2001
        %v2003 = vrot.slane %v1996, 4
        %v2004 = vsel %vm876, 0.0, %v2003
        %v2005 = vrot.slane %v1919, 4
        %v2006 = vsel %vm876, %v2005, %v1863
        %v2007 = vrot.slane %v1863, 4
        %v2008 = vsel %vm876, %v1919, %v2007
        %v2010 = vunpack.c.l.s4 1983009808
        %v2011 = vunpack.c.0.s8 %v2010
        %v2012 = vperm.slane %v2006, %v2011
        %v2014 = vunpack.c.l.s4 1983009808
        %v2015 = vunpack.c.0.s8 %v2014
        %v2016 = vperm.slane %v2008, %v2015
        %v2017 = vrot.slane %v1947, 4
        %v2018 = vsel %vm876, %v2017, %v1891
        %v2019 = vrot.slane %v1891, 4
        %v2020 = vsel %vm876, %v1947, %v2019
        %v2022 = vunpack.c.l.s4 1983009808
        %v2023 = vunpack.c.0.s8 %v2022
        %v2024 = vperm.slane %v2018, %v2023
        %v2026 = vunpack.c.l.s4 1983009808
        %v2027 = vunpack.c.0.s8 %v2026
        %v2028 = vperm.slane %v2020, %v2027
        %v2029 = vrot.slane %v2024, 4
        %v2030 = vsel %vm876, %v2029, %v2012
        %v2031 = vrot.slane %v2012, 4
        %v2032 = vsel %vm876, %v2024, %v2031
        %v2034 = vunpack.c.l.s4 1934713408
        %v2035 = vunpack.c.0.s8 %v2034
        %v2036 = vperm.slane %v2030, %v2035
        %v2038 = vunpack.c.l.s4 1934713408
        %v2039 = vunpack.c.0.s8 %v2038
        %v2040 = vperm.slane %v2032, %v2039
        %v2041 = vrot.slane %v2028, 4
        %v2042 = vsel %vm876, %v2041, %v2016
        %v2043 = vrot.slane %v2016, 4
        %v2044 = vsel %vm876, %v2028, %v2043
        %v2046 = vunpack.c.l.s4 1934713408
        %v2047 = vunpack.c.0.s8 %v2046
        %v2048 = vperm.slane %v2042, %v2047
        %v2050 = vunpack.c.l.s4 1934713408
        %v2051 = vunpack.c.0.s8 %v2050
        %v2052 = vperm.slane %v2044, %v2051
        %v2053 = vrot.slane %v2036, 4
        %v2054 = vsel %vm876, 0.0, %v2053
        %v2055 = vrot.slane %v2040, 4
        %v2056 = vsel %vm876, 0.0, %v2055
        %v2057 = vrot.slane %v2048, 4
        %v2058 = vsel %vm876, 0.0, %v2057
        %v2059 = vrot.slane %v2052, 4
        %v2060 = vsel %vm876, 0.0, %v2059
        %v2061 = vsel %vm876, %v1999, %v1980
        %v2063 = vunpack.c.l.s4 1983009808
        %v2064 = vunpack.c.0.s8 %v2063
        %v2065 = vperm.slane %v2061, %v2064
        %v2066 = vrot.slane %v2000, 4
        %v2067 = vsel %vm876, %v2066, %v1998
        %v2069 = vunpack.c.l.s4 1983009808
        %v2070 = vunpack.c.0.s8 %v2069
        %v2071 = vperm.slane %v2067, %v2070
        %v2072 = vsel %vm876, %v2003, %v1992
        %v2074 = vunpack.c.l.s4 1983009808
        %v2075 = vunpack.c.0.s8 %v2074
        %v2076 = vperm.slane %v2072, %v2075
        %v2077 = vrot.slane %v2004, 4
        %v2078 = vsel %vm876, %v2077, %v2002
        %v2080 = vunpack.c.l.s4 1983009808
        %v2081 = vunpack.c.0.s8 %v2080
        %v2082 = vperm.slane %v2078, %v2081
        %v2083 = vrot.slane %v2071, 4
        %v2084 = vsel %vm876, %v2083, %v2065
        %v2085 = vrot.slane %v2065, 4
        %v2086 = vsel %vm876, %v2071, %v2085
        %v2088 = vunpack.c.l.s4 1934713408
        %v2089 = vunpack.c.0.s8 %v2088
        %v2090 = vperm.slane %v2084, %v2089
        %v2092 = vunpack.c.l.s4 1934713408
        %v2093 = vunpack.c.0.s8 %v2092
        %v2094 = vperm.slane %v2086, %v2093
        %v2095 = vrot.slane %v2082, 4
        %v2096 = vsel %vm876, %v2095, %v2076
        %v2097 = vrot.slane %v2076, 4
        %v2098 = vsel %vm876, %v2082, %v2097
        %v2100 = vunpack.c.l.s4 1934713408
        %v2101 = vunpack.c.0.s8 %v2100
        %v2102 = vperm.slane %v2096, %v2101
        %v2104 = vunpack.c.l.s4 1934713408
        %v2105 = vunpack.c.0.s8 %v2104
        %v2106 = vperm.slane %v2098, %v2105
        %v2107 = vrot.slane %v2102, 4
        %v2108 = vsel %vm876, %v2107, %v2090
        %v2109 = vrot.slane %v2090, 4
        %v2110 = vsel %vm876, %v2102, %v2109
        %v2111 = vrot.slane %v2106, 4
        %v2112 = vsel %vm876, %v2111, %v2094
        %v2113 = vrot.slane %v2094, 4
        %v2114 = vsel %vm876, %v2106, %v2113
        %v2115 = vsel %vm876, %v2055, %v2036
        %v2117 = vunpack.c.l.s4 1983009808
        %v2118 = vunpack.c.0.s8 %v2117
        %v2119 = vperm.slane %v2115, %v2118
        %v2120 = vrot.slane %v2056, 4
        %v2121 = vsel %vm876, %v2120, %v2054
        %v2123 = vunpack.c.l.s4 1983009808
        %v2124 = vunpack.c.0.s8 %v2123
        %v2125 = vperm.slane %v2121, %v2124
        %v2126 = vsel %vm876, %v2059, %v2048
        %v2128 = vunpack.c.l.s4 1983009808
        %v2129 = vunpack.c.0.s8 %v2128
        %v2130 = vperm.slane %v2126, %v2129
        %v2131 = vrot.slane %v2060, 4
        %v2132 = vsel %vm876, %v2131, %v2058
        %v2134 = vunpack.c.l.s4 1983009808
        %v2135 = vunpack.c.0.s8 %v2134
        %v2136 = vperm.slane %v2132, %v2135
        %v2137 = vrot.slane %v2125, 4
        %v2138 = vsel %vm876, %v2137, %v2119
        %v2139 = vrot.slane %v2119, 4
        %v2140 = vsel %vm876, %v2125, %v2139
        %v2142 = vunpack.c.l.s4 1934713408
        %v2143 = vunpack.c.0.s8 %v2142
        %v2144 = vperm.slane %v2138, %v2143
        %v2146 = vunpack.c.l.s4 1934713408
        %v2147 = vunpack.c.0.s8 %v2146
        %v2148 = vperm.slane %v2140, %v2147
        %v2149 = vrot.slane %v2136, 4
        %v2150 = vsel %vm876, %v2149, %v2130
        %v2151 = vrot.slane %v2130, 4
        %v2152 = vsel %vm876, %v2136, %v2151
        %v2154 = vunpack.c.l.s4 1934713408
        %v2155 = vunpack.c.0.s8 %v2154
        %v2156 = vperm.slane %v2150, %v2155
        %v2158 = vunpack.c.l.s4 1934713408
        %v2159 = vunpack.c.0.s8 %v2158
        %v2160 = vperm.slane %v2152, %v2159
        %v2161 = vrot.slane %v2156, 4
        %v2162 = vsel %vm876, %v2161, %v2144
        %v2163 = vrot.slane %v2144, 4
        %v2164 = vsel %vm876, %v2156, %v2163
        %v2165 = vrot.slane %v2160, 4
        %v2166 = vsel %vm876, %v2165, %v2148
        %v2167 = vrot.slane %v2148, 4
        %v2168 = vsel %vm876, %v2160, %v2167
        %2171 = vrot.lane.b32.xlu0 %v2110, 32
        %v2172 = vpop.permute.xlu0 %2171
        %2173 = vrot.lane.b32.xlu0 %v2164, 32
        %v2174 = vpop.permute.xlu0 %2173
        %2179 = vrot.lane.b32.xlu0 %v2112, 64
        %v2180 = vpop.permute.xlu0 %2179
        %2181 = vrot.lane.b32.xlu0 %v2166, 64
        %v2182 = vpop.permute.xlu0 %2181
        %2187 = vrot.lane.b32.xlu0 %v2114, 96
        %v2188 = vpop.permute.xlu0 %2187
        %2189 = vrot.lane.b32.xlu0 %v2168, 96
        %v2190 = vpop.permute.xlu0 %2189
        %v2193 = vsel %vm1602, %v2108, %v2172
        %v2194 = vsel %vm1602, %v2162, %v2174
        %vm2195 = vcmask 523264
        %v2196 = vsel %vm2195, %v2193, %v2180
        %v2197 = vsel %vm2195, %v2194, %v2182
        %vm2198 = vcmask 785408
        %v2199 = vsel %vm2198, %v2196, %v2188
        %v2200 = vsel %vm2198, %v2197, %v2190
        %v2201 = vpack.c.bf16 %v2200, %v2199
        %v2202 = vld [vmem:[#allocation9] sm:$0xf]
        %v2203 = vld [vmem:[#allocation9 + $0x4] sm:$0xf]
        %v2204 = vld [vmem:[#allocation9 + $0x8] sm:$0xf]
        %v2205 = vld [vmem:[#allocation9 + $0xc] sm:$0xf]
        %v2206 = vld [vmem:[#allocation9 + $0x10] sm:$0xf]
        %v2207 = vld [vmem:[#allocation9 + $0x14] sm:$0xf]
        %v2208 = vld [vmem:[#allocation9 + $0x18] sm:$0xf]
        %v2209 = vld [vmem:[#allocation9 + $0x1c] sm:$0xf]
        %v2210 = vld [vmem:[#allocation9 + $0x20] sm:$0xf]
        %v2211 = vld [vmem:[#allocation9 + $0x24] sm:$0xf]
        %v2212 = vld [vmem:[#allocation9 + $0x28] sm:$0xf]
        %v2213 = vld [vmem:[#allocation9 + $0x2c] sm:$0xf]
        %v2214 = vld [vmem:[#allocation9 + $0x30] sm:$0xf]
        %v2215 = vld [vmem:[#allocation9 + $0x34] sm:$0xf]
        %v2216 = vld [vmem:[#allocation9 + $0x38] sm:$0xf]
        %v2217 = vld [vmem:[#allocation9 + $0x3c] sm:$0xf]
        %v2218 = vld [vmem:[%s8] sm:$0x1]
        %v2220 = vperm.slane %v2218, 0
        %v2238 = vunpack.c.l.b16 %v2202
        %v2239 = vunpack.c.l.b16 %v2203
        %v2240 = vunpack.c.l.b16 %v2204
        %v2241 = vunpack.c.l.b16 %v2205
        %v2242 = vunpack.c.l.b16 %v2206
        %v2243 = vunpack.c.l.b16 %v2207
        %v2244 = vunpack.c.l.b16 %v2208
        %v2245 = vunpack.c.l.b16 %v2209
        %v2246 = vunpack.c.l.b16 %v2210
        %v2247 = vunpack.c.l.b16 %v2211
        %v2248 = vunpack.c.l.b16 %v2212
        %v2249 = vunpack.c.l.b16 %v2213
        %v2250 = vunpack.c.l.b16 %v2214
        %v2251 = vunpack.c.l.b16 %v2215
        %v2252 = vunpack.c.l.b16 %v2216
        %v2253 = vunpack.c.l.b16 %v2217
        %v2254 = vpack.c.b16 %v2239, %v2238
        %v2255 = vpack.c.b16 %v2241, %v2240
        %v2256 = vpack.c.b16 %v2243, %v2242
        %v2257 = vpack.c.b16 %v2245, %v2244
        %v2258 = vpack.c.b16 %v2247, %v2246
        %v2259 = vpack.c.b16 %v2249, %v2248
        %v2260 = vpack.c.b16 %v2251, %v2250
        %v2261 = vpack.c.b16 %v2253, %v2252
        %2270 = vmatpush.bf16.msra.mxu0 %v2261
        %2271 = vmatpush.bf16.msra.mxu0 %v2260
        %2272 = vmatpush.bf16.msra.mxu0 %v2259
        %2273 = vmatpush.bf16.msra.mxu0 %v2258
        %2274 = vmatpush.bf16.msra.mxu0 %v2257
        %2275 = vmatpush.bf16.msra.mxu0 %v2256
        %2276 = vmatpush.bf16.msra.mxu0 %v2255
        %2277 = vmatpush.bf16.msra.mxu0 %v2254
        %2278 = vmatmul.bf16.gmra.mxu0 %v2201
        %v2279 = vpop.f32.mrf.mxu0
        %v2280 = vadd.f32 %v2220, %v2279
        %v2281 = vpop.f32.mrf.mxu0
        %v2282 = vadd.f32 %v2220, %v2281
        %2283 = vdwg.mxu0
        %v2284 = vadd.f32 %v543, %v2280
        %v2285 = vadd.f32 %v544, %v2282
        %2286 = vst [vmem:[%s541] sm:$0xff] %v2284
        %2287 = vst [vmem:[%s541 + $0x8] sm:$0xff] %v2285
        %p2288 = scmp.lt.s32.totalorder %s30, 1
        %s2289 = scalar_select %p2288, %s30, 1
        %s2290 = smul.addr %s2289, 2
        %s2291 = smul.addr %s2290, 8
        %s2292 = scalar_lea.vmem %s11, %s2291
        // Predicated region
        $region93: #{decoder_layer.4} parent=63 // pred_check
          %p2293 = pneg %p294
        $region94: #{decoder_layer.4} parent=63 // pred_check_branch
          %2295 = sbr.rel (%p2293) target = $region96
        $region95: #{decoder_layer.4} parent=63 // pred_region
          _
        $region96: #{decoder_layer.4} parent=63 // pred_fallthru
          _
      $region64: #{decoder_layer.4} parent=5 // pred_fallthru
        _
      %p2296 = scmp.le.s32.totalorder 2, %s25
      // Predicated region
      $region97: #{decoder_layer.4} parent=5 // pred_check
        %p2297 = pneg %p2296
      $region98: #{decoder_layer.4} parent=5 // pred_check_branch
        %2299 = sbr.rel (%p2297) target = $region100
      $region99: #{decoder_layer.4} parent=5 // pred_region
        %s2300 = ssub.s32 %s25, 2
        // Predicated region
        $region101: #{decoder_layer.4} parent=99 // pred_check
          %p2301 = pneg %p300
        $region102: #{decoder_layer.4} parent=99 // pred_check_branch
          %2303 = sbr.rel (%p2301) target = $region104
        $region103: #{decoder_layer.4} parent=99 // pred_region
          %p2304 = scmp.lt.s32.totalorder %s31, 1
          %s2305 = scalar_select %p2304, %s31, 1
          %s2306 = smul.addr %s2305, 2
          %s2307 = smul.addr %s2306, 8
          %s2308 = scalar_lea.vmem %s11, %s2307
        $region104: #{decoder_layer.4} parent=99 // pred_fallthru
          _
      $region100: #{decoder_layer.4} parent=5 // pred_fallthru
        _
    $region6: #{decoder_layer.4} parent=1 // loop_footer
      %s29 = sadd.s32 1, %s25
    $region7: #{decoder_layer.4} parent=1 // loop_footer_branch
      %24 = sbr.rel target = $region3
    $region8: #{decoder_layer.4} parent=1 // loop_exit
      _
    %2309 = vsyncpa [#allocation3], 1
    %s2310 = scalar_lea.sflag [#allocation3], 1
    %2311 = vsyncpa %s2310, 1
    %2312 = vsyncpa [#allocation5], 1
    %s2313 = scalar_lea.sflag [#allocation5], 1
    %2314 = vsyncpa %s2313, 1
    %2315 = vsyncpa [#allocation8], 1
    %2316 = vsyncpa [#allocation11], 1

// kernel: decoder_layer.3
$region0: #{decoder_layer.3}
  #allocation0 [shape = 'u32[]', space=smem, size = 0x4, offset = 0x4, fixed_abs, tag = 'smem constant byte address 0x4 - core index']
  #allocation1 [shape = 'u32[72,128]{1,0:T(1,128)}', space=vmem, size = 0x9000, scoped, tag = 'internal scratch']
  %s0 = inlined_call_operand.hbm [shape: f32[2,16,128], index: 0, kind: input, shape index: {}]
  %s1 = inlined_call_operand.hbm [shape: f32[2,1,16], index: 1, kind: input, shape index: {}]
  %s2 = inlined_call_operand.hbm [shape: bf16[128,384], index: 2, kind: input, shape index: {}]
  %s3 = inlined_call_operand.vmem [shape: f32[1,384], index: 3, kind: input, shape index: {}]
  %s4 = inlined_call_operand.hbm [shape: bf16[128,128], index: 4, kind: input, shape index: {}]
  %s5 = inlined_call_operand.vmem [shape: f32[1,128], index: 5, kind: input, shape index: {}]
  %s6 = inlined_call_operand.hbm [shape: f32[1,128], index: 6, kind: input, shape index: {}]
  %s7 = inlined_call_operand.vmem [shape: f32[1,128], index: 7, kind: input, shape index: {}]
  %s8 = inlined_call_operand.vmem [shape: f32[2,16,128], index: 8, kind: output, shape index: {}]
  %s9 = sld [smem:[#allocation0]]
  $region85: #{decoder_layer.3} parent=0
    _
  %s11 = ssub.s32 1, %s9
  %s12 = scalar_select 0, %s11, %s9
  $region1: #{decoder_layer.3} parent=0
    #allocation2 [shape = 'u8[16384]{0}', space=vmem, size = 0x4000, scoped, tag = 'input window, operand 0']
    #allocation3 [shape = 's32[2]{0}', space=sflag, size = 0x8, scoped, tag = 'scoped memory for decoder_layer.3']
    #allocation4 [shape = 'u8[1024]{0}', space=vmem, size = 0x400, scoped, tag = 'input window, operand 1']
    #allocation5 [shape = 's32[2]{0}', space=sflag, size = 0x8, scoped, tag = 'scoped memory for decoder_layer.3']
    #allocation6 [shape = 'u8[98304]{0}', space=vmem, size = 0x18000, scoped, tag = 'input window, operand 2, single buffered']
    #allocation7 [shape = 'u8[32768]{0}', space=vmem, size = 0x8000, scoped, tag = 'input window, operand 4, single buffered']
    #allocation8 [shape = 's32[1]{0}', space=sflag, size = 0x4, scoped, tag = 'scoped memory for decoder_layer.3']
    #allocation9 [shape = 'u8[512]{0}', space=vmem, size = 0x400, scoped, tag = 'input window, operand 6, single buffered']
    %13 = vsyncpa [#allocation3], 0
    %s14 = scalar_lea.sflag [#allocation3], 1
    %15 = vsyncpa %s14, 0
    %16 = vsyncpa [#allocation5], 0
    %s17 = scalar_lea.sflag [#allocation5], 1
    %18 = vsyncpa %s17, 0
    %19 = vsyncpa [#allocation8], 0
    loop: start=0, step=1, limit=4
    $region2: #{decoder_layer.3} parent=1 // loop_pre_header
      _
    $region3: #{decoder_layer.3} parent=1 // loop_header
      %s21 = sphi 0, %s25
      %p22 = scmp.ge.s32.totalorder %s21, 4
      %s31 = sphi 0, %s33
      %s34 = sphi 0, %s31
      %s35 = sphi 0, %s34
      %s51 = sphi 0, %s35
      %s57 = sphi 0, %s59
      %s60 = sphi 0, %s57
      %s61 = sphi 0, %s60
      %s77 = sphi 0, %s61
      %s81 = sphi 0, %s81
      %s83 = sphi 0, %s81
      %s84 = sphi 0, %s83
      %s98 = sphi 0, %s84
      %s102 = sphi 0, %s102
      %s104 = sphi 0, %s102
      %s105 = sphi 0, %s104
      %s119 = sphi 0, %s105
      %s123 = sphi 0, %s123
      %s125 = sphi 0, %s123
      %s126 = sphi 0, %s125
      %s140 = sphi 0, %s126
      %s144 = sphi 0, %s144
      %s146 = sphi 0, %s144
      %s147 = sphi 0, %s146
      %s161 = sphi 0, %s147
      %s165 = sphi 0, %s165
      %s167 = sphi 0, %s165
      %s168 = sphi 0, %s167
      %s182 = sphi 0, %s168
      %s186 = sphi 0, %s186
      %s188 = sphi 0, %s186
      %s189 = sphi 0, %s188
      %s203 = sphi 0, %s189
      %s209 = sphi 0, %s211
      %s212 = sphi 0, %s209
      %s213 = sphi 0, %s212
      %s229 = sphi 0, %s213
    $region4: #{decoder_layer.3} parent=1 // loop_header_branch
      %24 = sbr.rel (%p22) target = $region8
    $region5: #{decoder_layer.3} parent=1 // loop_body
      %s26 = ssub.s32 %s21, 1
      %s27 = ssub.s32 %s21, 2
      %s28 = sadd.s32 %s21, 1
      %s29 = ssub.s32 %s21, %s28
      %p30 = scmp.eq.s32.totalorder %s29, 0
      %s32 = sadd.s32 %s31, 1
      %s33 = scalar_select %p30, %s31, %s32
      %p36 = pneg %p30
      %p37 = scmp.eq.s32.totalorder %s21, 1
      %p38 = por %p36, %p37
      %p39 = scmp.ne.s32.totalorder %s31, %s34
      %p40 = scmp.eq.s32.totalorder %s21, 0
      %p41 = por %p39, %p40
      %p42 = scmp.ne.s32.totalorder %s31, %s34
      %p43 = scmp.eq.s32.totalorder %s26, 1
      %p44 = por %p42, %p43
      %p45 = scmp.ne.s32.totalorder %s34, %s35
      %p46 = scmp.eq.s32.totalorder %s26, 0
      %p47 = por %p45, %p46
      %p48 = scmp.ne.s32.totalorder %s34, %s35
      %p49 = scmp.eq.s32.totalorder %s27, 1
      %p50 = por %p48, %p49
      %p52 = scmp.ne.s32.totalorder %s35, %s51
      %p53 = scmp.eq.s32.totalorder %s27, 0
      %p54 = por %p52, %p53
      %s55 = ssub.s32 %s21, %s28
      %p56 = scmp.eq.s32.totalorder %s55, 0
      %s58 = sadd.s32 %s57, 1
      %s59 = scalar_select %p56, %s57, %s58
      %p62 = pneg %p56
      %p63 = scmp.eq.s32.totalorder %s21, 1
      %p64 = por %p62, %p63
      %p65 = scmp.ne.s32.totalorder %s57, %s60
      %p66 = scmp.eq.s32.totalorder %s21, 0
      %p67 = por %p65, %p66
      %p68 = scmp.ne.s32.totalorder %s57, %s60
      %p69 = scmp.eq.s32.totalorder %s26, 1
      %p70 = por %p68, %p69
      %p71 = scmp.ne.s32.totalorder %s60, %s61
      %p72 = scmp.eq.s32.totalorder %s26, 0
      %p73 = por %p71, %p72
      %p74 = scmp.ne.s32.totalorder %s60, %s61
      %p75 = scmp.eq.s32.totalorder %s27, 1
      %p76 = por %p74, %p75
      %p78 = scmp.ne.s32.totalorder %s61, %s77
      %p79 = scmp.eq.s32.totalorder %s27, 0
      %p80 = por %p78, %p79
      %s82 = sadd.s32 %s81, 1
      %p85 = scmp.eq.s32.totalorder %s21, 1
      %p86 = scmp.ne.s32.totalorder %s81, %s83
      %p87 = scmp.eq.s32.totalorder %s21, 0
      %p88 = por %p86, %p87
      %p89 = scmp.ne.s32.totalorder %s81, %s83
      %p90 = scmp.eq.s32.totalorder %s26, 1
      %p91 = por %p89, %p90
      %p92 = scmp.ne.s32.totalorder %s83, %s84
      %p93 = scmp.eq.s32.totalorder %s26, 0
      %p94 = por %p92, %p93
      %p95 = scmp.ne.s32.totalorder %s83, %s84
      %p96 = scmp.eq.s32.totalorder %s27, 1
      %p97 = por %p95, %p96
      %p99 = scmp.ne.s32.totalorder %s84, %s98
      %p100 = scmp.eq.s32.totalorder %s27, 0
      %p101 = por %p99, %p100
      %s103 = sadd.s32 %s102, 1
      %p106 = scmp.eq.s32.totalorder %s21, 1
      %p107 = scmp.ne.s32.totalorder %s102, %s104
      %p108 = scmp.eq.s32.totalorder %s21, 0
      %p109 = por %p107, %p108
      %p110 = scmp.ne.s32.totalorder %s102, %s104
      %p111 = scmp.eq.s32.totalorder %s26, 1
      %p112 = por %p110, %p111
      %p113 = scmp.ne.s32.totalorder %s104, %s105
      %p114 = scmp.eq.s32.totalorder %s26, 0
      %p115 = por %p113, %p114
      %p116 = scmp.ne.s32.totalorder %s104, %s105
      %p117 = scmp.eq.s32.totalorder %s27, 1
      %p118 = por %p116, %p117
      %p120 = scmp.ne.s32.totalorder %s105, %s119
      %p121 = scmp.eq.s32.totalorder %s27, 0
      %p122 = por %p120, %p121
      %s124 = sadd.s32 %s123, 1
      %p127 = scmp.eq.s32.totalorder %s21, 1
      %p128 = scmp.ne.s32.totalorder %s123, %s125
      %p129 = scmp.eq.s32.totalorder %s21, 0
      %p130 = por %p128, %p129
      %p131 = scmp.ne.s32.totalorder %s123, %s125
      %p132 = scmp.eq.s32.totalorder %s26, 1
      %p133 = por %p131, %p132
      %p134 = scmp.ne.s32.totalorder %s125, %s126
      %p135 = scmp.eq.s32.totalorder %s26, 0
      %p136 = por %p134, %p135
      %p137 = scmp.ne.s32.totalorder %s125, %s126
      %p138 = scmp.eq.s32.totalorder %s27, 1
      %p139 = por %p137, %p138
      %p141 = scmp.ne.s32.totalorder %s126, %s140
      %p142 = scmp.eq.s32.totalorder %s27, 0
      %p143 = por %p141, %p142
      %s145 = sadd.s32 %s144, 1
      %p148 = scmp.eq.s32.totalorder %s21, 1
      %p149 = scmp.ne.s32.totalorder %s144, %s146
      %p150 = scmp.eq.s32.totalorder %s21, 0
      %p151 = por %p149, %p150
      %p152 = scmp.ne.s32.totalorder %s144, %s146
      %p153 = scmp.eq.s32.totalorder %s26, 1
      %p154 = por %p152, %p153
      %p155 = scmp.ne.s32.totalorder %s146, %s147
      %p156 = scmp.eq.s32.totalorder %s26, 0
      %p157 = por %p155, %p156
      %p158 = scmp.ne.s32.totalorder %s146, %s147
      %p159 = scmp.eq.s32.totalorder %s27, 1
      %p160 = por %p158, %p159
      %p162 = scmp.ne.s32.totalorder %s147, %s161
      %p163 = scmp.eq.s32.totalorder %s27, 0
      %p164 = por %p162, %p163
      %s166 = sadd.s32 %s165, 1
      %p169 = scmp.eq.s32.totalorder %s21, 1
      %p170 = scmp.ne.s32.totalorder %s165, %s167
      %p171 = scmp.eq.s32.totalorder %s21, 0
      %p172 = por %p170, %p171
      %p173 = scmp.ne.s32.totalorder %s165, %s167
      %p174 = scmp.eq.s32.totalorder %s26, 1
      %p175 = por %p173, %p174
      %p176 = scmp.ne.s32.totalorder %s167, %s168
      %p177 = scmp.eq.s32.totalorder %s26, 0
      %p178 = por %p176, %p177
      %p179 = scmp.ne.s32.totalorder %s167, %s168
      %p180 = scmp.eq.s32.totalorder %s27, 1
      %p181 = por %p179, %p180
      %p183 = scmp.ne.s32.totalorder %s168, %s182
      %p184 = scmp.eq.s32.totalorder %s27, 0
      %p185 = por %p183, %p184
      %s187 = sadd.s32 %s186, 1
      %p190 = scmp.eq.s32.totalorder %s21, 1
      %p191 = scmp.ne.s32.totalorder %s186, %s188
      %p192 = scmp.eq.s32.totalorder %s21, 0
      %p193 = por %p191, %p192
      %p194 = scmp.ne.s32.totalorder %s186, %s188
      %p195 = scmp.eq.s32.totalorder %s26, 1
      %p196 = por %p194, %p195
      %p197 = scmp.ne.s32.totalorder %s188, %s189
      %p198 = scmp.eq.s32.totalorder %s26, 0
      %p199 = por %p197, %p198
      %p200 = scmp.ne.s32.totalorder %s188, %s189
      %p201 = scmp.eq.s32.totalorder %s27, 1
      %p202 = por %p200, %p201
      %p204 = scmp.ne.s32.totalorder %s189, %s203
      %p205 = scmp.eq.s32.totalorder %s27, 0
      %p206 = por %p204, %p205
      %s207 = ssub.s32 %s21, %s28
      %p208 = scmp.eq.s32.totalorder %s207, 0
      %s210 = sadd.s32 %s209, 1
      %s211 = scalar_select %p208, %s209, %s210
      %p214 = pneg %p208
      %p215 = scmp.eq.s32.totalorder %s21, 1
      %p216 = por %p214, %p215
      %p217 = scmp.ne.s32.totalorder %s209, %s212
      %p218 = scmp.eq.s32.totalorder %s21, 0
      %p219 = por %p217, %p218
      %p220 = scmp.ne.s32.totalorder %s209, %s212
      %p221 = scmp.eq.s32.totalorder %s26, 1
      %p222 = por %p220, %p221
      %p223 = scmp.ne.s32.totalorder %s212, %s213
      %p224 = scmp.eq.s32.totalorder %s26, 0
      %p225 = por %p223, %p224
      %p226 = scmp.ne.s32.totalorder %s212, %s213
      %p227 = scmp.eq.s32.totalorder %s27, 1
      %p228 = por %p226, %p227
      %p230 = scmp.ne.s32.totalorder %s213, %s229
      %p231 = scmp.eq.s32.totalorder %s27, 0
      %p232 = por %p230, %p231
      %p233 = scmp.le.s32.totalorder 1, %s21
      %p234 = scmp.lt.s32.totalorder %s21, 3
      %p235 = pnand %p233, %p234
      %p236 = pneg %p235
      // Predicated region
      $region9: #{decoder_layer.3} parent=5 // pred_check
        _
      $region10: #{decoder_layer.3} parent=5 // pred_check_branch
        %238 = sbr.rel (%p235) target = $region12
      $region11: #{decoder_layer.3} parent=5 // pred_region
        %s239 = ssub.s32 %s21, 1
        // Predicated region
        $region13: #{decoder_layer.3} parent=11 // pred_check
          %p240 = pneg %p94
        $region14: #{decoder_layer.3} parent=11 // pred_check_branch
          %242 = sbr.rel (%p240) target = $region16
        $region15: #{decoder_layer.3} parent=11 // pred_region
          %244 = vsyncadd [#allocation5], 0
          %s245 = sshll.u32 %s2, 4
          %s246 = int_to_ptr.hbm [resolvable:$true] %s245
          %s247 = sshll.u32 [#allocation6], 4
          %s248 = int_to_ptr.vmem [resolvable:$true] %s247
          %253 = dma.hbm_to_vmem [thread:$0]  %s246, 3072, %s248, [#allocation5], 192, 192, 12
        $region16: #{decoder_layer.3} parent=11 // pred_fallthru
          _
        // Predicated region
        $region17: #{decoder_layer.3} parent=11 // pred_check
          %p254 = pneg %p115
        $region18: #{decoder_layer.3} parent=11 // pred_check_branch
          %256 = sbr.rel (%p254) target = $region20
        $region19: #{decoder_layer.3} parent=11 // pred_region
          _
        $region20: #{decoder_layer.3} parent=11 // pred_fallthru
          _
        // Predicated region
        $region21: #{decoder_layer.3} parent=11 // pred_check
          %p257 = pneg %p136
        $region22: #{decoder_layer.3} parent=11 // pred_check_branch
          %259 = sbr.rel (%p257) target = $region24
        $region23: #{decoder_layer.3} parent=11 // pred_region
          %261 = vsyncadd [#allocation8], 0
          %s262 = sshll.u32 %s4, 4
          %s263 = int_to_ptr.hbm [resolvable:$true] %s262
          %s264 = sshll.u32 [#allocation7], 4
          %s265 = int_to_ptr.vmem [resolvable:$true] %s264
          %270 = dma.hbm_to_vmem [thread:$0]  %s263, 1024, %s265, [#allocation8], 64, 64, 4
        $region24: #{decoder_layer.3} parent=11 // pred_fallthru
          _
        // Predicated region
        $region25: #{decoder_layer.3} parent=11 // pred_check
          %p271 = pneg %p157
        $region26: #{decoder_layer.3} parent=11 // pred_check_branch
          %273 = sbr.rel (%p271) target = $region28
        $region27: #{decoder_layer.3} parent=11 // pred_region
          _
        $region28: #{decoder_layer.3} parent=11 // pred_fallthru
          _
        // Predicated region
        $region29: #{decoder_layer.3} parent=11 // pred_check
          %p274 = pneg %p178
        $region30: #{decoder_layer.3} parent=11 // pred_check_branch
          %276 = sbr.rel (%p274) target = $region32
        $region31: #{decoder_layer.3} parent=11 // pred_region
          %278 = vsyncadd [#allocation8], 0
          %s280 = sshll.u32 %s6, 4
          %s281 = int_to_ptr.hbm [resolvable:$true] %s280
          %s282 = sshll.u32 [#allocation9], 4
          %s283 = int_to_ptr.vmem [resolvable:$true] %s282
          %285 = dma.hbm_to_vmem [thread:$0]  %s281, 16, %s283, [#allocation8]
        $region32: #{decoder_layer.3} parent=11 // pred_fallthru
          _
        // Predicated region
        $region33: #{decoder_layer.3} parent=11 // pred_check
          %p286 = pneg %p199
        $region34: #{decoder_layer.3} parent=11 // pred_check_branch
          %288 = sbr.rel (%p286) target = $region36
        $region35: #{decoder_layer.3} parent=11 // pred_region
          _
        $region36: #{decoder_layer.3} parent=11 // pred_fallthru
          _
      $region12: #{decoder_layer.3} parent=5 // pred_fallthru
        _
      %p289 = scmp.lt.s32.totalorder %s21, 2
      // Predicated region
      $region37: #{decoder_layer.3} parent=5 // pred_check
        %p290 = pneg %p289
      $region38: #{decoder_layer.3} parent=5 // pred_check_branch
        %292 = sbr.rel (%p290) target = $region40
      $region39: #{decoder_layer.3} parent=5 // pred_region
        // Predicated region
        $region41: #{decoder_layer.3} parent=39 // pred_check
          %p293 = pneg %p41
        $region42: #{decoder_layer.3} parent=39 // pred_check_branch
          %295 = sbr.rel (%p293) target = $region44
        $region43: #{decoder_layer.3} parent=39 // pred_region
          %s296 = sand.u32 %s31, 1
          %s297 = scalar_lea.sflag [#allocation3], %s296
          %s298 = sand.u32 %s31, 1
          %s299 = smul.addr %s298, 16
          %s300 = scalar_lea.vmem [#allocation2], %s299
          %302 = vsyncadd %s297, 0
          %s303 = smul.addr %s21, 2
          %s304 = smul.addr %s303, 8
          %s305 = scalar_lea.hbm %s0, %s304
          %s306 = sshll.u32 %s305, 4
          %s307 = int_to_ptr.hbm [resolvable:$true] %s306
          %s308 = sshll.u32 %s300, 4
          %s309 = int_to_ptr.vmem [resolvable:$true] %s308
          %314 = dma.hbm_to_vmem [thread:$0]  %s307, 256, %s309, %s297, 128, 128, 8
        $region44: #{decoder_layer.3} parent=39 // pred_fallthru
          _
        // Predicated region
        $region45: #{decoder_layer.3} parent=39 // pred_check
          %p315 = pneg %p67
        $region46: #{decoder_layer.3} parent=39 // pred_check_branch
          %317 = sbr.rel (%p315) target = $region48
        $region47: #{decoder_layer.3} parent=39 // pred_region
          %s318 = sand.u32 %s21, 1
          %s319 = scalar_lea.sflag [#allocation5], %s318
          %s320 = sand.u32 %s57, 1
          %s321 = scalar_lea.vmem [#allocation4], %s320
          %323 = vsyncadd %s319, 0
          %s324 = scalar_lea.hbm %s1, %s21
          %s326 = sshll.u32 %s324, 4
          %s327 = int_to_ptr.hbm [resolvable:$true] %s326
          %s328 = sshll.u32 %s321, 4
          %s329 = int_to_ptr.vmem [resolvable:$true] %s328
          %331 = dma.hbm_to_vmem [thread:$0]  %s327, 16, %s329, %s319
        $region48: #{decoder_layer.3} parent=39 // pred_fallthru
          _
      $region40: #{decoder_layer.3} parent=5 // pred_fallthru
        _
      %p332 = scmp.le.s32.totalorder 1, %s21
      %p333 = scmp.lt.s32.totalorder %s21, 3
      %p334 = pnand %p332, %p333
      %p335 = pneg %p334
      // Predicated region
      $region49: #{decoder_layer.3} parent=5 // pred_check
        _
      $region50: #{decoder_layer.3} parent=5 // pred_check_branch
        %337 = sbr.rel (%p334) target = $region52
      $region51: #{decoder_layer.3} parent=5 // pred_region
        %s338 = ssub.s32 %s21, 1
        %s339 = sand.u32 %s34, 1
        %s340 = scalar_lea.sflag [#allocation3], %s339
        %s341 = sand.u32 %s34, 1
        %s342 = smul.addr %s341, 16
        %s343 = scalar_lea.vmem [#allocation2], %s342
        // Predicated region
        $region53: #{decoder_layer.3} parent=51 // pred_check
          %p344 = pneg %p47
        $region54: #{decoder_layer.3} parent=51 // pred_check_branch
          %346 = sbr.rel (%p344) target = $region56
        $region55: #{decoder_layer.3} parent=51 // pred_region
          %348 = dma.done %s340, 256
        $region56: #{decoder_layer.3} parent=51 // pred_fallthru
          _
        %s349 = sand.u32 %s26, 1
        %s350 = scalar_lea.sflag [#allocation5], %s349
        %s351 = sand.u32 %s60, 1
        %s352 = scalar_lea.vmem [#allocation4], %s351
        // Predicated region
        $region57: #{decoder_layer.3} parent=51 // pred_check
          %p353 = pneg %p73
        $region58: #{decoder_layer.3} parent=51 // pred_check_branch
          %355 = sbr.rel (%p353) target = $region60
        $region59: #{decoder_layer.3} parent=51 // pred_region
          %357 = dma.done %s350, 16
        $region60: #{decoder_layer.3} parent=51 // pred_fallthru
          _
        // Predicated region
        $region61: #{decoder_layer.3} parent=51 // pred_check
          %p358 = pneg %p94
        $region62: #{decoder_layer.3} parent=51 // pred_check_branch
          %360 = sbr.rel (%p358) target = $region64
        $region63: #{decoder_layer.3} parent=51 // pred_region
          %362 = dma.done [#allocation5], 3072
        $region64: #{decoder_layer.3} parent=51 // pred_fallthru
          _
        // Predicated region
        $region65: #{decoder_layer.3} parent=51 // pred_check
          %p363 = pneg %p136
        $region66: #{decoder_layer.3} parent=51 // pred_check_branch
          %365 = sbr.rel (%p363) target = $region68
        $region67: #{decoder_layer.3} parent=51 // pred_region
          %367 = dma.done [#allocation8], 1024
        $region68: #{decoder_layer.3} parent=51 // pred_fallthru
          _
        // Predicated region
        $region69: #{decoder_layer.3} parent=51 // pred_check
          %p368 = pneg %p178
        $region70: #{decoder_layer.3} parent=51 // pred_check_branch
          %370 = sbr.rel (%p368) target = $region72
        $region71: #{decoder_layer.3} parent=51 // pred_region
          %372 = dma.done [#allocation8], 16
        $region72: #{decoder_layer.3} parent=51 // pred_fallthru
          _
        %s373 = sand.u32 %s34, 1
        %s374 = scalar_lea.sflag [#allocation3], %s373
        %s375 = sand.u32 %s34, 1
        %s376 = smul.addr %s375, 16
        %s377 = scalar_lea.vmem [#allocation2], %s376
        %p378 = pneg %p47
        %p379 = pneg %p44
        %s380 = sand.u32 %s26, 1
        %s381 = scalar_lea.sflag [#allocation5], %s380
        %s382 = sand.u32 %s60, 1
        %s383 = scalar_lea.vmem [#allocation4], %s382
        %p384 = pneg %p73
        %p385 = pneg %p70
        %p386 = pneg %p94
        %p387 = pneg %p91
        %p388 = pneg %p115
        %p389 = pneg %p112
        %p390 = pneg %p136
        %p391 = pneg %p133
        %p392 = pneg %p157
        %p393 = pneg %p154
        %p394 = pneg %p178
        %p395 = pneg %p175
        %p396 = pneg %p199
        %p397 = pneg %p196
        %p398 = pneg %p225
        %p399 = pneg %p222
        %p400 = scmp.lt.s32.totalorder %s26, 1
        %s401 = scalar_select %p400, %s26, 1
        %s402 = smul.addr %s401, 2
        %s403 = smul.addr %s402, 8
        %s404 = scalar_lea.vmem %s8, %s403
        %p405 = scmp.lt.s32.totalorder %s26, 1
        %s406 = scalar_select %p405, %s26, 1
        %s407 = smul.addr %s406, 2
        %s408 = smul.addr %s407, 8
        %s409 = scalar_lea.vmem %s8, %s408
        %v411 = vld [vmem:[%s343] sm:$0xff]
        %v412 = vld [vmem:[%s343 + $0x8] sm:$0xff]
        %v413 = vld [vmem:[#allocation9] sm:$0x1]
        %v414 = vld [vmem:[%s7] sm:$0x1]
        %415 = vadd.xlane.f32.xlu0 %v411
        %v416 = vpop.xlane.xlu0 %415
        %417 = vadd.xlane.f32.xlu0 %v412
        %v418 = vpop.xlane.xlu0 %417
        %v419 = vrcp.pop 128.0
        %v420 = vmul.f32 128.0, %v419
        %v421 = vsub.f32 1.0, %v420
        %v422 = vmul.f32 %v419, %v421
        %v423 = vadd.f32 %v419, %v422
        %vm424 = vweird.f32 %v419
        %v425 = vsel %vm424, %v419, %v423
        %v426 = vmul.f32 %v416, %v425
        %v427 = vmul.f32 %v418, %v425
        %v428 = vsub.f32 %v411, %v426
        %v429 = vsub.f32 %v412, %v427
        %v430 = vmul.f32 %v428, %v428
        %v431 = vmul.f32 %v429, %v429
        %432 = vadd.xlane.f32.xlu0 %v430
        %v433 = vpop.xlane.xlu0 %432
        %434 = vadd.xlane.f32.xlu0 %v431
        %v435 = vpop.xlane.xlu0 %434
        %v436 = vmul.f32 %v433, 0.007874016
        %v437 = vmul.f32 %v435, 0.007874016
        %v438 = vrsqrt.pop %v436
        %v439 = vmul.f32 %v438, %v436
        %v440 = vmul.f32 %v439, %v438
        %v441 = vmul.f32 0.5, %v440
        %v442 = vsub.f32 1.5, %v441
        %v443 = vmul.f32 %v438, %v442
        %v444 = vmul.f32 %v436, %v443
        %vm445 = vcmp.eq.f32.partialorder %v436, inf
        %v446 = vsel %vm445, %v436, %v444
        %vm447 = vcmp.eq.f32.partialorder %v436, 0.0
        %v448 = vand.u32 %v436, 2147483648
        %v449 = vsel %vm447, %v448, %v446
        %v450 = vrsqrt.pop %v437
        %v451 = vmul.f32 %v450, %v437
        %v452 = vmul.f32 %v451, %v450
        %v453 = vmul.f32 0.5, %v452
        %v454 = vsub.f32 1.5, %v453
        %v455 = vmul.f32 %v450, %v454
        %v456 = vmul.f32 %v437, %v455
        %vm457 = vcmp.eq.f32.partialorder %v437, inf
        %v458 = vsel %vm457, %v437, %v456
        %vm459 = vcmp.eq.f32.partialorder %v437, 0.0
        %v460 = vand.u32 %v437, 2147483648
        %v461 = vsel %vm459, %v460, %v458
        %v462 = vadd.f32 %v449, 1e-06
        %v463 = vadd.f32 %v461, 1e-06
        %v464 = vrcp.pop %v462
        %v465 = vmul.f32 %v462, %v464
        %v466 = vsub.f32 1.0, %v465
        %v467 = vmul.f32 %v464, %v466
        %v468 = vadd.f32 %v464, %v467
        %vm469 = vweird.f32 %v462
        %vm470 = vweird.f32 %v464
        %vm471 = vmor %vm469, %vm470
        %v472 = vsel %vm471, %v464, %v468
        %v473 = vand.u32 2147483647, %v462
        %vm474 = vcmp.eq.f32.partialorder %v473, 8.507059e+37
        %v475 = vand.u32 %v462, 2147483648
        %v476 = vor.u32 1.1754944e-38, %v475
        %v477 = vsel %vm474, %v476, %v472
        %v478 = vmul.f32 %v428, %v477
        %v479 = vrcp.pop %v463
        %v480 = vmul.f32 %v463, %v479
        %v481 = vsub.f32 1.0, %v480
        %v482 = vmul.f32 %v479, %v481
        %v483 = vadd.f32 %v479, %v482
        %vm484 = vweird.f32 %v463
        %vm485 = vweird.f32 %v479
        %vm486 = vmor %vm484, %vm485
        %v487 = vsel %vm486, %v479, %v483
        %v488 = vand.u32 2147483647, %v463
        %vm489 = vcmp.eq.f32.partialorder %v488, 8.507059e+37
        %v490 = vand.u32 %v463, 2147483648
        %v491 = vor.u32 1.1754944e-38, %v490
        %v492 = vsel %vm489, %v491, %v487
        %v493 = vmul.f32 %v429, %v492
        %v495 = vperm.slane %v413, 0
        %v497 = vmul.f32 %v495, %v478
        %v498 = vmul.f32 %v495, %v493
        %v500 = vperm.slane %v414, 0
        %v502 = vadd.f32 %v497, %v500
        %v503 = vadd.f32 %v498, %v500
        %v504 = vpack.c.bf16 %v503, %v502
        %v505 = vld [vmem:[#allocation6] sm:$0xff]
        %v506 = vld [vmem:[#allocation6 + $0x8] sm:$0xf]
        %v507 = vld [vmem:[#allocation6 + $0xc] sm:$0xff]
        %v508 = vld [vmem:[#allocation6 + $0x14] sm:$0xf]
        %v509 = vld [vmem:[#allocation6 + $0x18] sm:$0xff]
        %v510 = vld [vmem:[#allocation6 + $0x20] sm:$0xf]
        %v511 = vld [vmem:[#allocation6 + $0x24] sm:$0xff]
        %v512 = vld [vmem:[#allocation6 + $0x2c] sm:$0xf]
        %v513 = vld [vmem:[#allocation6 + $0x30] sm:$0xff]
        %v514 = vld [vmem:[#allocation6 + $0x38] sm:$0xf]
        %v515 = vld [vmem:[#allocation6 + $0x3c] sm:$0xff]
        %v516 = vld [vmem:[#allocation6 + $0x44] sm:$0xf]
        %v517 = vld [vmem:[#allocation6 + $0x48] sm:$0xff]
        %v518 = vld [vmem:[#allocation6 + $0x50] sm:$0xf]
        %v519 = vld [vmem:[#allocation6 + $0x54] sm:$0xff]
        %v520 = vld [vmem:[#allocation6 + $0x5c] sm:$0xf]
        %v521 = vld [vmem:[#allocation6 + $0x60] sm:$0xff]
        %v522 = vld [vmem:[#allocation6 + $0x68] sm:$0xf]
        %v523 = vld [vmem:[#allocation6 + $0x6c] sm:$0xff]
        %v524 = vld [vmem:[#allocation6 + $0x74] sm:$0xf]
        %v525 = vld [vmem:[#allocation6 + $0x78] sm:$0xff]
        %v526 = vld [vmem:[#allocation6 + $0x80] sm:$0xf]
        %v527 = vld [vmem:[#allocation6 + $0x84] sm:$0xff]
        %v528 = vld [vmem:[#allocation6 + $0x8c] sm:$0xf]
        %v529 = vld [vmem:[#allocation6 + $0x90] sm:$0xff]
        %v530 = vld [vmem:[#allocation6 + $0x98] sm:$0xf]
        %v531 = vld [vmem:[#allocation6 + $0x9c] sm:$0xff]
        %v532 = vld [vmem:[#allocation6 + $0xa4] sm:$0xf]
        %v533 = vld [vmem:[#allocation6 + $0xa8] sm:$0xff]
        %v534 = vld [vmem:[#allocation6 + $0xb0] sm:$0xf]
        %v535 = vld [vmem:[#allocation6 + $0xb4] sm:$0xff]
        %v536 = vld [vmem:[#allocation6 + $0xbc] sm:$0xf]
        %v537 = vld [vmem:[%s3] sm:$0x7]
        %v539 = vperm.slane %v537, 0
        %v540 = vperm.slane %v537, 1
        %v541 = vperm.slane %v537, 2
        %v577 = vunpack.c.l.b16 %v505
        %v578 = vunpack.c.h.b16 %v505
        %v579 = vunpack.c.l.b16 %v506
        %v580 = vunpack.c.l.b16 %v507
        %v581 = vunpack.c.h.b16 %v507
        %v582 = vunpack.c.l.b16 %v508
        %v583 = vunpack.c.l.b16 %v509
        %v584 = vunpack.c.h.b16 %v509
        %v585 = vunpack.c.l.b16 %v510
        %v586 = vunpack.c.l.b16 %v511
        %v587 = vunpack.c.h.b16 %v511
        %v588 = vunpack.c.l.b16 %v512
        %v589 = vunpack.c.l.b16 %v513
        %v590 = vunpack.c.h.b16 %v513
        %v591 = vunpack.c.l.b16 %v514
        %v592 = vunpack.c.l.b16 %v515
        %v593 = vunpack.c.h.b16 %v515
        %v594 = vunpack.c.l.b16 %v516
        %v595 = vunpack.c.l.b16 %v517
        %v596 = vunpack.c.h.b16 %v517
        %v597 = vunpack.c.l.b16 %v518
        %v598 = vunpack.c.l.b16 %v519
        %v599 = vunpack.c.h.b16 %v519
        %v600 = vunpack.c.l.b16 %v520
        %v601 = vunpack.c.l.b16 %v521
        %v602 = vunpack.c.h.b16 %v521
        %v603 = vunpack.c.l.b16 %v522
        %v604 = vunpack.c.l.b16 %v523
        %v605 = vunpack.c.h.b16 %v523
        %v606 = vunpack.c.l.b16 %v524
        %v607 = vunpack.c.l.b16 %v525
        %v608 = vunpack.c.h.b16 %v525
        %v609 = vunpack.c.l.b16 %v526
        %v610 = vunpack.c.l.b16 %v527
        %v611 = vunpack.c.h.b16 %v527
        %v612 = vunpack.c.l.b16 %v528
        %v613 = vunpack.c.l.b16 %v529
        %v614 = vunpack.c.h.b16 %v529
        %v615 = vunpack.c.l.b16 %v530
        %v616 = vunpack.c.l.b16 %v531
        %v617 = vunpack.c.h.b16 %v531
        %v618 = vunpack.c.l.b16 %v532
        %v619 = vunpack.c.l.b16 %v533
        %v620 = vunpack.c.h.b16 %v533
        %v621 = vunpack.c.l.b16 %v534
        %v622 = vunpack.c.l.b16 %v535
        %v623 = vunpack.c.h.b16 %v535
        %v624 = vunpack.c.l.b16 %v536
        %v625 = vpack.c.b16 %v580, %v577
        %v626 = vpack.c.b16 %v581, %v578
        %v627 = vpack.c.b16 %v582, %v579
        %v628 = vpack.c.b16 %v586, %v583
        %v629 = vpack.c.b16 %v587, %v584
        %v630 = vpack.c.b16 %v588, %v585
        %v631 = vpack.c.b16 %v592, %v589
        %v632 = vpack.c.b16 %v593, %v590
        %v633 = vpack.c.b16 %v594, %v591
        %v634 = vpack.c.b16 %v598, %v595
        %v635 = vpack.c.b16 %v599, %v596
        %v636 = vpack.c.b16 %v600, %v597
        %v637 = vpack.c.b16 %v604, %v601
        %v638 = vpack.c.b16 %v605, %v602
        %v639 = vpack.c.b16 %v606, %v603
        %v640 = vpack.c.b16 %v610, %v607
        %v641 = vpack.c.b16 %v611, %v608
        %v642 = vpack.c.b16 %v612, %v609
        %v643 = vpack.c.b16 %v616, %v613
        %v644 = vpack.c.b16 %v617, %v614
        %v645 = vpack.c.b16 %v618, %v615
        %v646 = vpack.c.b16 %v622, %v619
        %v647 = vpack.c.b16 %v623, %v620
        %v648 = vpack.c.b16 %v624, %v621
        %673 = vmatpush.bf16.msra.mxu0 %v646
        %674 = vmatpush.bf16.msra.mxu0 %v643
        %675 = vmatpush.bf16.msra.mxu0 %v640
        %676 = vmatpush.bf16.msra.mxu0 %v637
        %677 = vmatpush.bf16.msra.mxu0 %v634
        %678 = vmatpush.bf16.msra.mxu0 %v631
        %679 = vmatpush.bf16.msra.mxu0 %v628
        %680 = vmatpush.bf16.msra.mxu0 %v625
        %681 = vmatmul.bf16.gmra.mxu0 %v504
        %v682 = vpop.f32.mrf.mxu0
        %v683 = vadd.f32 %v539, %v682
        %v684 = vpop.f32.mrf.mxu0
        %v685 = vadd.f32 %v539, %v684
        %686 = vdwg.mxu0
        %687 = vmatpush.bf16.msra.mxu0 %v647
        %688 = vmatpush.bf16.msra.mxu0 %v644
        %689 = vmatpush.bf16.msra.mxu0 %v641
        %690 = vmatpush.bf16.msra.mxu0 %v638
        %691 = vmatpush.bf16.msra.mxu0 %v635
        %692 = vmatpush.bf16.msra.mxu0 %v632
        %693 = vmatpush.bf16.msra.mxu0 %v629
        %694 = vmatpush.bf16.msra.mxu0 %v626
        %695 = vmatmul.bf16.gmra.mxu0 %v504
        %v696 = vpop.f32.mrf.mxu0
        %v697 = vadd.f32 %v540, %v696
        %v698 = vpop.f32.mrf.mxu0
        %v699 = vadd.f32 %v540, %v698
        %700 = vdwg.mxu0
        %701 = vmatpush.bf16.msra.mxu0 %v648
        %702 = vmatpush.bf16.msra.mxu0 %v645
        %703 = vmatpush.bf16.msra.mxu0 %v642
        %704 = vmatpush.bf16.msra.mxu0 %v639
        %705 = vmatpush.bf16.msra.mxu0 %v636
        %706 = vmatpush.bf16.msra.mxu0 %v633
        %707 = vmatpush.bf16.msra.mxu0 %v630
        %708 = vmatpush.bf16.msra.mxu0 %v627
        %709 = vmatmul.bf16.gmra.mxu0 %v504
        %v710 = vpop.f32.mrf.mxu0
        %v711 = vadd.f32 %v541, %v710
        %v712 = vpop.f32.mrf.mxu0
        %v713 = vadd.f32 %v541, %v712
        %714 = vdwg.mxu0
        %v715 = vld [vmem:[%s352] sm:$0x1]
        %vm716 = vcmp.eq.f32.partialorder %v715, 0.0
        %v717 = vsel %vm716, -1e+09, 0.0
        %v718 = vlaneseq
        %v719 = vshrl.u32 %v718, 7
        %v720 = vadd.s32 %v719, 8
        %v721 = vlaneseq
        %v722 = vand.u32 %v721, 127
        %vm723 = vcmp.ge.s32.totalorder %v719, %v722
        %vm724 = vcmp.ge.s32.totalorder %v720, %v722
        %v725 = vsel %vm723, 0.0, -1e+09
        %v726 = vsel %vm724, 0.0, -1e+09
        %729 = vrot.lane.b32.xlu0 %v683, 96
        %v730 = vpop.permute.xlu0 %729
        %731 = vrot.lane.b32.xlu0 %v685, 96
        %v732 = vpop.permute.xlu0 %731
        %735 = vrot.lane.b32.xlu0 %v683, 64
        %v736 = vpop.permute.xlu0 %735
        %737 = vrot.lane.b32.xlu0 %v685, 64
        %v738 = vpop.permute.xlu0 %737
        %741 = vrot.lane.b32.xlu0 %v683, 32
        %v742 = vpop.permute.xlu0 %741
        %743 = vrot.lane.b32.xlu0 %v685, 32
        %v744 = vpop.permute.xlu0 %743
        %v747 = vrot.slane %v736, 4
        %vm748 = vcmask 1047556
        %v749 = vsel %vm748, %v747, %v683
        %v750 = vrot.slane %v683, 4
        %v751 = vsel %vm748, %v736, %v750
        %v753 = vunpack.c.l.s4 1983009808
        %v754 = vunpack.c.0.s8 %v753
        %v755 = vperm.slane %v749, %v754
        %v757 = vunpack.c.l.s4 1983009808
        %v758 = vunpack.c.0.s8 %v757
        %v759 = vperm.slane %v751, %v758
        %v760 = vrot.slane %v742, 4
        %v761 = vsel %vm748, %v760, %v730
        %v762 = vrot.slane %v730, 4
        %v763 = vsel %vm748, %v742, %v762
        %v765 = vunpack.c.l.s4 1983009808
        %v766 = vunpack.c.0.s8 %v765
        %v767 = vperm.slane %v761, %v766
        %v769 = vunpack.c.l.s4 1983009808
        %v770 = vunpack.c.0.s8 %v769
        %v771 = vperm.slane %v763, %v770
        %v772 = vrot.slane %v767, 4
        %v773 = vsel %vm748, %v772, %v755
        %v774 = vrot.slane %v755, 4
        %v775 = vsel %vm748, %v767, %v774
        %v777 = vunpack.c.l.s4 1934713408
        %v778 = vunpack.c.0.s8 %v777
        %v779 = vperm.slane %v773, %v778
        %v781 = vunpack.c.l.s4 1934713408
        %v782 = vunpack.c.0.s8 %v781
        %v783 = vperm.slane %v775, %v782
        %v784 = vrot.slane %v771, 4
        %v785 = vsel %vm748, %v784, %v759
        %v786 = vrot.slane %v759, 4
        %v787 = vsel %vm748, %v771, %v786
        %v789 = vunpack.c.l.s4 1934713408
        %v790 = vunpack.c.0.s8 %v789
        %v791 = vperm.slane %v785, %v790
        %v793 = vunpack.c.l.s4 1934713408
        %v794 = vunpack.c.0.s8 %v793
        %v795 = vperm.slane %v787, %v794
        %v796 = vrot.slane %v779, 4
        %v797 = vsel %vm748, 0.0, %v796
        %v798 = vrot.slane %v783, 4
        %v799 = vsel %vm748, 0.0, %v798
        %v800 = vrot.slane %v791, 4
        %v801 = vsel %vm748, 0.0, %v800
        %v802 = vrot.slane %v795, 4
        %v803 = vsel %vm748, 0.0, %v802
        %v804 = vrot.slane %v738, 4
        %v805 = vsel %vm748, %v804, %v685
        %v806 = vrot.slane %v685, 4
        %v807 = vsel %vm748, %v738, %v806
        %v809 = vunpack.c.l.s4 1983009808
        %v810 = vunpack.c.0.s8 %v809
        %v811 = vperm.slane %v805, %v810
        %v813 = vunpack.c.l.s4 1983009808
        %v814 = vunpack.c.0.s8 %v813
        %v815 = vperm.slane %v807, %v814
        %v816 = vrot.slane %v744, 4
        %v817 = vsel %vm748, %v816, %v732
        %v818 = vrot.slane %v732, 4
        %v819 = vsel %vm748, %v744, %v818
        %v821 = vunpack.c.l.s4 1983009808
        %v822 = vunpack.c.0.s8 %v821
        %v823 = vperm.slane %v817, %v822
        %v825 = vunpack.c.l.s4 1983009808
        %v826 = vunpack.c.0.s8 %v825
        %v827 = vperm.slane %v819, %v826
        %v828 = vrot.slane %v823, 4
        %v829 = vsel %vm748, %v828, %v811
        %v830 = vrot.slane %v811, 4
        %v831 = vsel %vm748, %v823, %v830
        %v833 = vunpack.c.l.s4 1934713408
        %v834 = vunpack.c.0.s8 %v833
        %v835 = vperm.slane %v829, %v834
        %v837 = vunpack.c.l.s4 1934713408
        %v838 = vunpack.c.0.s8 %v837
        %v839 = vperm.slane %v831, %v838
        %v840 = vrot.slane %v827, 4
        %v841 = vsel %vm748, %v840, %v815
        %v842 = vrot.slane %v815, 4
        %v843 = vsel %vm748, %v827, %v842
        %v845 = vunpack.c.l.s4 1934713408
        %v846 = vunpack.c.0.s8 %v845
        %v847 = vperm.slane %v841, %v846
        %v849 = vunpack.c.l.s4 1934713408
        %v850 = vunpack.c.0.s8 %v849
        %v851 = vperm.slane %v843, %v850
        %v852 = vrot.slane %v835, 4
        %v853 = vsel %vm748, 0.0, %v852
        %v854 = vrot.slane %v839, 4
        %v855 = vsel %vm748, 0.0, %v854
        %v856 = vrot.slane %v847, 4
        %v857 = vsel %vm748, 0.0, %v856
        %v858 = vrot.slane %v851, 4
        %v859 = vsel %vm748, 0.0, %v858
        %v860 = vsel %vm748, %v798, %v779
        %v862 = vunpack.c.l.s4 1983009808
        %v863 = vunpack.c.0.s8 %v862
        %v864 = vperm.slane %v860, %v863
        %v865 = vrot.slane %v799, 4
        %v866 = vsel %vm748, %v865, %v797
        %v868 = vunpack.c.l.s4 1983009808
        %v869 = vunpack.c.0.s8 %v868
        %v870 = vperm.slane %v866, %v869
        %v871 = vsel %vm748, %v802, %v791
        %v873 = vunpack.c.l.s4 1983009808
        %v874 = vunpack.c.0.s8 %v873
        %v875 = vperm.slane %v871, %v874
        %v876 = vrot.slane %v803, 4
        %v877 = vsel %vm748, %v876, %v801
        %v879 = vunpack.c.l.s4 1983009808
        %v880 = vunpack.c.0.s8 %v879
        %v881 = vperm.slane %v877, %v880
        %v882 = vrot.slane %v870, 4
        %v883 = vsel %vm748, %v882, %v864
        %v884 = vrot.slane %v864, 4
        %v885 = vsel %vm748, %v870, %v884
        %v887 = vunpack.c.l.s4 1934713408
        %v888 = vunpack.c.0.s8 %v887
        %v889 = vperm.slane %v883, %v888
        %v891 = vunpack.c.l.s4 1934713408
        %v892 = vunpack.c.0.s8 %v891
        %v893 = vperm.slane %v885, %v892
        %v894 = vrot.slane %v881, 4
        %v895 = vsel %vm748, %v894, %v875
        %v896 = vrot.slane %v875, 4
        %v897 = vsel %vm748, %v881, %v896
        %v899 = vunpack.c.l.s4 1934713408
        %v900 = vunpack.c.0.s8 %v899
        %v901 = vperm.slane %v895, %v900
        %v903 = vunpack.c.l.s4 1934713408
        %v904 = vunpack.c.0.s8 %v903
        %v905 = vperm.slane %v897, %v904
        %v906 = vrot.slane %v901, 4
        %v907 = vsel %vm748, %v906, %v889
        %v908 = vrot.slane %v889, 4
        %v909 = vsel %vm748, %v901, %v908
        %v910 = vrot.slane %v905, 4
        %v911 = vsel %vm748, %v910, %v893
        %v912 = vrot.slane %v893, 4
        %v913 = vsel %vm748, %v905, %v912
        %v914 = vsel %vm748, %v854, %v835
        %v916 = vunpack.c.l.s4 1983009808
        %v917 = vunpack.c.0.s8 %v916
        %v918 = vperm.slane %v914, %v917
        %v919 = vrot.slane %v855, 4
        %v920 = vsel %vm748, %v919, %v853
        %v922 = vunpack.c.l.s4 1983009808
        %v923 = vunpack.c.0.s8 %v922
        %v924 = vperm.slane %v920, %v923
        %v925 = vsel %vm748, %v858, %v847
        %v927 = vunpack.c.l.s4 1983009808
        %v928 = vunpack.c.0.s8 %v927
        %v929 = vperm.slane %v925, %v928
        %v930 = vrot.slane %v859, 4
        %v931 = vsel %vm748, %v930, %v857
        %v933 = vunpack.c.l.s4 1983009808
        %v934 = vunpack.c.0.s8 %v933
        %v935 = vperm.slane %v931, %v934
        %v936 = vrot.slane %v924, 4
        %v937 = vsel %vm748, %v936, %v918
        %v938 = vrot.slane %v918, 4
        %v939 = vsel %vm748, %v924, %v938
        %v941 = vunpack.c.l.s4 1934713408
        %v942 = vunpack.c.0.s8 %v941
        %v943 = vperm.slane %v937, %v942
        %v945 = vunpack.c.l.s4 1934713408
        %v946 = vunpack.c.0.s8 %v945
        %v947 = vperm.slane %v939, %v946
        %v948 = vrot.slane %v935, 4
        %v949 = vsel %vm748, %v948, %v929
        %v950 = vrot.slane %v929, 4
        %v951 = vsel %vm748, %v935, %v950
        %v953 = vunpack.c.l.s4 1934713408
        %v954 = vunpack.c.0.s8 %v953
        %v955 = vperm.slane %v949, %v954
        %v957 = vunpack.c.l.s4 1934713408
        %v958 = vunpack.c.0.s8 %v957
        %v959 = vperm.slane %v951, %v958
        %v960 = vrot.slane %v955, 4
        %v961 = vsel %vm748, %v960, %v943
        %v962 = vrot.slane %v943, 4
        %v963 = vsel %vm748, %v955, %v962
        %v964 = vrot.slane %v959, 4
        %v965 = vsel %vm748, %v964, %v947
        %v966 = vrot.slane %v947, 4
        %v967 = vsel %vm748, %v959, %v966
        %970 = vrot.lane.b32.xlu0 %v697, 96
        %v971 = vpop.permute.xlu0 %970
        %972 = vrot.lane.b32.xlu0 %v699, 96
        %v973 = vpop.permute.xlu0 %972
        %976 = vrot.lane.b32.xlu0 %v697, 64
        %v977 = vpop.permute.xlu0 %976
        %978 = vrot.lane.b32.xlu0 %v699, 64
        %v979 = vpop.permute.xlu0 %978
        %982 = vrot.lane.b32.xlu0 %v697, 32
        %v983 = vpop.permute.xlu0 %982
        %984 = vrot.lane.b32.xlu0 %v699, 32
        %v985 = vpop.permute.xlu0 %984
        %v988 = vrot.slane %v977, 4
        %v989 = vsel %vm748, %v988, %v697
        %v990 = vrot.slane %v697, 4
        %v991 = vsel %vm748, %v977, %v990
        %v993 = vunpack.c.l.s4 1983009808
        %v994 = vunpack.c.0.s8 %v993
        %v995 = vperm.slane %v989, %v994
        %v997 = vunpack.c.l.s4 1983009808
        %v998 = vunpack.c.0.s8 %v997
        %v999 = vperm.slane %v991, %v998
        %v1000 = vrot.slane %v983, 4
        %v1001 = vsel %vm748, %v1000, %v971
        %v1002 = vrot.slane %v971, 4
        %v1003 = vsel %vm748, %v983, %v1002
        %v1005 = vunpack.c.l.s4 1983009808
        %v1006 = vunpack.c.0.s8 %v1005
        %v1007 = vperm.slane %v1001, %v1006
        %v1009 = vunpack.c.l.s4 1983009808
        %v1010 = vunpack.c.0.s8 %v1009
        %v1011 = vperm.slane %v1003, %v1010
        %v1012 = vrot.slane %v1007, 4
        %v1013 = vsel %vm748, %v1012, %v995
        %v1014 = vrot.slane %v995, 4
        %v1015 = vsel %vm748, %v1007, %v1014
        %v1017 = vunpack.c.l.s4 1934713408
        %v1018 = vunpack.c.0.s8 %v1017
        %v1019 = vperm.slane %v1013, %v1018
        %v1021 = vunpack.c.l.s4 1934713408
        %v1022 = vunpack.c.0.s8 %v1021
        %v1023 = vperm.slane %v1015, %v1022
        %v1024 = vrot.slane %v1011, 4
        %v1025 = vsel %vm748, %v1024, %v999
        %v1026 = vrot.slane %v999, 4
        %v1027 = vsel %vm748, %v1011, %v1026
        %v1029 = vunpack.c.l.s4 1934713408
        %v1030 = vunpack.c.0.s8 %v1029
        %v1031 = vperm.slane %v1025, %v1030
        %v1033 = vunpack.c.l.s4 1934713408
        %v1034 = vunpack.c.0.s8 %v1033
        %v1035 = vperm.slane %v1027, %v1034
        %v1036 = vrot.slane %v1019, 4
        %v1037 = vsel %vm748, 0.0, %v1036
        %v1038 = vrot.slane %v1023, 4
        %v1039 = vsel %vm748, 0.0, %v1038
        %v1040 = vrot.slane %v1031, 4
        %v1041 = vsel %vm748, 0.0, %v1040
        %v1042 = vrot.slane %v1035, 4
        %v1043 = vsel %vm748, 0.0, %v1042
        %v1044 = vrot.slane %v979, 4
        %v1045 = vsel %vm748, %v1044, %v699
        %v1046 = vrot.slane %v699, 4
        %v1047 = vsel %vm748, %v979, %v1046
        %v1049 = vunpack.c.l.s4 1983009808
        %v1050 = vunpack.c.0.s8 %v1049
        %v1051 = vperm.slane %v1045, %v1050
        %v1053 = vunpack.c.l.s4 1983009808
        %v1054 = vunpack.c.0.s8 %v1053
        %v1055 = vperm.slane %v1047, %v1054
        %v1056 = vrot.slane %v985, 4
        %v1057 = vsel %vm748, %v1056, %v973
        %v1058 = vrot.slane %v973, 4
        %v1059 = vsel %vm748, %v985, %v1058
        %v1061 = vunpack.c.l.s4 1983009808
        %v1062 = vunpack.c.0.s8 %v1061
        %v1063 = vperm.slane %v1057, %v1062
        %v1065 = vunpack.c.l.s4 1983009808
        %v1066 = vunpack.c.0.s8 %v1065
        %v1067 = vperm.slane %v1059, %v1066
        %v1068 = vrot.slane %v1063, 4
        %v1069 = vsel %vm748, %v1068, %v1051
        %v1070 = vrot.slane %v1051, 4
        %v1071 = vsel %vm748, %v1063, %v1070
        %v1073 = vunpack.c.l.s4 1934713408
        %v1074 = vunpack.c.0.s8 %v1073
        %v1075 = vperm.slane %v1069, %v1074
        %v1077 = vunpack.c.l.s4 1934713408
        %v1078 = vunpack.c.0.s8 %v1077
        %v1079 = vperm.slane %v1071, %v1078
        %v1080 = vrot.slane %v1067, 4
        %v1081 = vsel %vm748, %v1080, %v1055
        %v1082 = vrot.slane %v1055, 4
        %v1083 = vsel %vm748, %v1067, %v1082
        %v1085 = vunpack.c.l.s4 1934713408
        %v1086 = vunpack.c.0.s8 %v1085
        %v1087 = vperm.slane %v1081, %v1086
        %v1089 = vunpack.c.l.s4 1934713408
        %v1090 = vunpack.c.0.s8 %v1089
        %v1091 = vperm.slane %v1083, %v1090
        %v1092 = vrot.slane %v1075, 4
        %v1093 = vsel %vm748, 0.0, %v1092
        %v1094 = vrot.slane %v1079, 4
        %v1095 = vsel %vm748, 0.0, %v1094
        %v1096 = vrot.slane %v1087, 4
        %v1097 = vsel %vm748, 0.0, %v1096
        %v1098 = vrot.slane %v1091, 4
        %v1099 = vsel %vm748, 0.0, %v1098
        %v1100 = vsel %vm748, %v1038, %v1019
        %v1102 = vunpack.c.l.s4 1983009808
        %v1103 = vunpack.c.0.s8 %v1102
        %v1104 = vperm.slane %v1100, %v1103
        %v1105 = vrot.slane %v1039, 4
        %v1106 = vsel %vm748, %v1105, %v1037
        %v1108 = vunpack.c.l.s4 1983009808
        %v1109 = vunpack.c.0.s8 %v1108
        %v1110 = vperm.slane %v1106, %v1109
        %v1111 = vsel %vm748, %v1042, %v1031
        %v1113 = vunpack.c.l.s4 1983009808
        %v1114 = vunpack.c.0.s8 %v1113
        %v1115 = vperm.slane %v1111, %v1114
        %v1116 = vrot.slane %v1043, 4
        %v1117 = vsel %vm748, %v1116, %v1041
        %v1119 = vunpack.c.l.s4 1983009808
        %v1120 = vunpack.c.0.s8 %v1119
        %v1121 = vperm.slane %v1117, %v1120
        %v1122 = vrot.slane %v1110, 4
        %v1123 = vsel %vm748, %v1122, %v1104
        %v1124 = vrot.slane %v1104, 4
        %v1125 = vsel %vm748, %v1110, %v1124
        %v1127 = vunpack.c.l.s4 1934713408
        %v1128 = vunpack.c.0.s8 %v1127
        %v1129 = vperm.slane %v1123, %v1128
        %v1131 = vunpack.c.l.s4 1934713408
        %v1132 = vunpack.c.0.s8 %v1131
        %v1133 = vperm.slane %v1125, %v1132
        %v1134 = vrot.slane %v1121, 4
        %v1135 = vsel %vm748, %v1134, %v1115
        %v1136 = vrot.slane %v1115, 4
        %v1137 = vsel %vm748, %v1121, %v1136
        %v1139 = vunpack.c.l.s4 1934713408
        %v1140 = vunpack.c.0.s8 %v1139
        %v1141 = vperm.slane %v1135, %v1140
        %v1143 = vunpack.c.l.s4 1934713408
        %v1144 = vunpack.c.0.s8 %v1143
        %v1145 = vperm.slane %v1137, %v1144
        %v1146 = vrot.slane %v1141, 4
        %v1147 = vsel %vm748, %v1146, %v1129
        %v1148 = vrot.slane %v1129, 4
        %v1149 = vsel %vm748, %v1141, %v1148
        %v1150 = vrot.slane %v1145, 4
        %v1151 = vsel %vm748, %v1150, %v1133
        %v1152 = vrot.slane %v1133, 4
        %v1153 = vsel %vm748, %v1145, %v1152
        %v1154 = vsel %vm748, %v1094, %v1075
        %v1156 = vunpack.c.l.s4 1983009808
        %v1157 = vunpack.c.0.s8 %v1156
        %v1158 = vperm.slane %v1154, %v1157
        %v1159 = vrot.slane %v1095, 4
        %v1160 = vsel %vm748, %v1159, %v1093
        %v1162 = vunpack.c.l.s4 1983009808
        %v1163 = vunpack.c.0.s8 %v1162
        %v1164 = vperm.slane %v1160, %v1163
        %v1165 = vsel %vm748, %v1098, %v1087
        %v1167 = vunpack.c.l.s4 1983009808
        %v1168 = vunpack.c.0.s8 %v1167
        %v1169 = vperm.slane %v1165, %v1168
        %v1170 = vrot.slane %v1099, 4
        %v1171 = vsel %vm748, %v1170, %v1097
        %v1173 = vunpack.c.l.s4 1983009808
        %v1174 = vunpack.c.0.s8 %v1173
        %v1175 = vperm.slane %v1171, %v1174
        %v1176 = vrot.slane %v1164, 4
        %v1177 = vsel %vm748, %v1176, %v1158
        %v1178 = vrot.slane %v1158, 4
        %v1179 = vsel %vm748, %v1164, %v1178
        %v1181 = vunpack.c.l.s4 1934713408
        %v1182 = vunpack.c.0.s8 %v1181
        %v1183 = vperm.slane %v1177, %v1182
        %v1185 = vunpack.c.l.s4 1934713408
        %v1186 = vunpack.c.0.s8 %v1185
        %v1187 = vperm.slane %v1179, %v1186
        %v1188 = vrot.slane %v1175, 4
        %v1189 = vsel %vm748, %v1188, %v1169
        %v1190 = vrot.slane %v1169, 4
        %v1191 = vsel %vm748, %v1175, %v1190
        %v1193 = vunpack.c.l.s4 1934713408
        %v1194 = vunpack.c.0.s8 %v1193
        %v1195 = vperm.slane %v1189, %v1194
        %v1197 = vunpack.c.l.s4 1934713408
        %v1198 = vunpack.c.0.s8 %v1197
        %v1199 = vperm.slane %v1191, %v1198
        %v1200 = vrot.slane %v1195, 4
        %v1201 = vsel %vm748, %v1200, %v1183
        %v1202 = vrot.slane %v1183, 4
        %v1203 = vsel %vm748, %v1195, %v1202
        %v1204 = vrot.slane %v1199, 4
        %v1205 = vsel %vm748, %v1204, %v1187
        %v1206 = vrot.slane %v1187, 4
        %v1207 = vsel %vm748, %v1199, %v1206
        %1210 = vrot.lane.b32.xlu0 %v711, 96
        %v1211 = vpop.permute.xlu0 %1210
        %1212 = vrot.lane.b32.xlu0 %v713, 96
        %v1213 = vpop.permute.xlu0 %1212
        %1216 = vrot.lane.b32.xlu0 %v711, 64
        %v1217 = vpop.permute.xlu0 %1216
        %1218 = vrot.lane.b32.xlu0 %v713, 64
        %v1219 = vpop.permute.xlu0 %1218
        %1222 = vrot.lane.b32.xlu0 %v711, 32
        %v1223 = vpop.permute.xlu0 %1222
        %1224 = vrot.lane.b32.xlu0 %v713, 32
        %v1225 = vpop.permute.xlu0 %1224
        %v1228 = vrot.slane %v1217, 4
        %v1229 = vsel %vm748, %v1228, %v711
        %v1230 = vrot.slane %v711, 4
        %v1231 = vsel %vm748, %v1217, %v1230
        %v1233 = vunpack.c.l.s4 1983009808
        %v1234 = vunpack.c.0.s8 %v1233
        %v1235 = vperm.slane %v1229, %v1234
        %v1237 = vunpack.c.l.s4 1983009808
        %v1238 = vunpack.c.0.s8 %v1237
        %v1239 = vperm.slane %v1231, %v1238
        %v1240 = vrot.slane %v1223, 4
        %v1241 = vsel %vm748, %v1240, %v1211
        %v1242 = vrot.slane %v1211, 4
        %v1243 = vsel %vm748, %v1223, %v1242
        %v1245 = vunpack.c.l.s4 1983009808
        %v1246 = vunpack.c.0.s8 %v1245
        %v1247 = vperm.slane %v1241, %v1246
        %v1249 = vunpack.c.l.s4 1983009808
        %v1250 = vunpack.c.0.s8 %v1249
        %v1251 = vperm.slane %v1243, %v1250
        %v1252 = vrot.slane %v1247, 4
        %v1253 = vsel %vm748, %v1252, %v1235
        %v1254 = vrot.slane %v1235, 4
        %v1255 = vsel %vm748, %v1247, %v1254
        %v1257 = vunpack.c.l.s4 1934713408
        %v1258 = vunpack.c.0.s8 %v1257
        %v1259 = vperm.slane %v1253, %v1258
        %v1261 = vunpack.c.l.s4 1934713408
        %v1262 = vunpack.c.0.s8 %v1261
        %v1263 = vperm.slane %v1255, %v1262
        %v1264 = vrot.slane %v1251, 4
        %v1265 = vsel %vm748, %v1264, %v1239
        %v1266 = vrot.slane %v1239, 4
        %v1267 = vsel %vm748, %v1251, %v1266
        %v1269 = vunpack.c.l.s4 1934713408
        %v1270 = vunpack.c.0.s8 %v1269
        %v1271 = vperm.slane %v1265, %v1270
        %v1273 = vunpack.c.l.s4 1934713408
        %v1274 = vunpack.c.0.s8 %v1273
        %v1275 = vperm.slane %v1267, %v1274
        %v1276 = vrot.slane %v1259, 4
        %v1277 = vsel %vm748, 0.0, %v1276
        %v1278 = vrot.slane %v1263, 4
        %v1279 = vsel %vm748, 0.0, %v1278
        %v1280 = vrot.slane %v1271, 4
        %v1281 = vsel %vm748, 0.0, %v1280
        %v1282 = vrot.slane %v1275, 4
        %v1283 = vsel %vm748, 0.0, %v1282
        %v1284 = vrot.slane %v1219, 4
        %v1285 = vsel %vm748, %v1284, %v713
        %v1286 = vrot.slane %v713, 4
        %v1287 = vsel %vm748, %v1219, %v1286
        %v1289 = vunpack.c.l.s4 1983009808
        %v1290 = vunpack.c.0.s8 %v1289
        %v1291 = vperm.slane %v1285, %v1290
        %v1293 = vunpack.c.l.s4 1983009808
        %v1294 = vunpack.c.0.s8 %v1293
        %v1295 = vperm.slane %v1287, %v1294
        %v1296 = vrot.slane %v1225, 4
        %v1297 = vsel %vm748, %v1296, %v1213
        %v1298 = vrot.slane %v1213, 4
        %v1299 = vsel %vm748, %v1225, %v1298
        %v1301 = vunpack.c.l.s4 1983009808
        %v1302 = vunpack.c.0.s8 %v1301
        %v1303 = vperm.slane %v1297, %v1302
        %v1305 = vunpack.c.l.s4 1983009808
        %v1306 = vunpack.c.0.s8 %v1305
        %v1307 = vperm.slane %v1299, %v1306
        %v1308 = vrot.slane %v1303, 4
        %v1309 = vsel %vm748, %v1308, %v1291
        %v1310 = vrot.slane %v1291, 4
        %v1311 = vsel %vm748, %v1303, %v1310
        %v1313 = vunpack.c.l.s4 1934713408
        %v1314 = vunpack.c.0.s8 %v1313
        %v1315 = vperm.slane %v1309, %v1314
        %v1317 = vunpack.c.l.s4 1934713408
        %v1318 = vunpack.c.0.s8 %v1317
        %v1319 = vperm.slane %v1311, %v1318
        %v1320 = vrot.slane %v1307, 4
        %v1321 = vsel %vm748, %v1320, %v1295
        %v1322 = vrot.slane %v1295, 4
        %v1323 = vsel %vm748, %v1307, %v1322
        %v1325 = vunpack.c.l.s4 1934713408
        %v1326 = vunpack.c.0.s8 %v1325
        %v1327 = vperm.slane %v1321, %v1326
        %v1329 = vunpack.c.l.s4 1934713408
        %v1330 = vunpack.c.0.s8 %v1329
        %v1331 = vperm.slane %v1323, %v1330
        %v1332 = vrot.slane %v1315, 4
        %v1333 = vsel %vm748, 0.0, %v1332
        %v1334 = vrot.slane %v1319, 4
        %v1335 = vsel %vm748, 0.0, %v1334
        %v1336 = vrot.slane %v1327, 4
        %v1337 = vsel %vm748, 0.0, %v1336
        %v1338 = vrot.slane %v1331, 4
        %v1339 = vsel %vm748, 0.0, %v1338
        %v1340 = vsel %vm748, %v1278, %v1259
        %v1342 = vunpack.c.l.s4 1983009808
        %v1343 = vunpack.c.0.s8 %v1342
        %v1344 = vperm.slane %v1340, %v1343
        %v1345 = vrot.slane %v1279, 4
        %v1346 = vsel %vm748, %v1345, %v1277
        %v1348 = vunpack.c.l.s4 1983009808
        %v1349 = vunpack.c.0.s8 %v1348
        %v1350 = vperm.slane %v1346, %v1349
        %v1351 = vsel %vm748, %v1282, %v1271
        %v1353 = vunpack.c.l.s4 1983009808
        %v1354 = vunpack.c.0.s8 %v1353
        %v1355 = vperm.slane %v1351, %v1354
        %v1356 = vrot.slane %v1283, 4
        %v1357 = vsel %vm748, %v1356, %v1281
        %v1359 = vunpack.c.l.s4 1983009808
        %v1360 = vunpack.c.0.s8 %v1359
        %v1361 = vperm.slane %v1357, %v1360
        %v1362 = vrot.slane %v1350, 4
        %v1363 = vsel %vm748, %v1362, %v1344
        %v1364 = vrot.slane %v1344, 4
        %v1365 = vsel %vm748, %v1350, %v1364
        %v1367 = vunpack.c.l.s4 1934713408
        %v1368 = vunpack.c.0.s8 %v1367
        %v1369 = vperm.slane %v1363, %v1368
        %v1371 = vunpack.c.l.s4 1934713408
        %v1372 = vunpack.c.0.s8 %v1371
        %v1373 = vperm.slane %v1365, %v1372
        %v1374 = vrot.slane %v1361, 4
        %v1375 = vsel %vm748, %v1374, %v1355
        %v1376 = vrot.slane %v1355, 4
        %v1377 = vsel %vm748, %v1361, %v1376
        %v1379 = vunpack.c.l.s4 1934713408
        %v1380 = vunpack.c.0.s8 %v1379
        %v1381 = vperm.slane %v1375, %v1380
        %v1383 = vunpack.c.l.s4 1934713408
        %v1384 = vunpack.c.0.s8 %v1383
        %v1385 = vperm.slane %v1377, %v1384
        %v1386 = vrot.slane %v1381, 4
        %v1387 = vsel %vm748, %v1386, %v1369
        %v1388 = vrot.slane %v1369, 4
        %v1389 = vsel %vm748, %v1381, %v1388
        %v1390 = vrot.slane %v1385, 4
        %v1391 = vsel %vm748, %v1390, %v1373
        %v1392 = vrot.slane %v1373, 4
        %v1393 = vsel %vm748, %v1385, %v1392
        %v1394 = vsel %vm748, %v1334, %v1315
        %v1396 = vunpack.c.l.s4 1983009808
        %v1397 = vunpack.c.0.s8 %v1396
        %v1398 = vperm.slane %v1394, %v1397
        %v1399 = vrot.slane %v1335, 4
        %v1400 = vsel %vm748, %v1399, %v1333
        %v1402 = vunpack.c.l.s4 1983009808
        %v1403 = vunpack.c.0.s8 %v1402
        %v1404 = vperm.slane %v1400, %v1403
        %v1405 = vsel %vm748, %v1338, %v1327
        %v1407 = vunpack.c.l.s4 1983009808
        %v1408 = vunpack.c.0.s8 %v1407
        %v1409 = vperm.slane %v1405, %v1408
        %v1410 = vrot.slane %v1339, 4
        %v1411 = vsel %vm748, %v1410, %v1337
        %v1413 = vunpack.c.l.s4 1983009808
        %v1414 = vunpack.c.0.s8 %v1413
        %v1415 = vperm.slane %v1411, %v1414
        %v1416 = vrot.slane %v1404, 4
        %v1417 = vsel %vm748, %v1416, %v1398
        %v1418 = vrot.slane %v1398, 4
        %v1419 = vsel %vm748, %v1404, %v1418
        %v1421 = vunpack.c.l.s4 1934713408
        %v1422 = vunpack.c.0.s8 %v1421
        %v1423 = vperm.slane %v1417, %v1422
        %v1425 = vunpack.c.l.s4 1934713408
        %v1426 = vunpack.c.0.s8 %v1425
        %v1427 = vperm.slane %v1419, %v1426
        %v1428 = vrot.slane %v1415, 4
        %v1429 = vsel %vm748, %v1428, %v1409
        %v1430 = vrot.slane %v1409, 4
        %v1431 = vsel %vm748, %v1415, %v1430
        %v1433 = vunpack.c.l.s4 1934713408
        %v1434 = vunpack.c.0.s8 %v1433
        %v1435 = vperm.slane %v1429, %v1434
        %v1437 = vunpack.c.l.s4 1934713408
        %v1438 = vunpack.c.0.s8 %v1437
        %v1439 = vperm.slane %v1431, %v1438
        %v1440 = vrot.slane %v1435, 4
        %v1441 = vsel %vm748, %v1440, %v1423
        %v1442 = vrot.slane %v1423, 4
        %v1443 = vsel %vm748, %v1435, %v1442
        %v1444 = vrot.slane %v1439, 4
        %v1445 = vsel %vm748, %v1444, %v1427
        %v1446 = vrot.slane %v1427, 4
        %v1447 = vsel %vm748, %v1439, %v1446
        %v1449 = vperm.slane %v717, 0
        %v1451 = vadd.f32 %v1449, %v725
        %v1452 = vadd.f32 %v1449, %v726
        %v1453 = vpack.c.bf16 %v907, %v907
        %v1454 = vpack.c.bf16 %v961, %v961
        %v1455 = vpack.c.bf16 %v909, %v909
        %v1456 = vpack.c.bf16 %v963, %v963
        %v1457 = vpack.c.bf16 %v911, %v911
        %v1458 = vpack.c.bf16 %v965, %v965
        %v1459 = vpack.c.bf16 %v913, %v913
        %v1460 = vpack.c.bf16 %v967, %v967
        %v1461 = vpack.c.bf16 %v1147, %v1147
        %v1462 = vpack.c.bf16 %v1201, %v1201
        %v1463 = vpack.c.bf16 %v1149, %v1149
        %v1464 = vpack.c.bf16 %v1203, %v1203
        %v1465 = vpack.c.bf16 %v1151, %v1151
        %v1466 = vpack.c.bf16 %v1205, %v1205
        %v1467 = vpack.c.bf16 %v1153, %v1153
        %v1468 = vpack.c.bf16 %v1207, %v1207
        %v1471 = vunpack.c.l.b16 %v1453
        %v1472 = vunpack.c.l.b16 %v1454
        %v1473 = vpack.c.b16 %v1472, %v1471
        %v1476 = vunpack.c.l.b16 %v1461
        %v1477 = vunpack.c.l.b16 %v1462
        %v1478 = vpack.c.b16 %v1477, %v1476
        %vm1479 = vcmask 261120
        %v1481 = vsel %vm1479, %v1473, 0
        %v1484 = vsel %vm1479, %v1478, 0
        %1486 = vmatpush.bf16.xpose.msra.mxu0 0
        %1487 = vmatpush.bf16.xpose.msra.mxu0 0
        %1488 = vmatpush.bf16.xpose.msra.mxu0 0
        %1489 = vmatpush.bf16.xpose.msra.mxu0 0
        %1490 = vmatpush.bf16.xpose.msra.mxu0 0
        %1491 = vmatpush.bf16.xpose.msra.mxu0 0
        %1492 = vmatpush.bf16.xpose.msra.mxu0 0
        %1493 = vmatpush.bf16.xpose.msra.mxu0 %v1484
        %1494 = vmatmul.bf16.gmra.mxu0 %v1481
        %v1495 = vpop.f32.mrf.mxu0
        %v1496 = vadd.f32 0.0, %v1495
        %v1497 = vpop.f32.mrf.mxu0
        %v1498 = vadd.f32 0.0, %v1497
        %1499 = vdwg.mxu0
        %v1502 = vunpack.c.l.b16 %v1455
        %v1503 = vunpack.c.l.b16 %v1456
        %v1504 = vpack.c.b16 %v1503, %v1502
        %v1507 = vunpack.c.l.b16 %v1463
        %v1508 = vunpack.c.l.b16 %v1464
        %v1509 = vpack.c.b16 %v1508, %v1507
        %v1511 = vsel %vm1479, %v1504, 0
        %v1514 = vsel %vm1479, %v1509, 0
        %1516 = vmatpush.bf16.xpose.msra.mxu0 0
        %1517 = vmatpush.bf16.xpose.msra.mxu0 0
        %1518 = vmatpush.bf16.xpose.msra.mxu0 0
        %1519 = vmatpush.bf16.xpose.msra.mxu0 0
        %1520 = vmatpush.bf16.xpose.msra.mxu0 0
        %1521 = vmatpush.bf16.xpose.msra.mxu0 0
        %1522 = vmatpush.bf16.xpose.msra.mxu0 0
        %1523 = vmatpush.bf16.xpose.msra.mxu0 %v1514
        %1524 = vmatmul.bf16.gmra.mxu0 %v1511
        %v1525 = vpop.f32.mrf.mxu0
        %v1526 = vadd.f32 0.0, %v1525
        %v1527 = vpop.f32.mrf.mxu0
        %v1528 = vadd.f32 0.0, %v1527
        %1529 = vdwg.mxu0
        %v1532 = vunpack.c.l.b16 %v1457
        %v1533 = vunpack.c.l.b16 %v1458
        %v1534 = vpack.c.b16 %v1533, %v1532
        %v1537 = vunpack.c.l.b16 %v1465
        %v1538 = vunpack.c.l.b16 %v1466
        %v1539 = vpack.c.b16 %v1538, %v1537
        %v1541 = vsel %vm1479, %v1534, 0
        %v1544 = vsel %vm1479, %v1539, 0
        %1546 = vmatpush.bf16.xpose.msra.mxu0 0
        %1547 = vmatpush.bf16.xpose.msra.mxu0 0
        %1548 = vmatpush.bf16.xpose.msra.mxu0 0
        %1549 = vmatpush.bf16.xpose.msra.mxu0 0
        %1550 = vmatpush.bf16.xpose.msra.mxu0 0
        %1551 = vmatpush.bf16.xpose.msra.mxu0 0
        %1552 = vmatpush.bf16.xpose.msra.mxu0 0
        %1553 = vmatpush.bf16.xpose.msra.mxu0 %v1544
        %1554 = vmatmul.bf16.gmra.mxu0 %v1541
        %v1555 = vpop.f32.mrf.mxu0
        %v1556 = vadd.f32 0.0, %v1555
        %v1557 = vpop.f32.mrf.mxu0
        %v1558 = vadd.f32 0.0, %v1557
        %1559 = vdwg.mxu0
        %v1562 = vunpack.c.l.b16 %v1459
        %v1563 = vunpack.c.l.b16 %v1460
        %v1564 = vpack.c.b16 %v1563, %v1562
        %v1567 = vunpack.c.l.b16 %v1467
        %v1568 = vunpack.c.l.b16 %v1468
        %v1569 = vpack.c.b16 %v1568, %v1567
        %v1571 = vsel %vm1479, %v1564, 0
        %v1574 = vsel %vm1479, %v1569, 0
        %1576 = vmatpush.bf16.xpose.msra.mxu0 0
        %1577 = vmatpush.bf16.xpose.msra.mxu0 0
        %1578 = vmatpush.bf16.xpose.msra.mxu0 0
        %1579 = vmatpush.bf16.xpose.msra.mxu0 0
        %1580 = vmatpush.bf16.xpose.msra.mxu0 0
        %1581 = vmatpush.bf16.xpose.msra.mxu0 0
        %1582 = vmatpush.bf16.xpose.msra.mxu0 0
        %1583 = vmatpush.bf16.xpose.msra.mxu0 %v1574
        %1584 = vmatmul.bf16.gmra.mxu0 %v1571
        %v1585 = vpop.f32.mrf.mxu0
        %v1586 = vadd.f32 0.0, %v1585
        %v1587 = vpop.f32.mrf.mxu0
        %v1588 = vadd.f32 0.0, %v1587
        %1589 = vdwg.mxu0
        %v1590 = vmul.f32 %v1496, 0.17677669
        %v1591 = vmul.f32 %v1498, 0.17677669
        %v1592 = vmul.f32 %v1526, 0.17677669
        %v1593 = vmul.f32 %v1528, 0.17677669
        %v1594 = vmul.f32 %v1556, 0.17677669
        %v1595 = vmul.f32 %v1558, 0.17677669
        %v1596 = vmul.f32 %v1586, 0.17677669
        %v1597 = vmul.f32 %v1588, 0.17677669
        %v1598 = vadd.f32 %v1590, %v1451
        %v1599 = vadd.f32 %v1591, %v1452
        %v1600 = vadd.f32 %v1592, %v1451
        %v1601 = vadd.f32 %v1593, %v1452
        %v1602 = vadd.f32 %v1594, %v1451
        %v1603 = vadd.f32 %v1595, %v1452
        %v1604 = vadd.f32 %v1596, %v1451
        %v1605 = vadd.f32 %v1597, %v1452
        %vm1606 = vcmask 130048
        %v1607 = vsel %vm1606, %v1598, -inf
        %1608 = vmax.xlane.f32.xlu0 %v1607
        %v1609 = vpop.xlane.xlu0 %1608
        %v1610 = vsel %vm1606, %v1599, -inf
        %1611 = vmax.xlane.f32.xlu0 %v1610
        %v1612 = vpop.xlane.xlu0 %1611
        %v1613 = vsel %vm1606, %v1600, -inf
        %1614 = vmax.xlane.f32.xlu0 %v1613
        %v1615 = vpop.xlane.xlu0 %1614
        %v1616 = vsel %vm1606, %v1601, -inf
        %1617 = vmax.xlane.f32.xlu0 %v1616
        %v1618 = vpop.xlane.xlu0 %1617
        %v1619 = vsel %vm1606, %v1602, -inf
        %1620 = vmax.xlane.f32.xlu0 %v1619
        %v1621 = vpop.xlane.xlu0 %1620
        %v1622 = vsel %vm1606, %v1603, -inf
        %1623 = vmax.xlane.f32.xlu0 %v1622
        %v1624 = vpop.xlane.xlu0 %1623
        %v1625 = vsel %vm1606, %v1604, -inf
        %1626 = vmax.xlane.f32.xlu0 %v1625
        %v1627 = vpop.xlane.xlu0 %1626
        %v1628 = vsel %vm1606, %v1605, -inf
        %1629 = vmax.xlane.f32.xlu0 %v1628
        %v1630 = vpop.xlane.xlu0 %1629
        %v1631 = vsub.f32 %v1598, %v1609
        %v1632 = vsub.f32 %v1599, %v1612
        %v1633 = vsub.f32 %v1600, %v1615
        %v1634 = vsub.f32 %v1601, %v1618
        %v1635 = vsub.f32 %v1602, %v1621
        %v1636 = vsub.f32 %v1603, %v1624
        %v1637 = vsub.f32 %v1604, %v1627
        %v1638 = vsub.f32 %v1605, %v1630
        %v1639 = vmul.f32 %v1631, 1.442695
        %v1640 = vpow.pop %v1639
        %v1641 = vmul.f32 %v1632, 1.442695
        %v1642 = vpow.pop %v1641
        %v1643 = vmul.f32 %v1633, 1.442695
        %v1644 = vpow.pop %v1643
        %v1645 = vmul.f32 %v1634, 1.442695
        %v1646 = vpow.pop %v1645
        %v1647 = vmul.f32 %v1635, 1.442695
        %v1648 = vpow.pop %v1647
        %v1649 = vmul.f32 %v1636, 1.442695
        %v1650 = vpow.pop %v1649
        %v1651 = vmul.f32 %v1637, 1.442695
        %v1652 = vpow.pop %v1651
        %v1653 = vmul.f32 %v1638, 1.442695
        %v1654 = vpow.pop %v1653
        %v1655 = vsel %vm1606, %v1640, 0.0
        %1656 = vadd.xlane.f32.xlu0 %v1655
        %v1657 = vpop.xlane.xlu0 %1656
        %v1658 = vsel %vm1606, %v1642, 0.0
        %1659 = vadd.xlane.f32.xlu0 %v1658
        %v1660 = vpop.xlane.xlu0 %1659
        %v1661 = vsel %vm1606, %v1644, 0.0
        %1662 = vadd.xlane.f32.xlu0 %v1661
        %v1663 = vpop.xlane.xlu0 %1662
        %v1664 = vsel %vm1606, %v1646, 0.0
        %1665 = vadd.xlane.f32.xlu0 %v1664
        %v1666 = vpop.xlane.xlu0 %1665
        %v1667 = vsel %vm1606, %v1648, 0.0
        %1668 = vadd.xlane.f32.xlu0 %v1667
        %v1669 = vpop.xlane.xlu0 %1668
        %v1670 = vsel %vm1606, %v1650, 0.0
        %1671 = vadd.xlane.f32.xlu0 %v1670
        %v1672 = vpop.xlane.xlu0 %1671
        %v1673 = vsel %vm1606, %v1652, 0.0
        %1674 = vadd.xlane.f32.xlu0 %v1673
        %v1675 = vpop.xlane.xlu0 %1674
        %v1676 = vsel %vm1606, %v1654, 0.0
        %1677 = vadd.xlane.f32.xlu0 %v1676
        %v1678 = vpop.xlane.xlu0 %1677
        %v1679 = vrcp.pop %v1657
        %v1680 = vrcp.pop %v1660
        %v1681 = vrcp.pop %v1663
        %v1682 = vrcp.pop %v1666
        %v1683 = vrcp.pop %v1669
        %v1684 = vrcp.pop %v1672
        %v1685 = vrcp.pop %v1675
        %v1686 = vrcp.pop %v1678
        %v1687 = vmul.f32 %v1640, %v1679
        %v1688 = vmul.f32 %v1642, %v1680
        %v1689 = vmul.f32 %v1644, %v1681
        %v1690 = vmul.f32 %v1646, %v1682
        %v1691 = vmul.f32 %v1648, %v1683
        %v1692 = vmul.f32 %v1650, %v1684
        %v1693 = vmul.f32 %v1652, %v1685
        %v1694 = vmul.f32 %v1654, %v1686
        %v1695 = vpack.c.bf16 %v1687, %v1687
        %v1696 = vpack.c.bf16 %v1688, %v1688
        %v1697 = vpack.c.bf16 %v1689, %v1689
        %v1698 = vpack.c.bf16 %v1690, %v1690
        %v1699 = vpack.c.bf16 %v1691, %v1691
        %v1700 = vpack.c.bf16 %v1692, %v1692
        %v1701 = vpack.c.bf16 %v1693, %v1693
        %v1702 = vpack.c.bf16 %v1694, %v1694
        %v1703 = vpack.c.bf16 %v1387, %v1387
        %v1704 = vpack.c.bf16 %v1441, %v1441
        %v1705 = vpack.c.bf16 %v1389, %v1389
        %v1706 = vpack.c.bf16 %v1443, %v1443
        %v1707 = vpack.c.bf16 %v1391, %v1391
        %v1708 = vpack.c.bf16 %v1445, %v1445
        %v1709 = vpack.c.bf16 %v1393, %v1393
        %v1710 = vpack.c.bf16 %v1447, %v1447
        %v1713 = vunpack.c.l.b16 %v1695
        %v1714 = vunpack.c.l.b16 %v1696
        %v1715 = vpack.c.b16 %v1714, %v1713
        %v1718 = vunpack.c.l.b16 %v1703
        %v1719 = vunpack.c.l.b16 %v1704
        %v1720 = vpack.c.b16 %v1719, %v1718
        %v1723 = vsel %vm1606, %v1715, 0
        %1725 = vmatpush.bf16.msra.mxu0 0
        %1726 = vmatpush.bf16.msra.mxu0 0
        %1727 = vmatpush.bf16.msra.mxu0 0
        %1728 = vmatpush.bf16.msra.mxu0 0
        %1729 = vmatpush.bf16.msra.mxu0 0
        %1730 = vmatpush.bf16.msra.mxu0 0
        %1731 = vmatpush.bf16.msra.mxu0 0
        %1732 = vmatpush.bf16.msra.mxu0 %v1720
        %1733 = vmatmul.bf16.gmra.mxu0 %v1723
        %v1734 = vpop.f32.mrf.mxu0
        %v1735 = vadd.f32 0.0, %v1734
        %v1736 = vpop.f32.mrf.mxu0
        %v1737 = vadd.f32 0.0, %v1736
        %1738 = vdwg.mxu0
        %v1741 = vunpack.c.l.b16 %v1697
        %v1742 = vunpack.c.l.b16 %v1698
        %v1743 = vpack.c.b16 %v1742, %v1741
        %v1746 = vunpack.c.l.b16 %v1705
        %v1747 = vunpack.c.l.b16 %v1706
        %v1748 = vpack.c.b16 %v1747, %v1746
        %v1751 = vsel %vm1606, %v1743, 0
        %1753 = vmatpush.bf16.msra.mxu0 0
        %1754 = vmatpush.bf16.msra.mxu0 0
        %1755 = vmatpush.bf16.msra.mxu0 0
        %1756 = vmatpush.bf16.msra.mxu0 0
        %1757 = vmatpush.bf16.msra.mxu0 0
        %1758 = vmatpush.bf16.msra.mxu0 0
        %1759 = vmatpush.bf16.msra.mxu0 0
        %1760 = vmatpush.bf16.msra.mxu0 %v1748
        %1761 = vmatmul.bf16.gmra.mxu0 %v1751
        %v1762 = vpop.f32.mrf.mxu0
        %v1763 = vadd.f32 0.0, %v1762
        %v1764 = vpop.f32.mrf.mxu0
        %v1765 = vadd.f32 0.0, %v1764
        %1766 = vdwg.mxu0
        %v1769 = vunpack.c.l.b16 %v1699
        %v1770 = vunpack.c.l.b16 %v1700
        %v1771 = vpack.c.b16 %v1770, %v1769
        %v1774 = vunpack.c.l.b16 %v1707
        %v1775 = vunpack.c.l.b16 %v1708
        %v1776 = vpack.c.b16 %v1775, %v1774
        %v1779 = vsel %vm1606, %v1771, 0
        %1781 = vmatpush.bf16.msra.mxu0 0
        %1782 = vmatpush.bf16.msra.mxu0 0
        %1783 = vmatpush.bf16.msra.mxu0 0
        %1784 = vmatpush.bf16.msra.mxu0 0
        %1785 = vmatpush.bf16.msra.mxu0 0
        %1786 = vmatpush.bf16.msra.mxu0 0
        %1787 = vmatpush.bf16.msra.mxu0 0
        %1788 = vmatpush.bf16.msra.mxu0 %v1776
        %1789 = vmatmul.bf16.gmra.mxu0 %v1779
        %v1790 = vpop.f32.mrf.mxu0
        %v1791 = vadd.f32 0.0, %v1790
        %v1792 = vpop.f32.mrf.mxu0
        %v1793 = vadd.f32 0.0, %v1792
        %1794 = vdwg.mxu0
        %v1797 = vunpack.c.l.b16 %v1701
        %v1798 = vunpack.c.l.b16 %v1702
        %v1799 = vpack.c.b16 %v1798, %v1797
        %v1802 = vunpack.c.l.b16 %v1709
        %v1803 = vunpack.c.l.b16 %v1710
        %v1804 = vpack.c.b16 %v1803, %v1802
        %v1807 = vsel %vm1606, %v1799, 0
        %1809 = vmatpush.bf16.msra.mxu0 0
        %1810 = vmatpush.bf16.msra.mxu0 0
        %1811 = vmatpush.bf16.msra.mxu0 0
        %1812 = vmatpush.bf16.msra.mxu0 0
        %1813 = vmatpush.bf16.msra.mxu0 0
        %1814 = vmatpush.bf16.msra.mxu0 0
        %1815 = vmatpush.bf16.msra.mxu0 0
        %1816 = vmatpush.bf16.msra.mxu0 %v1804
        %1817 = vmatmul.bf16.gmra.mxu0 %v1807
        %v1818 = vpop.f32.mrf.mxu0
        %v1819 = vadd.f32 0.0, %v1818
        %v1820 = vpop.f32.mrf.mxu0
        %v1821 = vadd.f32 0.0, %v1820
        %1822 = vdwg.mxu0
        %v1823 = vrot.slane %v1791, 4
        %v1824 = vsel %vm748, %v1823, %v1735
        %v1825 = vrot.slane %v1735, 4
        %v1826 = vsel %vm748, %v1791, %v1825
        %v1828 = vunpack.c.l.s4 1983009808
        %v1829 = vunpack.c.0.s8 %v1828
        %v1830 = vperm.slane %v1824, %v1829
        %v1832 = vunpack.c.l.s4 1983009808
        %v1833 = vunpack.c.0.s8 %v1832
        %v1834 = vperm.slane %v1826, %v1833
        %v1835 = vrot.slane %v1819, 4
        %v1836 = vsel %vm748, %v1835, %v1763
        %v1837 = vrot.slane %v1763, 4
        %v1838 = vsel %vm748, %v1819, %v1837
        %v1840 = vunpack.c.l.s4 1983009808
        %v1841 = vunpack.c.0.s8 %v1840
        %v1842 = vperm.slane %v1836, %v1841
        %v1844 = vunpack.c.l.s4 1983009808
        %v1845 = vunpack.c.0.s8 %v1844
        %v1846 = vperm.slane %v1838, %v1845
        %v1847 = vrot.slane %v1842, 4
        %v1848 = vsel %vm748, %v1847, %v1830
        %v1849 = vrot.slane %v1830, 4
        %v1850 = vsel %vm748, %v1842, %v1849
        %v1852 = vunpack.c.l.s4 1934713408
        %v1853 = vunpack.c.0.s8 %v1852
        %v1854 = vperm.slane %v1848, %v1853
        %v1856 = vunpack.c.l.s4 1934713408
        %v1857 = vunpack.c.0.s8 %v1856
        %v1858 = vperm.slane %v1850, %v1857
        %v1859 = vrot.slane %v1846, 4
        %v1860 = vsel %vm748, %v1859, %v1834
        %v1861 = vrot.slane %v1834, 4
        %v1862 = vsel %vm748, %v1846, %v1861
        %v1864 = vunpack.c.l.s4 1934713408
        %v1865 = vunpack.c.0.s8 %v1864
        %v1866 = vperm.slane %v1860, %v1865
        %v1868 = vunpack.c.l.s4 1934713408
        %v1869 = vunpack.c.0.s8 %v1868
        %v1870 = vperm.slane %v1862, %v1869
        %v1871 = vrot.slane %v1854, 4
        %v1872 = vsel %vm748, 0.0, %v1871
        %v1873 = vrot.slane %v1858, 4
        %v1874 = vsel %vm748, 0.0, %v1873
        %v1875 = vrot.slane %v1866, 4
        %v1876 = vsel %vm748, 0.0, %v1875
        %v1877 = vrot.slane %v1870, 4
        %v1878 = vsel %vm748, 0.0, %v1877
        %v1879 = vrot.slane %v1793, 4
        %v1880 = vsel %vm748, %v1879, %v1737
        %v1881 = vrot.slane %v1737, 4
        %v1882 = vsel %vm748, %v1793, %v1881
        %v1884 = vunpack.c.l.s4 1983009808
        %v1885 = vunpack.c.0.s8 %v1884
        %v1886 = vperm.slane %v1880, %v1885
        %v1888 = vunpack.c.l.s4 1983009808
        %v1889 = vunpack.c.0.s8 %v1888
        %v1890 = vperm.slane %v1882, %v1889
        %v1891 = vrot.slane %v1821, 4
        %v1892 = vsel %vm748, %v1891, %v1765
        %v1893 = vrot.slane %v1765, 4
        %v1894 = vsel %vm748, %v1821, %v1893
        %v1896 = vunpack.c.l.s4 1983009808
        %v1897 = vunpack.c.0.s8 %v1896
        %v1898 = vperm.slane %v1892, %v1897
        %v1900 = vunpack.c.l.s4 1983009808
        %v1901 = vunpack.c.0.s8 %v1900
        %v1902 = vperm.slane %v1894, %v1901
        %v1903 = vrot.slane %v1898, 4
        %v1904 = vsel %vm748, %v1903, %v1886
        %v1905 = vrot.slane %v1886, 4
        %v1906 = vsel %vm748, %v1898, %v1905
        %v1908 = vunpack.c.l.s4 1934713408
        %v1909 = vunpack.c.0.s8 %v1908
        %v1910 = vperm.slane %v1904, %v1909
        %v1912 = vunpack.c.l.s4 1934713408
        %v1913 = vunpack.c.0.s8 %v1912
        %v1914 = vperm.slane %v1906, %v1913
        %v1915 = vrot.slane %v1902, 4
        %v1916 = vsel %vm748, %v1915, %v1890
        %v1917 = vrot.slane %v1890, 4
        %v1918 = vsel %vm748, %v1902, %v1917
        %v1920 = vunpack.c.l.s4 1934713408
        %v1921 = vunpack.c.0.s8 %v1920
        %v1922 = vperm.slane %v1916, %v1921
        %v1924 = vunpack.c.l.s4 1934713408
        %v1925 = vunpack.c.0.s8 %v1924
        %v1926 = vperm.slane %v1918, %v1925
        %v1927 = vrot.slane %v1910, 4
        %v1928 = vsel %vm748, 0.0, %v1927
        %v1929 = vrot.slane %v1914, 4
        %v1930 = vsel %vm748, 0.0, %v1929
        %v1931 = vrot.slane %v1922, 4
        %v1932 = vsel %vm748, 0.0, %v1931
        %v1933 = vrot.slane %v1926, 4
        %v1934 = vsel %vm748, 0.0, %v1933
        %v1935 = vsel %vm748, %v1873, %v1854
        %v1937 = vunpack.c.l.s4 1983009808
        %v1938 = vunpack.c.0.s8 %v1937
        %v1939 = vperm.slane %v1935, %v1938
        %v1940 = vrot.slane %v1874, 4
        %v1941 = vsel %vm748, %v1940, %v1872
        %v1943 = vunpack.c.l.s4 1983009808
        %v1944 = vunpack.c.0.s8 %v1943
        %v1945 = vperm.slane %v1941, %v1944
        %v1946 = vsel %vm748, %v1877, %v1866
        %v1948 = vunpack.c.l.s4 1983009808
        %v1949 = vunpack.c.0.s8 %v1948
        %v1950 = vperm.slane %v1946, %v1949
        %v1951 = vrot.slane %v1878, 4
        %v1952 = vsel %vm748, %v1951, %v1876
        %v1954 = vunpack.c.l.s4 1983009808
        %v1955 = vunpack.c.0.s8 %v1954
        %v1956 = vperm.slane %v1952, %v1955
        %v1957 = vrot.slane %v1945, 4
        %v1958 = vsel %vm748, %v1957, %v1939
        %v1959 = vrot.slane %v1939, 4
        %v1960 = vsel %vm748, %v1945, %v1959
        %v1962 = vunpack.c.l.s4 1934713408
        %v1963 = vunpack.c.0.s8 %v1962
        %v1964 = vperm.slane %v1958, %v1963
        %v1966 = vunpack.c.l.s4 1934713408
        %v1967 = vunpack.c.0.s8 %v1966
        %v1968 = vperm.slane %v1960, %v1967
        %v1969 = vrot.slane %v1956, 4
        %v1970 = vsel %vm748, %v1969, %v1950
        %v1971 = vrot.slane %v1950, 4
        %v1972 = vsel %vm748, %v1956, %v1971
        %v1974 = vunpack.c.l.s4 1934713408
        %v1975 = vunpack.c.0.s8 %v1974
        %v1976 = vperm.slane %v1970, %v1975
        %v1978 = vunpack.c.l.s4 1934713408
        %v1979 = vunpack.c.0.s8 %v1978
        %v1980 = vperm.slane %v1972, %v1979
        %v1981 = vrot.slane %v1976, 4
        %v1982 = vsel %vm748, %v1981, %v1964
        %v1983 = vrot.slane %v1964, 4
        %v1984 = vsel %vm748, %v1976, %v1983
        %v1985 = vrot.slane %v1980, 4
        %v1986 = vsel %vm748, %v1985, %v1968
        %v1987 = vrot.slane %v1968, 4
        %v1988 = vsel %vm748, %v1980, %v1987
        %v1989 = vsel %vm748, %v1929, %v1910
        %v1991 = vunpack.c.l.s4 1983009808
        %v1992 = vunpack.c.0.s8 %v1991
        %v1993 = vperm.slane %v1989, %v1992
        %v1994 = vrot.slane %v1930, 4
        %v1995 = vsel %vm748, %v1994, %v1928
        %v1997 = vunpack.c.l.s4 1983009808
        %v1998 = vunpack.c.0.s8 %v1997
        %v1999 = vperm.slane %v1995, %v1998
        %v2000 = vsel %vm748, %v1933, %v1922
        %v2002 = vunpack.c.l.s4 1983009808
        %v2003 = vunpack.c.0.s8 %v2002
        %v2004 = vperm.slane %v2000, %v2003
        %v2005 = vrot.slane %v1934, 4
        %v2006 = vsel %vm748, %v2005, %v1932
        %v2008 = vunpack.c.l.s4 1983009808
        %v2009 = vunpack.c.0.s8 %v2008
        %v2010 = vperm.slane %v2006, %v2009
        %v2011 = vrot.slane %v1999, 4
        %v2012 = vsel %vm748, %v2011, %v1993
        %v2013 = vrot.slane %v1993, 4
        %v2014 = vsel %vm748, %v1999, %v2013
        %v2016 = vunpack.c.l.s4 1934713408
        %v2017 = vunpack.c.0.s8 %v2016
        %v2018 = vperm.slane %v2012, %v2017
        %v2020 = vunpack.c.l.s4 1934713408
        %v2021 = vunpack.c.0.s8 %v2020
        %v2022 = vperm.slane %v2014, %v2021
        %v2023 = vrot.slane %v2010, 4
        %v2024 = vsel %vm748, %v2023, %v2004
        %v2025 = vrot.slane %v2004, 4
        %v2026 = vsel %vm748, %v2010, %v2025
        %v2028 = vunpack.c.l.s4 1934713408
        %v2029 = vunpack.c.0.s8 %v2028
        %v2030 = vperm.slane %v2024, %v2029
        %v2032 = vunpack.c.l.s4 1934713408
        %v2033 = vunpack.c.0.s8 %v2032
        %v2034 = vperm.slane %v2026, %v2033
        %v2035 = vrot.slane %v2030, 4
        %v2036 = vsel %vm748, %v2035, %v2018
        %v2037 = vrot.slane %v2018, 4
        %v2038 = vsel %vm748, %v2030, %v2037
        %v2039 = vrot.slane %v2034, 4
        %v2040 = vsel %vm748, %v2039, %v2022
        %v2041 = vrot.slane %v2022, 4
        %v2042 = vsel %vm748, %v2034, %v2041
        %2045 = vrot.lane.b32.xlu0 %v1984, 32
        %v2046 = vpop.permute.xlu0 %2045
        %2047 = vrot.lane.b32.xlu0 %v2038, 32
        %v2048 = vpop.permute.xlu0 %2047
        %2053 = vrot.lane.b32.xlu0 %v1986, 64
        %v2054 = vpop.permute.xlu0 %2053
        %2055 = vrot.lane.b32.xlu0 %v2040, 64
        %v2056 = vpop.permute.xlu0 %2055
        %2061 = vrot.lane.b32.xlu0 %v1988, 96
        %v2062 = vpop.permute.xlu0 %2061
        %2063 = vrot.lane.b32.xlu0 %v2042, 96
        %v2064 = vpop.permute.xlu0 %2063
        %v2067 = vsel %vm1479, %v1982, %v2046
        %v2068 = vsel %vm1479, %v2036, %v2048
        %vm2069 = vcmask 523264
        %v2070 = vsel %vm2069, %v2067, %v2054
        %v2071 = vsel %vm2069, %v2068, %v2056
        %vm2072 = vcmask 785408
        %v2073 = vsel %vm2072, %v2070, %v2062
        %v2074 = vsel %vm2072, %v2071, %v2064
        %v2075 = vpack.c.bf16 %v2074, %v2073
        %v2076 = vld [vmem:[#allocation7] sm:$0xf]
        %v2077 = vld [vmem:[#allocation7 + $0x4] sm:$0xf]
        %v2078 = vld [vmem:[#allocation7 + $0x8] sm:$0xf]
        %v2079 = vld [vmem:[#allocation7 + $0xc] sm:$0xf]
        %v2080 = vld [vmem:[#allocation7 + $0x10] sm:$0xf]
        %v2081 = vld [vmem:[#allocation7 + $0x14] sm:$0xf]
        %v2082 = vld [vmem:[#allocation7 + $0x18] sm:$0xf]
        %v2083 = vld [vmem:[#allocation7 + $0x1c] sm:$0xf]
        %v2084 = vld [vmem:[#allocation7 + $0x20] sm:$0xf]
        %v2085 = vld [vmem:[#allocation7 + $0x24] sm:$0xf]
        %v2086 = vld [vmem:[#allocation7 + $0x28] sm:$0xf]
        %v2087 = vld [vmem:[#allocation7 + $0x2c] sm:$0xf]
        %v2088 = vld [vmem:[#allocation7 + $0x30] sm:$0xf]
        %v2089 = vld [vmem:[#allocation7 + $0x34] sm:$0xf]
        %v2090 = vld [vmem:[#allocation7 + $0x38] sm:$0xf]
        %v2091 = vld [vmem:[#allocation7 + $0x3c] sm:$0xf]
        %v2092 = vld [vmem:[%s5] sm:$0x1]
        %v2094 = vperm.slane %v2092, 0
        %v2112 = vunpack.c.l.b16 %v2076
        %v2113 = vunpack.c.l.b16 %v2077
        %v2114 = vunpack.c.l.b16 %v2078
        %v2115 = vunpack.c.l.b16 %v2079
        %v2116 = vunpack.c.l.b16 %v2080
        %v2117 = vunpack.c.l.b16 %v2081
        %v2118 = vunpack.c.l.b16 %v2082
        %v2119 = vunpack.c.l.b16 %v2083
        %v2120 = vunpack.c.l.b16 %v2084
        %v2121 = vunpack.c.l.b16 %v2085
        %v2122 = vunpack.c.l.b16 %v2086
        %v2123 = vunpack.c.l.b16 %v2087
        %v2124 = vunpack.c.l.b16 %v2088
        %v2125 = vunpack.c.l.b16 %v2089
        %v2126 = vunpack.c.l.b16 %v2090
        %v2127 = vunpack.c.l.b16 %v2091
        %v2128 = vpack.c.b16 %v2113, %v2112
        %v2129 = vpack.c.b16 %v2115, %v2114
        %v2130 = vpack.c.b16 %v2117, %v2116
        %v2131 = vpack.c.b16 %v2119, %v2118
        %v2132 = vpack.c.b16 %v2121, %v2120
        %v2133 = vpack.c.b16 %v2123, %v2122
        %v2134 = vpack.c.b16 %v2125, %v2124
        %v2135 = vpack.c.b16 %v2127, %v2126
        %2144 = vmatpush.bf16.msra.mxu0 %v2135
        %2145 = vmatpush.bf16.msra.mxu0 %v2134
        %2146 = vmatpush.bf16.msra.mxu0 %v2133
        %2147 = vmatpush.bf16.msra.mxu0 %v2132
        %2148 = vmatpush.bf16.msra.mxu0 %v2131
        %2149 = vmatpush.bf16.msra.mxu0 %v2130
        %2150 = vmatpush.bf16.msra.mxu0 %v2129
        %2151 = vmatpush.bf16.msra.mxu0 %v2128
        %2152 = vmatmul.bf16.gmra.mxu0 %v2075
        %v2153 = vpop.f32.mrf.mxu0
        %v2154 = vadd.f32 %v2094, %v2153
        %v2155 = vpop.f32.mrf.mxu0
        %v2156 = vadd.f32 %v2094, %v2155
        %2157 = vdwg.mxu0
        %v2158 = vadd.f32 %v411, %v2154
        %v2159 = vadd.f32 %v412, %v2156
        %2160 = vst [vmem:[%s409] sm:$0xff] %v2158
        %2161 = vst [vmem:[%s409 + $0x8] sm:$0xff] %v2159
        %p2162 = scmp.lt.s32.totalorder %s26, 1
        %s2163 = scalar_select %p2162, %s26, 1
        %s2164 = smul.addr %s2163, 2
        %s2165 = smul.addr %s2164, 8
        %s2166 = scalar_lea.vmem %s8, %s2165
        // Predicated region
        $region73: #{decoder_layer.3} parent=51 // pred_check
          %p2167 = pneg %p222
        $region74: #{decoder_layer.3} parent=51 // pred_check_branch
          %2169 = sbr.rel (%p2167) target = $region76
        $region75: #{decoder_layer.3} parent=51 // pred_region
          _
        $region76: #{decoder_layer.3} parent=51 // pred_fallthru
          _
      $region52: #{decoder_layer.3} parent=5 // pred_fallthru
        _
      %p2170 = scmp.le.s32.totalorder 2, %s21
      // Predicated region
      $region77: #{decoder_layer.3} parent=5 // pred_check
        %p2171 = pneg %p2170
      $region78: #{decoder_layer.3} parent=5 // pred_check_branch
        %2173 = sbr.rel (%p2171) target = $region80
      $region79: #{decoder_layer.3} parent=5 // pred_region
        %s2174 = ssub.s32 %s21, 2
        // Predicated region
        $region81: #{decoder_layer.3} parent=79 // pred_check
          %p2175 = pneg %p228
        $region82: #{decoder_layer.3} parent=79 // pred_check_branch
          %2177 = sbr.rel (%p2175) target = $region84
        $region83: #{decoder_layer.3} parent=79 // pred_region
          %p2178 = scmp.lt.s32.totalorder %s27, 1
          %s2179 = scalar_select %p2178, %s27, 1
          %s2180 = smul.addr %s2179, 2
          %s2181 = smul.addr %s2180, 8
          %s2182 = scalar_lea.vmem %s8, %s2181
        $region84: #{decoder_layer.3} parent=79 // pred_fallthru
          _
      $region80: #{decoder_layer.3} parent=5 // pred_fallthru
        _
    $region6: #{decoder_layer.3} parent=1 // loop_footer
      %s25 = sadd.s32 1, %s21
    $region7: #{decoder_layer.3} parent=1 // loop_footer_branch
      %20 = sbr.rel target = $region3
    $region8: #{decoder_layer.3} parent=1 // loop_exit
      _
    %2183 = vsyncpa [#allocation3], 1
    %s2184 = scalar_lea.sflag [#allocation3], 1
    %2185 = vsyncpa %s2184, 1
    %2186 = vsyncpa [#allocation5], 1
    %s2187 = scalar_lea.sflag [#allocation5], 1
    %2188 = vsyncpa %s2187, 1
    %2189 = vsyncpa [#allocation8], 1

</llo_original>
